<compile_context>
chip_gen: v7x
topology: tpu7x:2x2x1
jax: 0.10.0
libtpu: 0.0.40
codegen_flags: <defaults>
</compile_context>

<pallas_src>
import functools
from typing import NamedTuple, Sequence

import jax
import jax.numpy as jnp
from jax.experimental import pallas as pl
from jax.experimental.pallas import tpu as pltpu

_LANES = 128
_SUBLANES = 8


def _round_up(x, m):
    return ((x + m - 1) // m) * m


class SirenParams(NamedTuple):
    weight: jax.Array      # (in_padded, out_padded); w0 folded in if apply_sin
    bias: jax.Array        # (1, out_padded) float32; w0 folded in if apply_sin
    out_features: int      # valid (unpadded) output width
    apply_sin: bool        # True for hidden layers, False when is_last


def init_siren_weights(key, in_f, out_f, *, w0=30.0, is_first=False):
    """Raw SIREN init matching the PyTorch module.  The weight is returned as
    (in_f, out_f), i.e. already W^T relative to nn.Linear's (out_f, in_f)."""
    kw, kb = jax.random.split(key)
    b = (1.0 / in_f) if is_first else (6.0 / in_f) ** 0.5 / w0
    w_t = jax.random.uniform(kw, (in_f, out_f), jnp.float32, minval=-b, maxval=b)
    bb = 1.0 / (in_f ** 0.5)              # nn.Linear default bias init
    bias = jax.random.uniform(kb, (out_f,), jnp.float32, minval=-bb, maxval=bb)
    return w_t, bias


def prepare_siren_params(w_t, bias, *, w0=30.0, is_last=False, in_width=None,
                         lane_pad=True, param_dtype=jnp.float32):
    """One-time parameter transform (at init, never per call):
      * zero-pad the output feature axis to a 128-lane multiple (lane-dense
        stores; chained layers keep padded activations end-to-end),
      * zero-pad the input axis to `in_width` (= previous layer's padded
        output width) when chaining,
      * fold w0 into W and b for hidden layers,
      * cast the weight to its MXU dtype once (no per-grid-step cast of an
        invariant block)."""
    in_f, out_f = w_t.shape
    in_p = in_f if in_width is None else int(in_width)
    assert in_p >= in_f, (in_p, in_f)
    out_p = _round_up(out_f, _LANES) if lane_pad else out_f
    scale = 1.0 if is_last else float(w0)
    w = (w_t * scale).astype(jnp.float32)
    b = (bias * scale).astype(jnp.float32).reshape(1, out_f)
    if (in_p, out_p) != (in_f, out_f):
        w = jnp.pad(w, ((0, in_p - in_f), (0, out_p - out_f)))
        b = jnp.pad(b, ((0, 0), (0, out_p - out_f)))
    return SirenParams(weight=w.astype(param_dtype), bias=b,
                       out_features=int(out_f), apply_sin=not is_last)


def _siren_mlp_kernel(x_ref, *refs, apply_sin):
    """refs = (w_0, b_0, w_1, b_1, ..., out_ref).  All weights/biases are
    grid-invariant VMEM-resident blocks; the activation tile stays on-chip
    across layers and only the final result goes back to HBM."""
    o_ref = refs[-1]
    h = x_ref[...]
    for l, sin_l in enumerate(apply_sin):
        w = refs[2 * l][...]
        b = refs[2 * l + 1][...]                          # (1, out_p) float32
        if h.dtype != w.dtype:
            h = h.astype(w.dtype)                         # bf16 path: cast streamed tile only
        y = jnp.dot(h, w, preferred_element_type=jnp.float32) + b   # MXU, f32 acc
        if sin_l:
            y = jnp.sin(y)                                # w0 already folded into W, b
        h = y
    o_ref[...] = h.astype(o_ref.dtype)


def _vmem_capacity_bytes():
    try:
        cap = int(pltpu.get_tpu_info().vmem_capacity_bytes)
        return min(max(cap, 32 * 1024 * 1024), 128 * 1024 * 1024)
    except Exception:
        return 64 * 1024 * 1024           # conservative fallback (v7x per-TC VMEM)


def siren_forward(x, layers: Sequence[SirenParams], *, tm=None, out_dtype=None,
                  core_parallel=False, trim=True):
    """Run one or more prepared SIREN layers as a single fused Pallas kernel.

    x:      (N, in_width) activations; in_width == layers[0].weight.shape[0].
    layers: SirenParams list; layer l+1's padded input width must equal layer
            l's padded output width (build with prepare_siren_params(in_width=...)).
    """
    layers = list(layers)
    N, in0 = x.shape
    assert in0 == layers[0].weight.shape[0], (in0, layers[0].weight.shape)
    for a, nxt in zip(layers[:-1], layers[1:]):
        assert a.weight.shape[1] == nxt.weight.shape[0], "layer widths must chain"
    out_p = layers[-1].weight.shape[1]
    out_f = layers[-1].out_features
    out_dtype = x.dtype if out_dtype is None else out_dtype

    # --- generation-aware tile / VMEM budgeting ------------------------------
    vmem_cap = _vmem_capacity_bytes()
    resident = sum(int(p.weight.size) * p.weight.dtype.itemsize +
                   int(p.bias.size) * p.bias.dtype.itemsize for p in layers)
    max_width = max([in0] + [p.weight.shape[1] for p in layers])
    per_row = (2 * in0 * x.dtype.itemsize                      # double-buffered x tile
               + 2 * out_p * jnp.dtype(out_dtype).itemsize     # double-buffered out tile
               + 8 * max_width)                                # in-flight f32 activations
    if tm is None:
        tm_cap = 1024 if vmem_cap >= 96 * 1024 * 1024 else 512
        budget = max(4 * 1024 * 1024, int(0.55 * vmem_cap) - resident)
        tm = tm_cap
        while tm > _SUBLANES and tm * per_row > budget:
            tm //= 2
    tm = max(_SUBLANES, min(int(tm), max(_SUBLANES, (N // _SUBLANES) * _SUBLANES)))
    tm = _round_up(tm, _SUBLANES)
    grid = (pl.cdiv(N, tm),)       # ragged tail handled by Pallas; no x padding

    vmem_limit = int(min(0.9 * vmem_cap,
                         max(32 * 1024 * 1024,
                             resident + tm * per_row + 8 * 1024 * 1024)))

    in_specs = [pl.BlockSpec((tm, in0), lambda i: (i, 0))]
    args = [x]
    for p in layers:
        ip, op = p.weight.shape
        # Grid-invariant index_map -> DMA'd once and kept resident; Buffered(1)
        # halves their VMEM footprint.  (If a DMA trace ever shows re-fetch per
        # step, revert these two specs to default buffering.)
        in_specs.append(pl.BlockSpec((ip, op), lambda i: (0, 0),
                                     pipeline_mode=pl.Buffered(1)))
        in_specs.append(pl.BlockSpec((1, op), lambda i: (0, 0),
                                     pipeline_mode=pl.Buffered(1)))
        args += [p.weight, p.bias]

    kernel = functools.partial(
        _siren_mlp_kernel,
        apply_sin=tuple(bool(p.apply_sin) for p in layers))

    # Row tiles are independent.  Default "parallel" is portable; on v7x pass
    # core_parallel=True to force the split across both TensorCores.
    row_sem = pltpu.CORE_PARALLEL if core_parallel else "parallel"

    out = pl.pallas_call(
        kernel,
        out_shape=jax.ShapeDtypeStruct((N, out_p), out_dtype),
        grid_spec=pltpu.PrefetchScalarGridSpec(
            num_scalar_prefetch=0,
            grid=grid,
            in_specs=in_specs,
            out_specs=pl.BlockSpec((tm, out_p), lambda i: (i, 0)),
        ),
        compiler_params=pltpu.CompilerParams(
            dimension_semantics=(row_sem,),
            vmem_limit_bytes=vmem_limit,
        ),
    )(*args)

    if trim and out_f != out_p:
        # Only needed when a standalone (final) layer must expose the exact
        # module shape; fused/chained layers keep the padded width end-to-end.
        out = out[:, :out_f]
    return out


def siren_layer(x, params: SirenParams, **kwargs):
    """Single SirenLayer forward (matches the PyTorch module's semantics)."""
    return siren_forward(x, [params], **kwargs)


if __name__ == "__main__":
    key = jax.random.PRNGKey(0)
    k_x, k0, k1 = jax.random.split(key, 3)
    w0 = 30.0
    HI = jax.lax.Precision.HIGHEST

    # ---- single SirenLayer (the PyTorch module) ------------------------------
    # N not a multiple of tm (exercises the ragged last row block, no padding),
    # out_f not a multiple of 128 (exercises one-time lane padding + trim).
    N, in_f, out_f = 1000, 32, 48
    x = jax.random.uniform(k_x, (N, in_f), jnp.float32, minval=-1.0, maxval=1.0)
    w_raw, b_raw = init_siren_weights(k0, in_f, out_f, w0=w0, is_first=True)
    y_ref = jnp.dot(x, w_raw, precision=HI) + b_raw

    # hidden layer (sin activation)
    params_h = prepare_siren_params(w_raw, b_raw, w0=w0, is_last=False)
    out_h = siren_layer(x, params_h, tm=256)
    jax.block_until_ready(out_h)
    assert out_h.shape == (N, out_f)
    assert jnp.allclose(out_h, jnp.sin(w0 * y_ref), atol=2e-3, rtol=2e-3), \
        "hidden-layer mismatch"

    # is_last layer (no activation)
    params_l = prepare_siren_params(w_raw, b_raw, w0=w0, is_last=True)
    out_l = siren_layer(x, params_l, tm=256)
    jax.block_until_ready(out_l)
    assert jnp.allclose(out_l, y_ref, atol=2e-3, rtol=2e-3), "is_last mismatch"

    # ---- fused 3-layer SIREN MLP (weights VMEM-resident, activations on-chip)
    dims = [2, 64, 64, 3]            # coords -> hidden -> hidden -> rgb
    xs = jax.random.uniform(k_x, (N, dims[0]), jnp.float32, minval=-1.0, maxval=1.0)
    lkeys = jax.random.split(k1, 3)
    raw = [init_siren_weights(lkeys[l], dims[l], dims[l + 1], w0=w0,
                              is_first=(l == 0)) for l in range(3)]
    layers, prev_padded = [], dims[0]
    for l, (wl, bl) in enumerate(raw):
        p = prepare_siren_params(wl, bl, w0=w0, is_last=(l == 2),
                                 in_width=prev_padded)
        layers.append(p)
        prev_padded = p.weight.shape[1]

    out_mlp = siren_forward(xs, layers)
    jax.block_until_ready(out_mlp)
    assert out_mlp.shape == (N, dims[-1])

    h = xs
    for l, (wl, bl) in enumerate(raw):
        y = jnp.dot(h, wl, precision=HI) + bl
        h = y if l == 2 else jnp.sin(w0 * y)
    assert jnp.allclose(out_mlp, h, atol=3e-3, rtol=3e-3), "fused MLP mismatch"

    print("KERNEL_OK")
</pallas_src>

<mosaic_0001>
module attributes {stable_mosaic.version = 11 : i64} {
  func.func @_siren_mlp_kernel(%arg0: i32, %arg1: memref<256x32xf32, #tpu.memory_space<vmem>>, %arg2: memref<32x128xf32, #tpu.memory_space<vmem>>, %arg3: memref<1x128xf32, #tpu.memory_space<vmem>>, %arg4: memref<256x128xf32, #tpu.memory_space<vmem>>) attributes {dimension_semantics = [#tpu.dimension_semantics<parallel>], iteration_bounds = array<i64: 4>, scalar_prefetch = 0 : i64, scratch_operands = 0 : i64, tpu.core_type = #tpu.core_type<tc>, window_params = [{transform_indices = @transform_0, window_bounds = array<i64: 256, 32>}, {pipeline_mode = #tpu.pipeline_mode<synchronous>, transform_indices = @transform_1, window_bounds = array<i64: 32, 128>}, {pipeline_mode = #tpu.pipeline_mode<synchronous>, transform_indices = @transform_2, window_bounds = array<i64: 1, 128>}, {transform_indices = @transform_3, window_bounds = array<i64: 256, 128>}]} {
    %c0 = arith.constant 0 : index
    %c0_0 = arith.constant 0 : index
    %0 = vector.load %arg1[%c0, %c0_0] : memref<256x32xf32, #tpu.memory_space<vmem>>, vector<256x32xf32>
    %c0_1 = arith.constant 0 : index
    %c0_2 = arith.constant 0 : index
    %1 = vector.load %arg2[%c0_1, %c0_2] : memref<32x128xf32, #tpu.memory_space<vmem>>, vector<32x128xf32>
    %c0_3 = arith.constant 0 : index
    %c0_4 = arith.constant 0 : index
    %2 = vector.load %arg3[%c0_3, %c0_4] : memref<1x128xf32, #tpu.memory_space<vmem>>, vector<1x128xf32>
    %cst = arith.constant dense<0.000000e+00> : vector<256x128xf32>
    %3 = tpu.matmul %0, %1, %cst {dimension_numbers = #tpu.dot_dimension_numbers<[1], [0], [0], [1], [0, 0, 1, 1], [], []>} : vector<256x32xf32>, vector<32x128xf32>, vector<256x128xf32> -> vector<256x128xf32>
    %4 = vector.broadcast %2 : vector<1x128xf32> to vector<256x128xf32>
    %5 = arith.addf %3, %4 : vector<256x128xf32>
    %6 = math.sin %5 : vector<256x128xf32>
    %c0_5 = arith.constant 0 : index
    %c0_6 = arith.constant 0 : index
    %7 = vector.load %arg4[%c0_5, %c0_6] : memref<256x128xf32, #tpu.memory_space<vmem>>, vector<256x128xf32>
    tpu.vector_store %arg4[%c0_5, %c0_6], %6 {strides = array<i32>} : memref<256x128xf32, #tpu.memory_space<vmem>>, vector<256x128xf32>,
    return
  }
  func.func @transform_0(%arg0: i32) -> (i32, i32) {
    %c0_i32 = arith.constant 0 : i32
    %c0_i32_0 = arith.constant 0 : i32
    return %arg0, %c0_i32 : i32, i32
  }
  func.func @transform_1(%arg0: i32) -> (i32, i32) {
    %c0_i32 = arith.constant 0 : i32
    %c0_i32_0 = arith.constant 0 : i32
    %c0_i32_1 = arith.constant 0 : i32
    return %c0_i32, %c0_i32_0 : i32, i32
  }
  func.func @transform_2(%arg0: i32) -> (i32, i32) {
    %c0_i32 = arith.constant 0 : i32
    %c0_i32_0 = arith.constant 0 : i32
    %c0_i32_1 = arith.constant 0 : i32
    return %c0_i32, %c0_i32_0 : i32, i32
  }
  func.func @transform_3(%arg0: i32) -> (i32, i32) {
    %c0_i32 = arith.constant 0 : i32
    %c0_i32_0 = arith.constant 0 : i32
    return %arg0, %c0_i32 : i32, i32
  }
}

</mosaic_0001>

<llo_original>
// kernel: tpu_custom_call.1
$region0: #{tpu_custom_call.1}
  #allocation0 [shape = 'u32[]', space=smem, size = 0x4, offset = 0x4, fixed_abs, tag = 'smem constant byte address 0x4 - core index']
  #allocation1 [shape = 'u32[144,128]{1,0:T(1,128)}', space=vmem, size = 0x12000, scoped, tag = 'internal scratch']
  %s0 = inlined_call_operand.vmem [shape: f32[1000,32], index: 0, kind: input, shape index: {}]
  %s1 = inlined_call_operand.vmem [shape: f32[32,128], index: 1, kind: input, shape index: {}]
  %s2 = inlined_call_operand.vmem [shape: f32[1,128], index: 2, kind: input, shape index: {}]
  %s3 = inlined_call_operand.hbm [shape: f32[1000,128], index: 3, kind: output, shape index: {}]
  %s4 = sld [smem:[#allocation0]]
  $region45: #{tpu_custom_call.1} parent=0
    _
  %s6 = ssub.s32 1, %s4
  %s7 = scalar_select 0, %s6, %s4
  $region1: #{tpu_custom_call.1} parent=0
    #allocation2 [shape = 'u8[262144]{0}', space=vmem, size = 0x40000, scoped, tag = 'output window, operand 0']
    #allocation3 [shape = 's32[2]{0}', space=sflag, size = 0x8, scoped, tag = 'scoped memory for tpu_custom_call.1']
    %8 = vsyncpa [#allocation3], 0
    %s9 = scalar_lea.sflag [#allocation3], 1
    %10 = vsyncpa %s9, 0
    loop: start=0, step=1, limit=6
    $region2: #{tpu_custom_call.1} parent=1 // loop_pre_header
      _
    $region3: #{tpu_custom_call.1} parent=1 // loop_header
      %s12 = sphi 0, %s16
      %p13 = scmp.ge.s32.totalorder %s12, 6
      %s22 = sphi 0, %s24
      %s25 = sphi 0, %s22
      %s26 = sphi 0, %s25
      %s42 = sphi 0, %s26
      %s46 = sphi 0, %s46
      %s48 = sphi 0, %s46
      %s49 = sphi 0, %s48
      %s63 = sphi 0, %s49
      %s67 = sphi 0, %s67
      %s69 = sphi 0, %s67
      %s70 = sphi 0, %s69
      %s84 = sphi 0, %s70
      %s90 = sphi 0, %s92
      %s93 = sphi 0, %s90
      %s94 = sphi 0, %s93
      %s110 = sphi 0, %s94
    $region4: #{tpu_custom_call.1} parent=1 // loop_header_branch
      %15 = sbr.rel (%p13) target = $region8
    $region5: #{tpu_custom_call.1} parent=1 // loop_body
      %s17 = ssub.s32 %s12, 1
      %s18 = ssub.s32 %s12, 2
      %s19 = sadd.s32 %s12, 1
      %s20 = ssub.s32 %s12, %s19
      %p21 = scmp.eq.s32.totalorder %s20, 0
      %s23 = sadd.s32 %s22, 1
      %s24 = scalar_select %p21, %s22, %s23
      %p27 = pneg %p21
      %p28 = scmp.eq.s32.totalorder %s12, 3
      %p29 = por %p27, %p28
      %p30 = scmp.ne.s32.totalorder %s22, %s25
      %p31 = scmp.eq.s32.totalorder %s12, 0
      %p32 = por %p30, %p31
      %p33 = scmp.ne.s32.totalorder %s22, %s25
      %p34 = scmp.eq.s32.totalorder %s17, 3
      %p35 = por %p33, %p34
      %p36 = scmp.ne.s32.totalorder %s25, %s26
      %p37 = scmp.eq.s32.totalorder %s17, 0
      %p38 = por %p36, %p37
      %p39 = scmp.ne.s32.totalorder %s25, %s26
      %p40 = scmp.eq.s32.totalorder %s18, 3
      %p41 = por %p39, %p40
      %p43 = scmp.ne.s32.totalorder %s26, %s42
      %p44 = scmp.eq.s32.totalorder %s18, 0
      %p45 = por %p43, %p44
      %s47 = sadd.s32 %s46, 1
      %p50 = scmp.eq.s32.totalorder %s12, 3
      %p51 = scmp.ne.s32.totalorder %s46, %s48
      %p52 = scmp.eq.s32.totalorder %s12, 0
      %p53 = por %p51, %p52
      %p54 = scmp.ne.s32.totalorder %s46, %s48
      %p55 = scmp.eq.s32.totalorder %s17, 3
      %p56 = por %p54, %p55
      %p57 = scmp.ne.s32.totalorder %s48, %s49
      %p58 = scmp.eq.s32.totalorder %s17, 0
      %p59 = por %p57, %p58
      %p60 = scmp.ne.s32.totalorder %s48, %s49
      %p61 = scmp.eq.s32.totalorder %s18, 3
      %p62 = por %p60, %p61
      %p64 = scmp.ne.s32.totalorder %s49, %s63
      %p65 = scmp.eq.s32.totalorder %s18, 0
      %p66 = por %p64, %p65
      %s68 = sadd.s32 %s67, 1
      %p71 = scmp.eq.s32.totalorder %s12, 3
      %p72 = scmp.ne.s32.totalorder %s67, %s69
      %p73 = scmp.eq.s32.totalorder %s12, 0
      %p74 = por %p72, %p73
      %p75 = scmp.ne.s32.totalorder %s67, %s69
      %p76 = scmp.eq.s32.totalorder %s17, 3
      %p77 = por %p75, %p76
      %p78 = scmp.ne.s32.totalorder %s69, %s70
      %p79 = scmp.eq.s32.totalorder %s17, 0
      %p80 = por %p78, %p79
      %p81 = scmp.ne.s32.totalorder %s69, %s70
      %p82 = scmp.eq.s32.totalorder %s18, 3
      %p83 = por %p81, %p82
      %p85 = scmp.ne.s32.totalorder %s70, %s84
      %p86 = scmp.eq.s32.totalorder %s18, 0
      %p87 = por %p85, %p86
      %s88 = ssub.s32 %s12, %s19
      %p89 = scmp.eq.s32.totalorder %s88, 0
      %s91 = sadd.s32 %s90, 1
      %s92 = scalar_select %p89, %s90, %s91
      %p95 = pneg %p89
      %p96 = scmp.eq.s32.totalorder %s12, 3
      %p97 = por %p95, %p96
      %p98 = scmp.ne.s32.totalorder %s90, %s93
      %p99 = scmp.eq.s32.totalorder %s12, 0
      %p100 = por %p98, %p99
      %p101 = scmp.ne.s32.totalorder %s90, %s93
      %p102 = scmp.eq.s32.totalorder %s17, 3
      %p103 = por %p101, %p102
      %p104 = scmp.ne.s32.totalorder %s93, %s94
      %p105 = scmp.eq.s32.totalorder %s17, 0
      %p106 = por %p104, %p105
      %p107 = scmp.ne.s32.totalorder %s93, %s94
      %p108 = scmp.eq.s32.totalorder %s18, 3
      %p109 = por %p107, %p108
      %p111 = scmp.ne.s32.totalorder %s94, %s110
      %p112 = scmp.eq.s32.totalorder %s18, 0
      %p113 = por %p111, %p112
      %p114 = scmp.le.s32.totalorder 1, %s12
      %p115 = scmp.lt.s32.totalorder %s12, 5
      %p116 = pnand %p114, %p115
      %p117 = pneg %p116
      // Predicated region
      $region9: #{tpu_custom_call.1} parent=5 // pred_check
        _
      $region10: #{tpu_custom_call.1} parent=5 // pred_check_branch
        %119 = sbr.rel (%p116) target = $region12
      $region11: #{tpu_custom_call.1} parent=5 // pred_region
        %s120 = ssub.s32 %s12, 1
        // Predicated region
        $region13: #{tpu_custom_call.1} parent=11 // pred_check
          %p121 = pneg %p59
        $region14: #{tpu_custom_call.1} parent=11 // pred_check_branch
          %123 = sbr.rel (%p121) target = $region16
        $region15: #{tpu_custom_call.1} parent=11 // pred_region
          _
        $region16: #{tpu_custom_call.1} parent=11 // pred_fallthru
          _
        // Predicated region
        $region17: #{tpu_custom_call.1} parent=11 // pred_check
          %p124 = pneg %p80
        $region18: #{tpu_custom_call.1} parent=11 // pred_check_branch
          %126 = sbr.rel (%p124) target = $region20
        $region19: #{tpu_custom_call.1} parent=11 // pred_region
          _
        $region20: #{tpu_custom_call.1} parent=11 // pred_fallthru
          _
      $region12: #{tpu_custom_call.1} parent=5 // pred_fallthru
        _
      %p127 = scmp.lt.s32.totalorder %s12, 4
      // Predicated region
      $region21: #{tpu_custom_call.1} parent=5 // pred_check
        %p128 = pneg %p127
      $region22: #{tpu_custom_call.1} parent=5 // pred_check_branch
        %130 = sbr.rel (%p128) target = $region24
      $region23: #{tpu_custom_call.1} parent=5 // pred_region
        // Predicated region
        $region25: #{tpu_custom_call.1} parent=23 // pred_check
          %p131 = pneg %p32
        $region26: #{tpu_custom_call.1} parent=23 // pred_check_branch
          %133 = sbr.rel (%p131) target = $region28
        $region27: #{tpu_custom_call.1} parent=23 // pred_region
          %s134 = smul.u32 32, %s12
          %s135 = ssub.s32 125, %s134
          %p136 = scmp.lt.s32.totalorder %s135, 32
          %s137 = scalar_select %p136, %s135, 32
          %s138 = smul.u32 128, %s137
          %p139 = scmp.lt.s32.totalorder %s134, 124
          %s140 = scalar_select %p139, %s134, 124
          %s141 = smul.addr %s140, 8
          %s142 = scalar_lea.vmem %s0, %s141
          %s143 = smul.u32 32, %s12
          %s144 = ssub.s32 125, %s143
          %p145 = scmp.lt.s32.totalorder %s144, 32
          %s146 = scalar_select %p145, %s144, 32
          %s147 = smul.u32 128, %s146
        $region28: #{tpu_custom_call.1} parent=23 // pred_fallthru
          _
      $region24: #{tpu_custom_call.1} parent=5 // pred_fallthru
        _
      %p148 = scmp.le.s32.totalorder 1, %s12
      %p149 = scmp.lt.s32.totalorder %s12, 5
      %p150 = pnand %p148, %p149
      %p151 = pneg %p150
      // Predicated region
      $region29: #{tpu_custom_call.1} parent=5 // pred_check
        _
      $region30: #{tpu_custom_call.1} parent=5 // pred_check_branch
        %153 = sbr.rel (%p150) target = $region32
      $region31: #{tpu_custom_call.1} parent=5 // pred_region
        %s154 = ssub.s32 %s12, 1
        %s155 = smul.u32 32, %s17
        %s156 = ssub.s32 125, %s155
        %p157 = scmp.lt.s32.totalorder %s156, 32
        %s158 = scalar_select %p157, %s156, 32
        %s159 = smul.u32 128, %s158
        %p160 = scmp.lt.s32.totalorder %s155, 124
        %s161 = scalar_select %p160, %s155, 124
        %s162 = smul.addr %s161, 8
        %s163 = scalar_lea.vmem %s0, %s162
        %p164 = pneg %p38
        %p165 = pneg %p35
        %p166 = pneg %p59
        %p167 = pneg %p56
        %p168 = pneg %p80
        %p169 = pneg %p77
        %p170 = pneg %p106
        %p171 = pneg %p103
        %s172 = sand.u32 %s93, 1
        %s173 = scalar_lea.sflag [#allocation3], %s172
        %s174 = sand.u32 %s93, 1
        %s175 = smul.addr %s174, 256
        %s176 = scalar_lea.vmem [#allocation2], %s175
        %s177 = smul.u32 32, %s17
        %s178 = ssub.s32 125, %s177
        %p179 = scmp.lt.s32.totalorder %s178, 32
        %s180 = scalar_select %p179, %s178, 32
        %s181 = smul.u32 128, %s180
        %p182 = scmp.lt.s32.totalorder %s177, 124
        %s183 = scalar_select %p182, %s177, 124
        %s184 = smul.addr %s183, 8
        %s185 = scalar_lea.vmem %s0, %s184
        %s186 = smul.u32 32, %s17
        %s187 = ssub.s32 125, %s186
        %p188 = scmp.lt.s32.totalorder %s187, 32
        %s189 = scalar_select %p188, %s187, 32
        %s190 = smul.u32 128, %s189
        %s191 = smul.u32 32, %s17
        %s192 = ssub.s32 125, %s191
        %p193 = scmp.lt.s32.totalorder %s192, 32
        %s194 = scalar_select %p193, %s192, 32
        %s195 = smul.u32 128, %s194
        %v196 = vld [vmem:[%s185] sm:$0xff]
        %v197 = vld [vmem:[%s185 + $0x8] sm:$0xff]
        %v198 = vld [vmem:[%s185 + $0x10] sm:$0xff]
        %v199 = vld [vmem:[%s185 + $0x18] sm:$0xff]
        %v200 = vld [vmem:[%s185 + $0x20] sm:$0xff]
        %v201 = vld [vmem:[%s185 + $0x28] sm:$0xff]
        %v202 = vld [vmem:[%s185 + $0x30] sm:$0xff]
        %v203 = vld [vmem:[%s185 + $0x38] sm:$0xff]
        %v204 = vld [vmem:[%s185 + $0x40] sm:$0xff]
        %v205 = vld [vmem:[%s185 + $0x48] sm:$0xff]
        %v206 = vld [vmem:[%s185 + $0x50] sm:$0xff]
        %v207 = vld [vmem:[%s185 + $0x58] sm:$0xff]
        %v208 = vld [vmem:[%s185 + $0x60] sm:$0xff]
        %v209 = vld [vmem:[%s185 + $0x68] sm:$0xff]
        %v210 = vld [vmem:[%s185 + $0x70] sm:$0xff]
        %v211 = vld [vmem:[%s185 + $0x78] sm:$0xff]
        %v212 = vld [vmem:[%s185 + $0x80] sm:$0xff]
        %v213 = vld [vmem:[%s185 + $0x88] sm:$0xff]
        %v214 = vld [vmem:[%s185 + $0x90] sm:$0xff]
        %v215 = vld [vmem:[%s185 + $0x98] sm:$0xff]
        %v216 = vld [vmem:[%s185 + $0xa0] sm:$0xff]
        %v217 = vld [vmem:[%s185 + $0xa8] sm:$0xff]
        %v218 = vld [vmem:[%s185 + $0xb0] sm:$0xff]
        %v219 = vld [vmem:[%s185 + $0xb8] sm:$0xff]
        %v220 = vld [vmem:[%s185 + $0xc0] sm:$0xff]
        %v221 = vld [vmem:[%s185 + $0xc8] sm:$0xff]
        %v222 = vld [vmem:[%s185 + $0xd0] sm:$0xff]
        %v223 = vld [vmem:[%s185 + $0xd8] sm:$0xff]
        %v224 = vld [vmem:[%s185 + $0xe0] sm:$0xff]
        %v225 = vld [vmem:[%s185 + $0xe8] sm:$0xff]
        %v226 = vld [vmem:[%s185 + $0xf0] sm:$0xff]
        %v227 = vld [vmem:[%s185 + $0xf8] sm:$0xff]
        %v228 = vld [vmem:[%s1] sm:$0xff]
        %v229 = vld [vmem:[%s1 + $0x8] sm:$0xff]
        %v230 = vld [vmem:[%s1 + $0x10] sm:$0xff]
        %v231 = vld [vmem:[%s1 + $0x18] sm:$0xff]
        %v232 = vld [vmem:[%s2] sm:$0x1]
        %v234 = vlaneseq
        %v235 = vshrl.u32 %v234, 7
        %v236 = vsub.s32 0, %v235
        %v237 = vrot.slane %v232, %v236
        %vm239 = vcmask 261120
        %v241 = vsel %vm239, %v196, 0
        %v244 = vsel %vm239, %v197, 0
        %v247 = vsel %vm239, %v198, 0
        %v250 = vsel %vm239, %v199, 0
        %v253 = vsel %vm239, %v200, 0
        %v256 = vsel %vm239, %v201, 0
        %v259 = vsel %vm239, %v202, 0
        %v262 = vsel %vm239, %v203, 0
        %v265 = vsel %vm239, %v204, 0
        %v268 = vsel %vm239, %v205, 0
        %v271 = vsel %vm239, %v206, 0
        %v274 = vsel %vm239, %v207, 0
        %v277 = vsel %vm239, %v208, 0
        %v280 = vsel %vm239, %v209, 0
        %v283 = vsel %vm239, %v210, 0
        %v286 = vsel %vm239, %v211, 0
        %v289 = vsel %vm239, %v212, 0
        %v292 = vsel %vm239, %v213, 0
        %v295 = vsel %vm239, %v214, 0
        %v298 = vsel %vm239, %v215, 0
        %v301 = vsel %vm239, %v216, 0
        %v304 = vsel %vm239, %v217, 0
        %v307 = vsel %vm239, %v218, 0
        %v310 = vsel %vm239, %v219, 0
        %v313 = vsel %vm239, %v220, 0
        %v316 = vsel %vm239, %v221, 0
        %v319 = vsel %vm239, %v222, 0
        %v322 = vsel %vm239, %v223, 0
        %v325 = vsel %vm239, %v224, 0
        %v328 = vsel %vm239, %v225, 0
        %v331 = vsel %vm239, %v226, 0
        %v334 = vsel %vm239, %v227, 0
        %336 = vmatprep.subr.mxu0 0.0
        %337 = vmatpush1.msra.mxu0 %v228
        %338 = vmatprep.subr.mxu0 0.0
        %339 = vmatpush1.msra.mxu0 %v229
        %340 = vmatprep.subr.mxu0 0.0
        %341 = vmatpush1.msra.mxu0 %v230
        %342 = vmatprep.subr.mxu0 0.0
        %343 = vmatpush1.msra.mxu0 %v231
        %344 = vmatprep.subr.mxu0 0.0
        %345 = vmatpush1.msra.mxu0 0.0
        %346 = vmatprep.subr.mxu0 0.0
        %347 = vmatpush1.msra.mxu0 0.0
        %348 = vmatprep.subr.mxu0 0.0
        %349 = vmatpush1.msra.mxu0 0.0
        %350 = vmatprep.subr.mxu0 0.0
        %351 = vmatpush1.msra.mxu0 0.0
        %352 = vmatprep.subr.mxu0 0.0
        %353 = vmatpush1.msra.mxu0 0.0
        %354 = vmatprep.subr.mxu0 0.0
        %355 = vmatpush1.msra.mxu0 0.0
        %356 = vmatprep.subr.mxu0 0.0
        %357 = vmatpush1.msra.mxu0 0.0
        %358 = vmatprep.subr.mxu0 0.0
        %359 = vmatpush1.msra.mxu0 0.0
        %360 = vmatprep.subr.mxu0 0.0
        %361 = vmatpush1.msra.mxu0 0.0
        %362 = vmatprep.subr.mxu0 0.0
        %363 = vmatpush1.msra.mxu0 0.0
        %364 = vmatprep.subr.mxu0 0.0
        %365 = vmatpush1.msra.mxu0 0.0
        %366 = vmatprep.subr.mxu0 0.0
        %367 = vmatpush1.msra.mxu0 0.0
        %368 = vmatprep.subr.mxu0 0.0
        %369 = vmatpush1.msra.mxu0 0.0
        %370 = vmatprep.subr.mxu0 0.0
        %371 = vmatpush1.msra.mxu0 0.0
        %372 = vmatprep.subr.mxu0 0.0
        %373 = vmatpush1.msra.mxu0 0.0
        %374 = vmatprep.subr.mxu0 0.0
        %375 = vmatpush1.msra.mxu0 0.0
        %376 = vmatprep.subr.mxu0 0.0
        %377 = vmatpush1.msra.mxu0 0.0
        %378 = vmatprep.subr.mxu0 0.0
        %379 = vmatpush1.msra.mxu0 0.0
        %380 = vmatprep.subr.mxu0 0.0
        %381 = vmatpush1.msra.mxu0 0.0
        %382 = vmatprep.subr.mxu0 0.0
        %383 = vmatpush1.msra.mxu0 0.0
        %384 = vmatprep.subr.mxu0 0.0
        %385 = vmatpush1.msra.mxu0 0.0
        %386 = vmatprep.subr.mxu0 0.0
        %387 = vmatpush1.msra.mxu0 0.0
        %388 = vmatprep.subr.mxu0 0.0
        %389 = vmatpush1.msra.mxu0 0.0
        %390 = vmatprep.subr.mxu0 0.0
        %391 = vmatpush1.msra.mxu0 0.0
        %392 = vmatprep.subr.mxu0 0.0
        %393 = vmatpush1.msra.mxu0 0.0
        %394 = vmatprep.subr.mxu0 0.0
        %395 = vmatpush1.msra.mxu0 0.0
        %396 = vmatprep.subr.mxu0 0.0
        %397 = vmatpush1.msra.mxu0 0.0
        %398 = vmatprep.subr.mxu0 0.0
        %399 = vmatpush1.msra.mxu0 0.0
        %400 = vmatprep.mubr.f32.mxu0 0.0
        %401 = vmatmul.mubr.f32.gmra.mrb[0].mxu0 %v241
        %v402 = vpop.f32.mrb[0].mxu0
        %v403 = vadd.f32 %v237, %v402
        %v404 = vpop.f32.mrb[0].mxu0
        %405 = vmatprep.mubr.f32.mxu0 0.0
        %406 = vmatmul.mubr.f32.gmra.mrb[0].mxu0 %v244
        %v407 = vpop.f32.mrb[0].mxu0
        %v408 = vadd.f32 %v237, %v407
        %v409 = vpop.f32.mrb[0].mxu0
        %410 = vmatprep.mubr.f32.mxu0 0.0
        %411 = vmatmul.mubr.f32.gmra.mrb[0].mxu0 %v247
        %v412 = vpop.f32.mrb[0].mxu0
        %v413 = vadd.f32 %v237, %v412
        %v414 = vpop.f32.mrb[0].mxu0
        %415 = vmatprep.mubr.f32.mxu0 0.0
        %416 = vmatmul.mubr.f32.gmra.mrb[0].mxu0 %v250
        %v417 = vpop.f32.mrb[0].mxu0
        %v418 = vadd.f32 %v237, %v417
        %v419 = vpop.f32.mrb[0].mxu0
        %420 = vmatprep.mubr.f32.mxu0 0.0
        %421 = vmatmul.mubr.f32.gmra.mrb[0].mxu0 %v253
        %v422 = vpop.f32.mrb[0].mxu0
        %v423 = vadd.f32 %v237, %v422
        %v424 = vpop.f32.mrb[0].mxu0
        %425 = vmatprep.mubr.f32.mxu0 0.0
        %426 = vmatmul.mubr.f32.gmra.mrb[0].mxu0 %v256
        %v427 = vpop.f32.mrb[0].mxu0
        %v428 = vadd.f32 %v237, %v427
        %v429 = vpop.f32.mrb[0].mxu0
        %430 = vmatprep.mubr.f32.mxu0 0.0
        %431 = vmatmul.mubr.f32.gmra.mrb[0].mxu0 %v259
        %v432 = vpop.f32.mrb[0].mxu0
        %v433 = vadd.f32 %v237, %v432
        %v434 = vpop.f32.mrb[0].mxu0
        %435 = vmatprep.mubr.f32.mxu0 0.0
        %436 = vmatmul.mubr.f32.gmra.mrb[0].mxu0 %v262
        %v437 = vpop.f32.mrb[0].mxu0
        %v438 = vadd.f32 %v237, %v437
        %v439 = vpop.f32.mrb[0].mxu0
        %440 = vmatprep.mubr.f32.mxu0 0.0
        %441 = vmatmul.mubr.f32.gmra.mrb[0].mxu0 %v265
        %v442 = vpop.f32.mrb[0].mxu0
        %v443 = vadd.f32 %v237, %v442
        %v444 = vpop.f32.mrb[0].mxu0
        %445 = vmatprep.mubr.f32.mxu0 0.0
        %446 = vmatmul.mubr.f32.gmra.mrb[0].mxu0 %v268
        %v447 = vpop.f32.mrb[0].mxu0
        %v448 = vadd.f32 %v237, %v447
        %v449 = vpop.f32.mrb[0].mxu0
        %450 = vmatprep.mubr.f32.mxu0 0.0
        %451 = vmatmul.mubr.f32.gmra.mrb[0].mxu0 %v271
        %v452 = vpop.f32.mrb[0].mxu0
        %v453 = vadd.f32 %v237, %v452
        %v454 = vpop.f32.mrb[0].mxu0
        %455 = vmatprep.mubr.f32.mxu0 0.0
        %456 = vmatmul.mubr.f32.gmra.mrb[0].mxu0 %v274
        %v457 = vpop.f32.mrb[0].mxu0
        %v458 = vadd.f32 %v237, %v457
        %v459 = vpop.f32.mrb[0].mxu0
        %460 = vmatprep.mubr.f32.mxu0 0.0
        %461 = vmatmul.mubr.f32.gmra.mrb[0].mxu0 %v277
        %v462 = vpop.f32.mrb[0].mxu0
        %v463 = vadd.f32 %v237, %v462
        %v464 = vpop.f32.mrb[0].mxu0
        %465 = vmatprep.mubr.f32.mxu0 0.0
        %466 = vmatmul.mubr.f32.gmra.mrb[0].mxu0 %v280
        %v467 = vpop.f32.mrb[0].mxu0
        %v468 = vadd.f32 %v237, %v467
        %v469 = vpop.f32.mrb[0].mxu0
        %470 = vmatprep.mubr.f32.mxu0 0.0
        %471 = vmatmul.mubr.f32.gmra.mrb[0].mxu0 %v283
        %v472 = vpop.f32.mrb[0].mxu0
        %v473 = vadd.f32 %v237, %v472
        %v474 = vpop.f32.mrb[0].mxu0
        %475 = vmatprep.mubr.f32.mxu0 0.0
        %476 = vmatmul.mubr.f32.gmra.mrb[0].mxu0 %v286
        %v477 = vpop.f32.mrb[0].mxu0
        %v478 = vadd.f32 %v237, %v477
        %v479 = vpop.f32.mrb[0].mxu0
        %480 = vmatprep.mubr.f32.mxu0 0.0
        %481 = vmatmul.mubr.f32.gmra.mrb[0].mxu0 %v289
        %v482 = vpop.f32.mrb[0].mxu0
        %v483 = vadd.f32 %v237, %v482
        %v484 = vpop.f32.mrb[0].mxu0
        %485 = vmatprep.mubr.f32.mxu0 0.0
        %486 = vmatmul.mubr.f32.gmra.mrb[0].mxu0 %v292
        %v487 = vpop.f32.mrb[0].mxu0
        %v488 = vadd.f32 %v237, %v487
        %v489 = vpop.f32.mrb[0].mxu0
        %490 = vmatprep.mubr.f32.mxu0 0.0
        %491 = vmatmul.mubr.f32.gmra.mrb[0].mxu0 %v295
        %v492 = vpop.f32.mrb[0].mxu0
        %v493 = vadd.f32 %v237, %v492
        %v494 = vpop.f32.mrb[0].mxu0
        %495 = vmatprep.mubr.f32.mxu0 0.0
        %496 = vmatmul.mubr.f32.gmra.mrb[0].mxu0 %v298
        %v497 = vpop.f32.mrb[0].mxu0
        %v498 = vadd.f32 %v237, %v497
        %v499 = vpop.f32.mrb[0].mxu0
        %500 = vmatprep.mubr.f32.mxu0 0.0
        %501 = vmatmul.mubr.f32.gmra.mrb[0].mxu0 %v301
        %v502 = vpop.f32.mrb[0].mxu0
        %v503 = vadd.f32 %v237, %v502
        %v504 = vpop.f32.mrb[0].mxu0
        %505 = vmatprep.mubr.f32.mxu0 0.0
        %506 = vmatmul.mubr.f32.gmra.mrb[0].mxu0 %v304
        %v507 = vpop.f32.mrb[0].mxu0
        %v508 = vadd.f32 %v237, %v507
        %v509 = vpop.f32.mrb[0].mxu0
        %510 = vmatprep.mubr.f32.mxu0 0.0
        %511 = vmatmul.mubr.f32.gmra.mrb[0].mxu0 %v307
        %v512 = vpop.f32.mrb[0].mxu0
        %v513 = vadd.f32 %v237, %v512
        %v514 = vpop.f32.mrb[0].mxu0
        %515 = vmatprep.mubr.f32.mxu0 0.0
        %516 = vmatmul.mubr.f32.gmra.mrb[0].mxu0 %v310
        %v517 = vpop.f32.mrb[0].mxu0
        %v518 = vadd.f32 %v237, %v517
        %v519 = vpop.f32.mrb[0].mxu0
        %520 = vmatprep.mubr.f32.mxu0 0.0
        %521 = vmatmul.mubr.f32.gmra.mrb[0].mxu0 %v313
        %v522 = vpop.f32.mrb[0].mxu0
        %v523 = vadd.f32 %v237, %v522
        %v524 = vpop.f32.mrb[0].mxu0
        %525 = vmatprep.mubr.f32.mxu0 0.0
        %526 = vmatmul.mubr.f32.gmra.mrb[0].mxu0 %v316
        %v527 = vpop.f32.mrb[0].mxu0
        %v528 = vadd.f32 %v237, %v527
        %v529 = vpop.f32.mrb[0].mxu0
        %530 = vmatprep.mubr.f32.mxu0 0.0
        %531 = vmatmul.mubr.f32.gmra.mrb[0].mxu0 %v319
        %v532 = vpop.f32.mrb[0].mxu0
        %v533 = vadd.f32 %v237, %v532
        %v534 = vpop.f32.mrb[0].mxu0
        %535 = vmatprep.mubr.f32.mxu0 0.0
        %536 = vmatmul.mubr.f32.gmra.mrb[0].mxu0 %v322
        %v537 = vpop.f32.mrb[0].mxu0
        %v538 = vadd.f32 %v237, %v537
        %v539 = vpop.f32.mrb[0].mxu0
        %540 = vmatprep.mubr.f32.mxu0 0.0
        %541 = vmatmul.mubr.f32.gmra.mrb[0].mxu0 %v325
        %v542 = vpop.f32.mrb[0].mxu0
        %v543 = vadd.f32 %v237, %v542
        %v544 = vpop.f32.mrb[0].mxu0
        %545 = vmatprep.mubr.f32.mxu0 0.0
        %546 = vmatmul.mubr.f32.gmra.mrb[0].mxu0 %v328
        %v547 = vpop.f32.mrb[0].mxu0
        %v548 = vadd.f32 %v237, %v547
        %v549 = vpop.f32.mrb[0].mxu0
        %550 = vmatprep.mubr.f32.mxu0 0.0
        %551 = vmatmul.mubr.f32.gmra.mrb[0].mxu0 %v331
        %v552 = vpop.f32.mrb[0].mxu0
        %v553 = vadd.f32 %v237, %v552
        %v554 = vpop.f32.mrb[0].mxu0
        %555 = vmatprep.mubr.f32.mxu0 0.0
        %556 = vmatmul.mubr.f32.gmra.mrb[0].mxu0 %v334
        %v557 = vpop.f32.mrb[0].mxu0
        %v558 = vadd.f32 %v237, %v557
        %v559 = vpop.f32.mrb[0].mxu0
        %560 = vdwg.mxu0
        %v561 = vand.u32 2147483647, %v403
        %vm562 = vcmp.le.f32.partialorder %v561, 0.7853982
        %vm563 = vcmp.lt.s32.totalorder %v403, 0
        %v564 = vand.u32 %v403, 2139095040
        %v565 = vshrl.u32 %v564, 23
        %v566 = vsub.s32 %v565, 127
        %v567 = vand.u32 2147483647, %v403
        %v568 = vand.u32 %v567, 8388607
        %v569 = vor.u32 %v568, 8388608
        %v570 = vsub.s32 0, %v569
        %v571 = vadd.s32 %v566, 1
        %vm572 = vcmp.gt.s32.totalorder %v571, 0
        %v573 = vsel %vm572, %v571, 0
        %v574 = vshrl.u32 %v573, 5
        %v575 = vand.u32 %v573, 31
        %v576 = vsub.s32 32, %v575
        %v577 = vshrl.u32 683565275, %v576
        %v578 = vshll.u32 683565275, %v575
        %v579 = vshrl.u32 2475754826, %v576
        %v580 = vor.u32 %v578, %v579
        %v581 = vshll.u32 2475754826, %v575
        %v582 = vshrl.u32 2131351028, %v576
        %v583 = vor.u32 %v581, %v582
        %v584 = vshll.u32 2131351028, %v575
        %v585 = vshrl.u32 2102212464, %v576
        %v586 = vor.u32 %v584, %v585
        %v587 = vshll.u32 2102212464, %v575
        %v588 = vshrl.u32 920167782, %v576
        %v589 = vor.u32 %v587, %v588
        %v590 = vshll.u32 920167782, %v575
        %v591 = vshrl.u32 1326507024, %v576
        %v592 = vor.u32 %v590, %v591
        %vm593 = vcmp.lt.s32.totalorder %v574, 1
        %vm594 = vcmp.lt.s32.totalorder %v574, 2
        %vm595 = vcmp.lt.s32.totalorder %v574, 3
        %vm596 = vcmp.lt.s32.totalorder %v574, 4
        %v597 = vsel %vm593, %v577, %v580
        %v598 = vsel %vm596, %v586, 2102212464
        %v599 = vsel %vm595, %v583, %v598
        %v600 = vsel %vm594, %v597, %v599
        %v601 = vsel %vm593, %v580, %v583
        %v602 = vsel %vm596, %v589, 920167782
        %v603 = vsel %vm595, %v586, %v602
        %v604 = vsel %vm594, %v601, %v603
        %v605 = vsel %vm593, %v583, %v586
        %v606 = vsel %vm596, %v592, 1326507024
        %v607 = vsel %vm595, %v589, %v606
        %v608 = vsel %vm594, %v605, %v607
        %v609 = vshll.u32 %v569, 8
        %v610 = vmul.u32.u64.compose %v609, %v608
        %v611 = vextract.low.u32 %v610
        %v612 = vextract.high.u32 %v610
        %v613 = vmul.u32.u64.compose %v609, %v604
        %v614 = vextract.low.u32 %v613
        %v615 = vextract.high.u32 %v613
        %v616 = vmul.u32 %v609, %v600
        %v617 = vadd.s32 %v612, %v614
        %vm618 = vc.u32 %v612, %v614
        %v619 = vadd.s32 %v615, 1
        %v620 = vsel %vm618, %v619, %v615
        %v621 = vadd.s32 %v616, %v620
        %v622 = vadd.s32 %v621, 536870912
        %v623 = vshrl.u32 %v622, 30
        %v624 = vshll.u32 %v623, 30
        %v625 = vsub.s32 %v621, %v624
        %vm626 = vcmp.lt.s32.totalorder %v625, 0
        %v627 = vsub.s32 0, %v625
        %v628 = vsel %vm626, %v627, %v625
        %v629 = vclz %v628
        %v630 = vsub.s32 %v629, 2
        %vm631 = vcmp.gt.s32.totalorder 0, %v630
        %v632 = vsel %vm631, 0, %v630
        %v633 = vsub.s32 32, %v632
        %v634 = vshll.u32 %v625, %v632
        %v635 = vshrl.u32 %v617, %v633
        %v636 = vor.u32 %v634, %v635
        %v637 = vsub.s32 4294967266, %v632
        %v638 = vadd.s32 %v637, 127
        %v639 = vshll.u32 %v638, 23
        %v640 = vor.u32 4788187, %v639
        %v641 = vand.u32 2147483647, %v640
        %v643 = vcvt.s32.f32 %v636
        %v644 = vmul.f32 %v643, %v641
        %v645 = vxor.u32 %v644, 2147483648
        %v646 = vsel %vm563, %v645, %v644
        %v647 = vsub.s32 4, %v623
        %v648 = vsel %vm563, %v647, %v623
        %v649 = vsel %vm562, %v403, %v646
        %v650 = vsel %vm562, 0, %v648
        %v651 = vcosq.f32.pop %v649
        %v652 = vsinq.f32.pop %v649
        %vm653 = vweird.f32 %v403
        %v654 = vadd.s32 %v650, 3
        %v655 = vand.u32 %v654, 3
        %vm656 = vcmp.lt.s32.totalorder %v655, 2
        %vm657 = vcmp.eq.s32.totalorder %v655, 0
        %v658 = vxor.u32 %v652, 2147483648
        %v659 = vsel %vm657, %v651, %v658
        %vm660 = vcmp.eq.s32.totalorder %v655, 2
        %v661 = vxor.u32 %v651, 2147483648
        %v662 = vsel %vm660, %v661, %v652
        %v663 = vsel %vm656, %v659, %v662
        %v664 = vsel %vm653, nan, %v663
        %v665 = vand.u32 2147483647, %v408
        %vm666 = vcmp.le.f32.partialorder %v665, 0.7853982
        %vm667 = vcmp.lt.s32.totalorder %v408, 0
        %v668 = vand.u32 %v408, 2139095040
        %v669 = vshrl.u32 %v668, 23
        %v670 = vsub.s32 %v669, 127
        %v671 = vand.u32 2147483647, %v408
        %v672 = vand.u32 %v671, 8388607
        %v673 = vor.u32 %v672, 8388608
        %v674 = vsub.s32 0, %v673
        %v675 = vadd.s32 %v670, 1
        %vm676 = vcmp.gt.s32.totalorder %v675, 0
        %v677 = vsel %vm676, %v675, 0
        %v678 = vshrl.u32 %v677, 5
        %v679 = vand.u32 %v677, 31
        %v680 = vsub.s32 32, %v679
        %v681 = vshrl.u32 683565275, %v680
        %v682 = vshll.u32 683565275, %v679
        %v683 = vshrl.u32 2475754826, %v680
        %v684 = vor.u32 %v682, %v683
        %v685 = vshll.u32 2475754826, %v679
        %v686 = vshrl.u32 2131351028, %v680
        %v687 = vor.u32 %v685, %v686
        %v688 = vshll.u32 2131351028, %v679
        %v689 = vshrl.u32 2102212464, %v680
        %v690 = vor.u32 %v688, %v689
        %v691 = vshll.u32 2102212464, %v679
        %v692 = vshrl.u32 920167782, %v680
        %v693 = vor.u32 %v691, %v692
        %v694 = vshll.u32 920167782, %v679
        %v695 = vshrl.u32 1326507024, %v680
        %v696 = vor.u32 %v694, %v695
        %vm697 = vcmp.lt.s32.totalorder %v678, 1
        %vm698 = vcmp.lt.s32.totalorder %v678, 2
        %vm699 = vcmp.lt.s32.totalorder %v678, 3
        %vm700 = vcmp.lt.s32.totalorder %v678, 4
        %v701 = vsel %vm697, %v681, %v684
        %v702 = vsel %vm700, %v690, 2102212464
        %v703 = vsel %vm699, %v687, %v702
        %v704 = vsel %vm698, %v701, %v703
        %v705 = vsel %vm697, %v684, %v687
        %v706 = vsel %vm700, %v693, 920167782
        %v707 = vsel %vm699, %v690, %v706
        %v708 = vsel %vm698, %v705, %v707
        %v709 = vsel %vm697, %v687, %v690
        %v710 = vsel %vm700, %v696, 1326507024
        %v711 = vsel %vm699, %v693, %v710
        %v712 = vsel %vm698, %v709, %v711
        %v713 = vshll.u32 %v673, 8
        %v714 = vmul.u32.u64.compose %v713, %v712
        %v715 = vextract.low.u32 %v714
        %v716 = vextract.high.u32 %v714
        %v717 = vmul.u32.u64.compose %v713, %v708
        %v718 = vextract.low.u32 %v717
        %v719 = vextract.high.u32 %v717
        %v720 = vmul.u32 %v713, %v704
        %v721 = vadd.s32 %v716, %v718
        %vm722 = vc.u32 %v716, %v718
        %v723 = vadd.s32 %v719, 1
        %v724 = vsel %vm722, %v723, %v719
        %v725 = vadd.s32 %v720, %v724
        %v726 = vadd.s32 %v725, 536870912
        %v727 = vshrl.u32 %v726, 30
        %v728 = vshll.u32 %v727, 30
        %v729 = vsub.s32 %v725, %v728
        %vm730 = vcmp.lt.s32.totalorder %v729, 0
        %v731 = vsub.s32 0, %v729
        %v732 = vsel %vm730, %v731, %v729
        %v733 = vclz %v732
        %v734 = vsub.s32 %v733, 2
        %vm735 = vcmp.gt.s32.totalorder 0, %v734
        %v736 = vsel %vm735, 0, %v734
        %v737 = vsub.s32 32, %v736
        %v738 = vshll.u32 %v729, %v736
        %v739 = vshrl.u32 %v721, %v737
        %v740 = vor.u32 %v738, %v739
        %v741 = vsub.s32 4294967266, %v736
        %v742 = vadd.s32 %v741, 127
        %v743 = vshll.u32 %v742, 23
        %v744 = vor.u32 4788187, %v743
        %v745 = vand.u32 2147483647, %v744
        %v747 = vcvt.s32.f32 %v740
        %v748 = vmul.f32 %v747, %v745
        %v749 = vxor.u32 %v748, 2147483648
        %v750 = vsel %vm667, %v749, %v748
        %v751 = vsub.s32 4, %v727
        %v752 = vsel %vm667, %v751, %v727
        %v753 = vsel %vm666, %v408, %v750
        %v754 = vsel %vm666, 0, %v752
        %v755 = vcosq.f32.pop %v753
        %v756 = vsinq.f32.pop %v753
        %vm757 = vweird.f32 %v408
        %v758 = vadd.s32 %v754, 3
        %v759 = vand.u32 %v758, 3
        %vm760 = vcmp.lt.s32.totalorder %v759, 2
        %vm761 = vcmp.eq.s32.totalorder %v759, 0
        %v762 = vxor.u32 %v756, 2147483648
        %v763 = vsel %vm761, %v755, %v762
        %vm764 = vcmp.eq.s32.totalorder %v759, 2
        %v765 = vxor.u32 %v755, 2147483648
        %v766 = vsel %vm764, %v765, %v756
        %v767 = vsel %vm760, %v763, %v766
        %v768 = vsel %vm757, nan, %v767
        %v769 = vand.u32 2147483647, %v413
        %vm770 = vcmp.le.f32.partialorder %v769, 0.7853982
        %vm771 = vcmp.lt.s32.totalorder %v413, 0
        %v772 = vand.u32 %v413, 2139095040
        %v773 = vshrl.u32 %v772, 23
        %v774 = vsub.s32 %v773, 127
        %v775 = vand.u32 2147483647, %v413
        %v776 = vand.u32 %v775, 8388607
        %v777 = vor.u32 %v776, 8388608
        %v778 = vsub.s32 0, %v777
        %v779 = vadd.s32 %v774, 1
        %vm780 = vcmp.gt.s32.totalorder %v779, 0
        %v781 = vsel %vm780, %v779, 0
        %v782 = vshrl.u32 %v781, 5
        %v783 = vand.u32 %v781, 31
        %v784 = vsub.s32 32, %v783
        %v785 = vshrl.u32 683565275, %v784
        %v786 = vshll.u32 683565275, %v783
        %v787 = vshrl.u32 2475754826, %v784
        %v788 = vor.u32 %v786, %v787
        %v789 = vshll.u32 2475754826, %v783
        %v790 = vshrl.u32 2131351028, %v784
        %v791 = vor.u32 %v789, %v790
        %v792 = vshll.u32 2131351028, %v783
        %v793 = vshrl.u32 2102212464, %v784
        %v794 = vor.u32 %v792, %v793
        %v795 = vshll.u32 2102212464, %v783
        %v796 = vshrl.u32 920167782, %v784
        %v797 = vor.u32 %v795, %v796
        %v798 = vshll.u32 920167782, %v783
        %v799 = vshrl.u32 1326507024, %v784
        %v800 = vor.u32 %v798, %v799
        %vm801 = vcmp.lt.s32.totalorder %v782, 1
        %vm802 = vcmp.lt.s32.totalorder %v782, 2
        %vm803 = vcmp.lt.s32.totalorder %v782, 3
        %vm804 = vcmp.lt.s32.totalorder %v782, 4
        %v805 = vsel %vm801, %v785, %v788
        %v806 = vsel %vm804, %v794, 2102212464
        %v807 = vsel %vm803, %v791, %v806
        %v808 = vsel %vm802, %v805, %v807
        %v809 = vsel %vm801, %v788, %v791
        %v810 = vsel %vm804, %v797, 920167782
        %v811 = vsel %vm803, %v794, %v810
        %v812 = vsel %vm802, %v809, %v811
        %v813 = vsel %vm801, %v791, %v794
        %v814 = vsel %vm804, %v800, 1326507024
        %v815 = vsel %vm803, %v797, %v814
        %v816 = vsel %vm802, %v813, %v815
        %v817 = vshll.u32 %v777, 8
        %v818 = vmul.u32.u64.compose %v817, %v816
        %v819 = vextract.low.u32 %v818
        %v820 = vextract.high.u32 %v818
        %v821 = vmul.u32.u64.compose %v817, %v812
        %v822 = vextract.low.u32 %v821
        %v823 = vextract.high.u32 %v821
        %v824 = vmul.u32 %v817, %v808
        %v825 = vadd.s32 %v820, %v822
        %vm826 = vc.u32 %v820, %v822
        %v827 = vadd.s32 %v823, 1
        %v828 = vsel %vm826, %v827, %v823
        %v829 = vadd.s32 %v824, %v828
        %v830 = vadd.s32 %v829, 536870912
        %v831 = vshrl.u32 %v830, 30
        %v832 = vshll.u32 %v831, 30
        %v833 = vsub.s32 %v829, %v832
        %vm834 = vcmp.lt.s32.totalorder %v833, 0
        %v835 = vsub.s32 0, %v833
        %v836 = vsel %vm834, %v835, %v833
        %v837 = vclz %v836
        %v838 = vsub.s32 %v837, 2
        %vm839 = vcmp.gt.s32.totalorder 0, %v838
        %v840 = vsel %vm839, 0, %v838
        %v841 = vsub.s32 32, %v840
        %v842 = vshll.u32 %v833, %v840
        %v843 = vshrl.u32 %v825, %v841
        %v844 = vor.u32 %v842, %v843
        %v845 = vsub.s32 4294967266, %v840
        %v846 = vadd.s32 %v845, 127
        %v847 = vshll.u32 %v846, 23
        %v848 = vor.u32 4788187, %v847
        %v849 = vand.u32 2147483647, %v848
        %v851 = vcvt.s32.f32 %v844
        %v852 = vmul.f32 %v851, %v849
        %v853 = vxor.u32 %v852, 2147483648
        %v854 = vsel %vm771, %v853, %v852
        %v855 = vsub.s32 4, %v831
        %v856 = vsel %vm771, %v855, %v831
        %v857 = vsel %vm770, %v413, %v854
        %v858 = vsel %vm770, 0, %v856
        %v859 = vcosq.f32.pop %v857
        %v860 = vsinq.f32.pop %v857
        %vm861 = vweird.f32 %v413
        %v862 = vadd.s32 %v858, 3
        %v863 = vand.u32 %v862, 3
        %vm864 = vcmp.lt.s32.totalorder %v863, 2
        %vm865 = vcmp.eq.s32.totalorder %v863, 0
        %v866 = vxor.u32 %v860, 2147483648
        %v867 = vsel %vm865, %v859, %v866
        %vm868 = vcmp.eq.s32.totalorder %v863, 2
        %v869 = vxor.u32 %v859, 2147483648
        %v870 = vsel %vm868, %v869, %v860
        %v871 = vsel %vm864, %v867, %v870
        %v872 = vsel %vm861, nan, %v871
        %v873 = vand.u32 2147483647, %v418
        %vm874 = vcmp.le.f32.partialorder %v873, 0.7853982
        %vm875 = vcmp.lt.s32.totalorder %v418, 0
        %v876 = vand.u32 %v418, 2139095040
        %v877 = vshrl.u32 %v876, 23
        %v878 = vsub.s32 %v877, 127
        %v879 = vand.u32 2147483647, %v418
        %v880 = vand.u32 %v879, 8388607
        %v881 = vor.u32 %v880, 8388608
        %v882 = vsub.s32 0, %v881
        %v883 = vadd.s32 %v878, 1
        %vm884 = vcmp.gt.s32.totalorder %v883, 0
        %v885 = vsel %vm884, %v883, 0
        %v886 = vshrl.u32 %v885, 5
        %v887 = vand.u32 %v885, 31
        %v888 = vsub.s32 32, %v887
        %v889 = vshrl.u32 683565275, %v888
        %v890 = vshll.u32 683565275, %v887
        %v891 = vshrl.u32 2475754826, %v888
        %v892 = vor.u32 %v890, %v891
        %v893 = vshll.u32 2475754826, %v887
        %v894 = vshrl.u32 2131351028, %v888
        %v895 = vor.u32 %v893, %v894
        %v896 = vshll.u32 2131351028, %v887
        %v897 = vshrl.u32 2102212464, %v888
        %v898 = vor.u32 %v896, %v897
        %v899 = vshll.u32 2102212464, %v887
        %v900 = vshrl.u32 920167782, %v888
        %v901 = vor.u32 %v899, %v900
        %v902 = vshll.u32 920167782, %v887
        %v903 = vshrl.u32 1326507024, %v888
        %v904 = vor.u32 %v902, %v903
        %vm905 = vcmp.lt.s32.totalorder %v886, 1
        %vm906 = vcmp.lt.s32.totalorder %v886, 2
        %vm907 = vcmp.lt.s32.totalorder %v886, 3
        %vm908 = vcmp.lt.s32.totalorder %v886, 4
        %v909 = vsel %vm905, %v889, %v892
        %v910 = vsel %vm908, %v898, 2102212464
        %v911 = vsel %vm907, %v895, %v910
        %v912 = vsel %vm906, %v909, %v911
        %v913 = vsel %vm905, %v892, %v895
        %v914 = vsel %vm908, %v901, 920167782
        %v915 = vsel %vm907, %v898, %v914
        %v916 = vsel %vm906, %v913, %v915
        %v917 = vsel %vm905, %v895, %v898
        %v918 = vsel %vm908, %v904, 1326507024
        %v919 = vsel %vm907, %v901, %v918
        %v920 = vsel %vm906, %v917, %v919
        %v921 = vshll.u32 %v881, 8
        %v922 = vmul.u32.u64.compose %v921, %v920
        %v923 = vextract.low.u32 %v922
        %v924 = vextract.high.u32 %v922
        %v925 = vmul.u32.u64.compose %v921, %v916
        %v926 = vextract.low.u32 %v925
        %v927 = vextract.high.u32 %v925
        %v928 = vmul.u32 %v921, %v912
        %v929 = vadd.s32 %v924, %v926
        %vm930 = vc.u32 %v924, %v926
        %v931 = vadd.s32 %v927, 1
        %v932 = vsel %vm930, %v931, %v927
        %v933 = vadd.s32 %v928, %v932
        %v934 = vadd.s32 %v933, 536870912
        %v935 = vshrl.u32 %v934, 30
        %v936 = vshll.u32 %v935, 30
        %v937 = vsub.s32 %v933, %v936
        %vm938 = vcmp.lt.s32.totalorder %v937, 0
        %v939 = vsub.s32 0, %v937
        %v940 = vsel %vm938, %v939, %v937
        %v941 = vclz %v940
        %v942 = vsub.s32 %v941, 2
        %vm943 = vcmp.gt.s32.totalorder 0, %v942
        %v944 = vsel %vm943, 0, %v942
        %v945 = vsub.s32 32, %v944
        %v946 = vshll.u32 %v937, %v944
        %v947 = vshrl.u32 %v929, %v945
        %v948 = vor.u32 %v946, %v947
        %v949 = vsub.s32 4294967266, %v944
        %v950 = vadd.s32 %v949, 127
        %v951 = vshll.u32 %v950, 23
        %v952 = vor.u32 4788187, %v951
        %v953 = vand.u32 2147483647, %v952
        %v955 = vcvt.s32.f32 %v948
        %v956 = vmul.f32 %v955, %v953
        %v957 = vxor.u32 %v956, 2147483648
        %v958 = vsel %vm875, %v957, %v956
        %v959 = vsub.s32 4, %v935
        %v960 = vsel %vm875, %v959, %v935
        %v961 = vsel %vm874, %v418, %v958
        %v962 = vsel %vm874, 0, %v960
        %v963 = vcosq.f32.pop %v961
        %v964 = vsinq.f32.pop %v961
        %vm965 = vweird.f32 %v418
        %v966 = vadd.s32 %v962, 3
        %v967 = vand.u32 %v966, 3
        %vm968 = vcmp.lt.s32.totalorder %v967, 2
        %vm969 = vcmp.eq.s32.totalorder %v967, 0
        %v970 = vxor.u32 %v964, 2147483648
        %v971 = vsel %vm969, %v963, %v970
        %vm972 = vcmp.eq.s32.totalorder %v967, 2
        %v973 = vxor.u32 %v963, 2147483648
        %v974 = vsel %vm972, %v973, %v964
        %v975 = vsel %vm968, %v971, %v974
        %v976 = vsel %vm965, nan, %v975
        %v977 = vand.u32 2147483647, %v423
        %vm978 = vcmp.le.f32.partialorder %v977, 0.7853982
        %vm979 = vcmp.lt.s32.totalorder %v423, 0
        %v980 = vand.u32 %v423, 2139095040
        %v981 = vshrl.u32 %v980, 23
        %v982 = vsub.s32 %v981, 127
        %v983 = vand.u32 2147483647, %v423
        %v984 = vand.u32 %v983, 8388607
        %v985 = vor.u32 %v984, 8388608
        %v986 = vsub.s32 0, %v985
        %v987 = vadd.s32 %v982, 1
        %vm988 = vcmp.gt.s32.totalorder %v987, 0
        %v989 = vsel %vm988, %v987, 0
        %v990 = vshrl.u32 %v989, 5
        %v991 = vand.u32 %v989, 31
        %v992 = vsub.s32 32, %v991
        %v993 = vshrl.u32 683565275, %v992
        %v994 = vshll.u32 683565275, %v991
        %v995 = vshrl.u32 2475754826, %v992
        %v996 = vor.u32 %v994, %v995
        %v997 = vshll.u32 2475754826, %v991
        %v998 = vshrl.u32 2131351028, %v992
        %v999 = vor.u32 %v997, %v998
        %v1000 = vshll.u32 2131351028, %v991
        %v1001 = vshrl.u32 2102212464, %v992
        %v1002 = vor.u32 %v1000, %v1001
        %v1003 = vshll.u32 2102212464, %v991
        %v1004 = vshrl.u32 920167782, %v992
        %v1005 = vor.u32 %v1003, %v1004
        %v1006 = vshll.u32 920167782, %v991
        %v1007 = vshrl.u32 1326507024, %v992
        %v1008 = vor.u32 %v1006, %v1007
        %vm1009 = vcmp.lt.s32.totalorder %v990, 1
        %vm1010 = vcmp.lt.s32.totalorder %v990, 2
        %vm1011 = vcmp.lt.s32.totalorder %v990, 3
        %vm1012 = vcmp.lt.s32.totalorder %v990, 4
        %v1013 = vsel %vm1009, %v993, %v996
        %v1014 = vsel %vm1012, %v1002, 2102212464
        %v1015 = vsel %vm1011, %v999, %v1014
        %v1016 = vsel %vm1010, %v1013, %v1015
        %v1017 = vsel %vm1009, %v996, %v999
        %v1018 = vsel %vm1012, %v1005, 920167782
        %v1019 = vsel %vm1011, %v1002, %v1018
        %v1020 = vsel %vm1010, %v1017, %v1019
        %v1021 = vsel %vm1009, %v999, %v1002
        %v1022 = vsel %vm1012, %v1008, 1326507024
        %v1023 = vsel %vm1011, %v1005, %v1022
        %v1024 = vsel %vm1010, %v1021, %v1023
        %v1025 = vshll.u32 %v985, 8
        %v1026 = vmul.u32.u64.compose %v1025, %v1024
        %v1027 = vextract.low.u32 %v1026
        %v1028 = vextract.high.u32 %v1026
        %v1029 = vmul.u32.u64.compose %v1025, %v1020
        %v1030 = vextract.low.u32 %v1029
        %v1031 = vextract.high.u32 %v1029
        %v1032 = vmul.u32 %v1025, %v1016
        %v1033 = vadd.s32 %v1028, %v1030
        %vm1034 = vc.u32 %v1028, %v1030
        %v1035 = vadd.s32 %v1031, 1
        %v1036 = vsel %vm1034, %v1035, %v1031
        %v1037 = vadd.s32 %v1032, %v1036
        %v1038 = vadd.s32 %v1037, 536870912
        %v1039 = vshrl.u32 %v1038, 30
        %v1040 = vshll.u32 %v1039, 30
        %v1041 = vsub.s32 %v1037, %v1040
        %vm1042 = vcmp.lt.s32.totalorder %v1041, 0
        %v1043 = vsub.s32 0, %v1041
        %v1044 = vsel %vm1042, %v1043, %v1041
        %v1045 = vclz %v1044
        %v1046 = vsub.s32 %v1045, 2
        %vm1047 = vcmp.gt.s32.totalorder 0, %v1046
        %v1048 = vsel %vm1047, 0, %v1046
        %v1049 = vsub.s32 32, %v1048
        %v1050 = vshll.u32 %v1041, %v1048
        %v1051 = vshrl.u32 %v1033, %v1049
        %v1052 = vor.u32 %v1050, %v1051
        %v1053 = vsub.s32 4294967266, %v1048
        %v1054 = vadd.s32 %v1053, 127
        %v1055 = vshll.u32 %v1054, 23
        %v1056 = vor.u32 4788187, %v1055
        %v1057 = vand.u32 2147483647, %v1056
        %v1059 = vcvt.s32.f32 %v1052
        %v1060 = vmul.f32 %v1059, %v1057
        %v1061 = vxor.u32 %v1060, 2147483648
        %v1062 = vsel %vm979, %v1061, %v1060
        %v1063 = vsub.s32 4, %v1039
        %v1064 = vsel %vm979, %v1063, %v1039
        %v1065 = vsel %vm978, %v423, %v1062
        %v1066 = vsel %vm978, 0, %v1064
        %v1067 = vcosq.f32.pop %v1065
        %v1068 = vsinq.f32.pop %v1065
        %vm1069 = vweird.f32 %v423
        %v1070 = vadd.s32 %v1066, 3
        %v1071 = vand.u32 %v1070, 3
        %vm1072 = vcmp.lt.s32.totalorder %v1071, 2
        %vm1073 = vcmp.eq.s32.totalorder %v1071, 0
        %v1074 = vxor.u32 %v1068, 2147483648
        %v1075 = vsel %vm1073, %v1067, %v1074
        %vm1076 = vcmp.eq.s32.totalorder %v1071, 2
        %v1077 = vxor.u32 %v1067, 2147483648
        %v1078 = vsel %vm1076, %v1077, %v1068
        %v1079 = vsel %vm1072, %v1075, %v1078
        %v1080 = vsel %vm1069, nan, %v1079
        %v1081 = vand.u32 2147483647, %v428
        %vm1082 = vcmp.le.f32.partialorder %v1081, 0.7853982
        %vm1083 = vcmp.lt.s32.totalorder %v428, 0
        %v1084 = vand.u32 %v428, 2139095040
        %v1085 = vshrl.u32 %v1084, 23
        %v1086 = vsub.s32 %v1085, 127
        %v1087 = vand.u32 2147483647, %v428
        %v1088 = vand.u32 %v1087, 8388607
        %v1089 = vor.u32 %v1088, 8388608
        %v1090 = vsub.s32 0, %v1089
        %v1091 = vadd.s32 %v1086, 1
        %vm1092 = vcmp.gt.s32.totalorder %v1091, 0
        %v1093 = vsel %vm1092, %v1091, 0
        %v1094 = vshrl.u32 %v1093, 5
        %v1095 = vand.u32 %v1093, 31
        %v1096 = vsub.s32 32, %v1095
        %v1097 = vshrl.u32 683565275, %v1096
        %v1098 = vshll.u32 683565275, %v1095
        %v1099 = vshrl.u32 2475754826, %v1096
        %v1100 = vor.u32 %v1098, %v1099
        %v1101 = vshll.u32 2475754826, %v1095
        %v1102 = vshrl.u32 2131351028, %v1096
        %v1103 = vor.u32 %v1101, %v1102
        %v1104 = vshll.u32 2131351028, %v1095
        %v1105 = vshrl.u32 2102212464, %v1096
        %v1106 = vor.u32 %v1104, %v1105
        %v1107 = vshll.u32 2102212464, %v1095
        %v1108 = vshrl.u32 920167782, %v1096
        %v1109 = vor.u32 %v1107, %v1108
        %v1110 = vshll.u32 920167782, %v1095
        %v1111 = vshrl.u32 1326507024, %v1096
        %v1112 = vor.u32 %v1110, %v1111
        %vm1113 = vcmp.lt.s32.totalorder %v1094, 1
        %vm1114 = vcmp.lt.s32.totalorder %v1094, 2
        %vm1115 = vcmp.lt.s32.totalorder %v1094, 3
        %vm1116 = vcmp.lt.s32.totalorder %v1094, 4
        %v1117 = vsel %vm1113, %v1097, %v1100
        %v1118 = vsel %vm1116, %v1106, 2102212464
        %v1119 = vsel %vm1115, %v1103, %v1118
        %v1120 = vsel %vm1114, %v1117, %v1119
        %v1121 = vsel %vm1113, %v1100, %v1103
        %v1122 = vsel %vm1116, %v1109, 920167782
        %v1123 = vsel %vm1115, %v1106, %v1122
        %v1124 = vsel %vm1114, %v1121, %v1123
        %v1125 = vsel %vm1113, %v1103, %v1106
        %v1126 = vsel %vm1116, %v1112, 1326507024
        %v1127 = vsel %vm1115, %v1109, %v1126
        %v1128 = vsel %vm1114, %v1125, %v1127
        %v1129 = vshll.u32 %v1089, 8
        %v1130 = vmul.u32.u64.compose %v1129, %v1128
        %v1131 = vextract.low.u32 %v1130
        %v1132 = vextract.high.u32 %v1130
        %v1133 = vmul.u32.u64.compose %v1129, %v1124
        %v1134 = vextract.low.u32 %v1133
        %v1135 = vextract.high.u32 %v1133
        %v1136 = vmul.u32 %v1129, %v1120
        %v1137 = vadd.s32 %v1132, %v1134
        %vm1138 = vc.u32 %v1132, %v1134
        %v1139 = vadd.s32 %v1135, 1
        %v1140 = vsel %vm1138, %v1139, %v1135
        %v1141 = vadd.s32 %v1136, %v1140
        %v1142 = vadd.s32 %v1141, 536870912
        %v1143 = vshrl.u32 %v1142, 30
        %v1144 = vshll.u32 %v1143, 30
        %v1145 = vsub.s32 %v1141, %v1144
        %vm1146 = vcmp.lt.s32.totalorder %v1145, 0
        %v1147 = vsub.s32 0, %v1145
        %v1148 = vsel %vm1146, %v1147, %v1145
        %v1149 = vclz %v1148
        %v1150 = vsub.s32 %v1149, 2
        %vm1151 = vcmp.gt.s32.totalorder 0, %v1150
        %v1152 = vsel %vm1151, 0, %v1150
        %v1153 = vsub.s32 32, %v1152
        %v1154 = vshll.u32 %v1145, %v1152
        %v1155 = vshrl.u32 %v1137, %v1153
        %v1156 = vor.u32 %v1154, %v1155
        %v1157 = vsub.s32 4294967266, %v1152
        %v1158 = vadd.s32 %v1157, 127
        %v1159 = vshll.u32 %v1158, 23
        %v1160 = vor.u32 4788187, %v1159
        %v1161 = vand.u32 2147483647, %v1160
        %v1163 = vcvt.s32.f32 %v1156
        %v1164 = vmul.f32 %v1163, %v1161
        %v1165 = vxor.u32 %v1164, 2147483648
        %v1166 = vsel %vm1083, %v1165, %v1164
        %v1167 = vsub.s32 4, %v1143
        %v1168 = vsel %vm1083, %v1167, %v1143
        %v1169 = vsel %vm1082, %v428, %v1166
        %v1170 = vsel %vm1082, 0, %v1168
        %v1171 = vcosq.f32.pop %v1169
        %v1172 = vsinq.f32.pop %v1169
        %vm1173 = vweird.f32 %v428
        %v1174 = vadd.s32 %v1170, 3
        %v1175 = vand.u32 %v1174, 3
        %vm1176 = vcmp.lt.s32.totalorder %v1175, 2
        %vm1177 = vcmp.eq.s32.totalorder %v1175, 0
        %v1178 = vxor.u32 %v1172, 2147483648
        %v1179 = vsel %vm1177, %v1171, %v1178
        %vm1180 = vcmp.eq.s32.totalorder %v1175, 2
        %v1181 = vxor.u32 %v1171, 2147483648
        %v1182 = vsel %vm1180, %v1181, %v1172
        %v1183 = vsel %vm1176, %v1179, %v1182
        %v1184 = vsel %vm1173, nan, %v1183
        %v1185 = vand.u32 2147483647, %v433
        %vm1186 = vcmp.le.f32.partialorder %v1185, 0.7853982
        %vm1187 = vcmp.lt.s32.totalorder %v433, 0
        %v1188 = vand.u32 %v433, 2139095040
        %v1189 = vshrl.u32 %v1188, 23
        %v1190 = vsub.s32 %v1189, 127
        %v1191 = vand.u32 2147483647, %v433
        %v1192 = vand.u32 %v1191, 8388607
        %v1193 = vor.u32 %v1192, 8388608
        %v1194 = vsub.s32 0, %v1193
        %v1195 = vadd.s32 %v1190, 1
        %vm1196 = vcmp.gt.s32.totalorder %v1195, 0
        %v1197 = vsel %vm1196, %v1195, 0
        %v1198 = vshrl.u32 %v1197, 5
        %v1199 = vand.u32 %v1197, 31
        %v1200 = vsub.s32 32, %v1199
        %v1201 = vshrl.u32 683565275, %v1200
        %v1202 = vshll.u32 683565275, %v1199
        %v1203 = vshrl.u32 2475754826, %v1200
        %v1204 = vor.u32 %v1202, %v1203
        %v1205 = vshll.u32 2475754826, %v1199
        %v1206 = vshrl.u32 2131351028, %v1200
        %v1207 = vor.u32 %v1205, %v1206
        %v1208 = vshll.u32 2131351028, %v1199
        %v1209 = vshrl.u32 2102212464, %v1200
        %v1210 = vor.u32 %v1208, %v1209
        %v1211 = vshll.u32 2102212464, %v1199
        %v1212 = vshrl.u32 920167782, %v1200
        %v1213 = vor.u32 %v1211, %v1212
        %v1214 = vshll.u32 920167782, %v1199
        %v1215 = vshrl.u32 1326507024, %v1200
        %v1216 = vor.u32 %v1214, %v1215
        %vm1217 = vcmp.lt.s32.totalorder %v1198, 1
        %vm1218 = vcmp.lt.s32.totalorder %v1198, 2
        %vm1219 = vcmp.lt.s32.totalorder %v1198, 3
        %vm1220 = vcmp.lt.s32.totalorder %v1198, 4
        %v1221 = vsel %vm1217, %v1201, %v1204
        %v1222 = vsel %vm1220, %v1210, 2102212464
        %v1223 = vsel %vm1219, %v1207, %v1222
        %v1224 = vsel %vm1218, %v1221, %v1223
        %v1225 = vsel %vm1217, %v1204, %v1207
        %v1226 = vsel %vm1220, %v1213, 920167782
        %v1227 = vsel %vm1219, %v1210, %v1226
        %v1228 = vsel %vm1218, %v1225, %v1227
        %v1229 = vsel %vm1217, %v1207, %v1210
        %v1230 = vsel %vm1220, %v1216, 1326507024
        %v1231 = vsel %vm1219, %v1213, %v1230
        %v1232 = vsel %vm1218, %v1229, %v1231
        %v1233 = vshll.u32 %v1193, 8
        %v1234 = vmul.u32.u64.compose %v1233, %v1232
        %v1235 = vextract.low.u32 %v1234
        %v1236 = vextract.high.u32 %v1234
        %v1237 = vmul.u32.u64.compose %v1233, %v1228
        %v1238 = vextract.low.u32 %v1237
        %v1239 = vextract.high.u32 %v1237
        %v1240 = vmul.u32 %v1233, %v1224
        %v1241 = vadd.s32 %v1236, %v1238
        %vm1242 = vc.u32 %v1236, %v1238
        %v1243 = vadd.s32 %v1239, 1
        %v1244 = vsel %vm1242, %v1243, %v1239
        %v1245 = vadd.s32 %v1240, %v1244
        %v1246 = vadd.s32 %v1245, 536870912
        %v1247 = vshrl.u32 %v1246, 30
        %v1248 = vshll.u32 %v1247, 30
        %v1249 = vsub.s32 %v1245, %v1248
        %vm1250 = vcmp.lt.s32.totalorder %v1249, 0
        %v1251 = vsub.s32 0, %v1249
        %v1252 = vsel %vm1250, %v1251, %v1249
        %v1253 = vclz %v1252
        %v1254 = vsub.s32 %v1253, 2
        %vm1255 = vcmp.gt.s32.totalorder 0, %v1254
        %v1256 = vsel %vm1255, 0, %v1254
        %v1257 = vsub.s32 32, %v1256
        %v1258 = vshll.u32 %v1249, %v1256
        %v1259 = vshrl.u32 %v1241, %v1257
        %v1260 = vor.u32 %v1258, %v1259
        %v1261 = vsub.s32 4294967266, %v1256
        %v1262 = vadd.s32 %v1261, 127
        %v1263 = vshll.u32 %v1262, 23
        %v1264 = vor.u32 4788187, %v1263
        %v1265 = vand.u32 2147483647, %v1264
        %v1267 = vcvt.s32.f32 %v1260
        %v1268 = vmul.f32 %v1267, %v1265
        %v1269 = vxor.u32 %v1268, 2147483648
        %v1270 = vsel %vm1187, %v1269, %v1268
        %v1271 = vsub.s32 4, %v1247
        %v1272 = vsel %vm1187, %v1271, %v1247
        %v1273 = vsel %vm1186, %v433, %v1270
        %v1274 = vsel %vm1186, 0, %v1272
        %v1275 = vcosq.f32.pop %v1273
        %v1276 = vsinq.f32.pop %v1273
        %vm1277 = vweird.f32 %v433
        %v1278 = vadd.s32 %v1274, 3
        %v1279 = vand.u32 %v1278, 3
        %vm1280 = vcmp.lt.s32.totalorder %v1279, 2
        %vm1281 = vcmp.eq.s32.totalorder %v1279, 0
        %v1282 = vxor.u32 %v1276, 2147483648
        %v1283 = vsel %vm1281, %v1275, %v1282
        %vm1284 = vcmp.eq.s32.totalorder %v1279, 2
        %v1285 = vxor.u32 %v1275, 2147483648
        %v1286 = vsel %vm1284, %v1285, %v1276
        %v1287 = vsel %vm1280, %v1283, %v1286
        %v1288 = vsel %vm1277, nan, %v1287
        %v1289 = vand.u32 2147483647, %v438
        %vm1290 = vcmp.le.f32.partialorder %v1289, 0.7853982
        %vm1291 = vcmp.lt.s32.totalorder %v438, 0
        %v1292 = vand.u32 %v438, 2139095040
        %v1293 = vshrl.u32 %v1292, 23
        %v1294 = vsub.s32 %v1293, 127
        %v1295 = vand.u32 2147483647, %v438
        %v1296 = vand.u32 %v1295, 8388607
        %v1297 = vor.u32 %v1296, 8388608
        %v1298 = vsub.s32 0, %v1297
        %v1299 = vadd.s32 %v1294, 1
        %vm1300 = vcmp.gt.s32.totalorder %v1299, 0
        %v1301 = vsel %vm1300, %v1299, 0
        %v1302 = vshrl.u32 %v1301, 5
        %v1303 = vand.u32 %v1301, 31
        %v1304 = vsub.s32 32, %v1303
        %v1305 = vshrl.u32 683565275, %v1304
        %v1306 = vshll.u32 683565275, %v1303
        %v1307 = vshrl.u32 2475754826, %v1304
        %v1308 = vor.u32 %v1306, %v1307
        %v1309 = vshll.u32 2475754826, %v1303
        %v1310 = vshrl.u32 2131351028, %v1304
        %v1311 = vor.u32 %v1309, %v1310
        %v1312 = vshll.u32 2131351028, %v1303
        %v1313 = vshrl.u32 2102212464, %v1304
        %v1314 = vor.u32 %v1312, %v1313
        %v1315 = vshll.u32 2102212464, %v1303
        %v1316 = vshrl.u32 920167782, %v1304
        %v1317 = vor.u32 %v1315, %v1316
        %v1318 = vshll.u32 920167782, %v1303
        %v1319 = vshrl.u32 1326507024, %v1304
        %v1320 = vor.u32 %v1318, %v1319
        %vm1321 = vcmp.lt.s32.totalorder %v1302, 1
        %vm1322 = vcmp.lt.s32.totalorder %v1302, 2
        %vm1323 = vcmp.lt.s32.totalorder %v1302, 3
        %vm1324 = vcmp.lt.s32.totalorder %v1302, 4
        %v1325 = vsel %vm1321, %v1305, %v1308
        %v1326 = vsel %vm1324, %v1314, 2102212464
        %v1327 = vsel %vm1323, %v1311, %v1326
        %v1328 = vsel %vm1322, %v1325, %v1327
        %v1329 = vsel %vm1321, %v1308, %v1311
        %v1330 = vsel %vm1324, %v1317, 920167782
        %v1331 = vsel %vm1323, %v1314, %v1330
        %v1332 = vsel %vm1322, %v1329, %v1331
        %v1333 = vsel %vm1321, %v1311, %v1314
        %v1334 = vsel %vm1324, %v1320, 1326507024
        %v1335 = vsel %vm1323, %v1317, %v1334
        %v1336 = vsel %vm1322, %v1333, %v1335
        %v1337 = vshll.u32 %v1297, 8
        %v1338 = vmul.u32.u64.compose %v1337, %v1336
        %v1339 = vextract.low.u32 %v1338
        %v1340 = vextract.high.u32 %v1338
        %v1341 = vmul.u32.u64.compose %v1337, %v1332
        %v1342 = vextract.low.u32 %v1341
        %v1343 = vextract.high.u32 %v1341
        %v1344 = vmul.u32 %v1337, %v1328
        %v1345 = vadd.s32 %v1340, %v1342
        %vm1346 = vc.u32 %v1340, %v1342
        %v1347 = vadd.s32 %v1343, 1
        %v1348 = vsel %vm1346, %v1347, %v1343
        %v1349 = vadd.s32 %v1344, %v1348
        %v1350 = vadd.s32 %v1349, 536870912
        %v1351 = vshrl.u32 %v1350, 30
        %v1352 = vshll.u32 %v1351, 30
        %v1353 = vsub.s32 %v1349, %v1352
        %vm1354 = vcmp.lt.s32.totalorder %v1353, 0
        %v1355 = vsub.s32 0, %v1353
        %v1356 = vsel %vm1354, %v1355, %v1353
        %v1357 = vclz %v1356
        %v1358 = vsub.s32 %v1357, 2
        %vm1359 = vcmp.gt.s32.totalorder 0, %v1358
        %v1360 = vsel %vm1359, 0, %v1358
        %v1361 = vsub.s32 32, %v1360
        %v1362 = vshll.u32 %v1353, %v1360
        %v1363 = vshrl.u32 %v1345, %v1361
        %v1364 = vor.u32 %v1362, %v1363
        %v1365 = vsub.s32 4294967266, %v1360
        %v1366 = vadd.s32 %v1365, 127
        %v1367 = vshll.u32 %v1366, 23
        %v1368 = vor.u32 4788187, %v1367
        %v1369 = vand.u32 2147483647, %v1368
        %v1371 = vcvt.s32.f32 %v1364
        %v1372 = vmul.f32 %v1371, %v1369
        %v1373 = vxor.u32 %v1372, 2147483648
        %v1374 = vsel %vm1291, %v1373, %v1372
        %v1375 = vsub.s32 4, %v1351
        %v1376 = vsel %vm1291, %v1375, %v1351
        %v1377 = vsel %vm1290, %v438, %v1374
        %v1378 = vsel %vm1290, 0, %v1376
        %v1379 = vcosq.f32.pop %v1377
        %v1380 = vsinq.f32.pop %v1377
        %vm1381 = vweird.f32 %v438
        %v1382 = vadd.s32 %v1378, 3
        %v1383 = vand.u32 %v1382, 3
        %vm1384 = vcmp.lt.s32.totalorder %v1383, 2
        %vm1385 = vcmp.eq.s32.totalorder %v1383, 0
        %v1386 = vxor.u32 %v1380, 2147483648
        %v1387 = vsel %vm1385, %v1379, %v1386
        %vm1388 = vcmp.eq.s32.totalorder %v1383, 2
        %v1389 = vxor.u32 %v1379, 2147483648
        %v1390 = vsel %vm1388, %v1389, %v1380
        %v1391 = vsel %vm1384, %v1387, %v1390
        %v1392 = vsel %vm1381, nan, %v1391
        %v1393 = vand.u32 2147483647, %v443
        %vm1394 = vcmp.le.f32.partialorder %v1393, 0.7853982
        %vm1395 = vcmp.lt.s32.totalorder %v443, 0
        %v1396 = vand.u32 %v443, 2139095040
        %v1397 = vshrl.u32 %v1396, 23
        %v1398 = vsub.s32 %v1397, 127
        %v1399 = vand.u32 2147483647, %v443
        %v1400 = vand.u32 %v1399, 8388607
        %v1401 = vor.u32 %v1400, 8388608
        %v1402 = vsub.s32 0, %v1401
        %v1403 = vadd.s32 %v1398, 1
        %vm1404 = vcmp.gt.s32.totalorder %v1403, 0
        %v1405 = vsel %vm1404, %v1403, 0
        %v1406 = vshrl.u32 %v1405, 5
        %v1407 = vand.u32 %v1405, 31
        %v1408 = vsub.s32 32, %v1407
        %v1409 = vshrl.u32 683565275, %v1408
        %v1410 = vshll.u32 683565275, %v1407
        %v1411 = vshrl.u32 2475754826, %v1408
        %v1412 = vor.u32 %v1410, %v1411
        %v1413 = vshll.u32 2475754826, %v1407
        %v1414 = vshrl.u32 2131351028, %v1408
        %v1415 = vor.u32 %v1413, %v1414
        %v1416 = vshll.u32 2131351028, %v1407
        %v1417 = vshrl.u32 2102212464, %v1408
        %v1418 = vor.u32 %v1416, %v1417
        %v1419 = vshll.u32 2102212464, %v1407
        %v1420 = vshrl.u32 920167782, %v1408
        %v1421 = vor.u32 %v1419, %v1420
        %v1422 = vshll.u32 920167782, %v1407
        %v1423 = vshrl.u32 1326507024, %v1408
        %v1424 = vor.u32 %v1422, %v1423
        %vm1425 = vcmp.lt.s32.totalorder %v1406, 1
        %vm1426 = vcmp.lt.s32.totalorder %v1406, 2
        %vm1427 = vcmp.lt.s32.totalorder %v1406, 3
        %vm1428 = vcmp.lt.s32.totalorder %v1406, 4
        %v1429 = vsel %vm1425, %v1409, %v1412
        %v1430 = vsel %vm1428, %v1418, 2102212464
        %v1431 = vsel %vm1427, %v1415, %v1430
        %v1432 = vsel %vm1426, %v1429, %v1431
        %v1433 = vsel %vm1425, %v1412, %v1415
        %v1434 = vsel %vm1428, %v1421, 920167782
        %v1435 = vsel %vm1427, %v1418, %v1434
        %v1436 = vsel %vm1426, %v1433, %v1435
        %v1437 = vsel %vm1425, %v1415, %v1418
        %v1438 = vsel %vm1428, %v1424, 1326507024
        %v1439 = vsel %vm1427, %v1421, %v1438
        %v1440 = vsel %vm1426, %v1437, %v1439
        %v1441 = vshll.u32 %v1401, 8
        %v1442 = vmul.u32.u64.compose %v1441, %v1440
        %v1443 = vextract.low.u32 %v1442
        %v1444 = vextract.high.u32 %v1442
        %v1445 = vmul.u32.u64.compose %v1441, %v1436
        %v1446 = vextract.low.u32 %v1445
        %v1447 = vextract.high.u32 %v1445
        %v1448 = vmul.u32 %v1441, %v1432
        %v1449 = vadd.s32 %v1444, %v1446
        %vm1450 = vc.u32 %v1444, %v1446
        %v1451 = vadd.s32 %v1447, 1
        %v1452 = vsel %vm1450, %v1451, %v1447
        %v1453 = vadd.s32 %v1448, %v1452
        %v1454 = vadd.s32 %v1453, 536870912
        %v1455 = vshrl.u32 %v1454, 30
        %v1456 = vshll.u32 %v1455, 30
        %v1457 = vsub.s32 %v1453, %v1456
        %vm1458 = vcmp.lt.s32.totalorder %v1457, 0
        %v1459 = vsub.s32 0, %v1457
        %v1460 = vsel %vm1458, %v1459, %v1457
        %v1461 = vclz %v1460
        %v1462 = vsub.s32 %v1461, 2
        %vm1463 = vcmp.gt.s32.totalorder 0, %v1462
        %v1464 = vsel %vm1463, 0, %v1462
        %v1465 = vsub.s32 32, %v1464
        %v1466 = vshll.u32 %v1457, %v1464
        %v1467 = vshrl.u32 %v1449, %v1465
        %v1468 = vor.u32 %v1466, %v1467
        %v1469 = vsub.s32 4294967266, %v1464
        %v1470 = vadd.s32 %v1469, 127
        %v1471 = vshll.u32 %v1470, 23
        %v1472 = vor.u32 4788187, %v1471
        %v1473 = vand.u32 2147483647, %v1472
        %v1475 = vcvt.s32.f32 %v1468
        %v1476 = vmul.f32 %v1475, %v1473
        %v1477 = vxor.u32 %v1476, 2147483648
        %v1478 = vsel %vm1395, %v1477, %v1476
        %v1479 = vsub.s32 4, %v1455
        %v1480 = vsel %vm1395, %v1479, %v1455
        %v1481 = vsel %vm1394, %v443, %v1478
        %v1482 = vsel %vm1394, 0, %v1480
        %v1483 = vcosq.f32.pop %v1481
        %v1484 = vsinq.f32.pop %v1481
        %vm1485 = vweird.f32 %v443
        %v1486 = vadd.s32 %v1482, 3
        %v1487 = vand.u32 %v1486, 3
        %vm1488 = vcmp.lt.s32.totalorder %v1487, 2
        %vm1489 = vcmp.eq.s32.totalorder %v1487, 0
        %v1490 = vxor.u32 %v1484, 2147483648
        %v1491 = vsel %vm1489, %v1483, %v1490
        %vm1492 = vcmp.eq.s32.totalorder %v1487, 2
        %v1493 = vxor.u32 %v1483, 2147483648
        %v1494 = vsel %vm1492, %v1493, %v1484
        %v1495 = vsel %vm1488, %v1491, %v1494
        %v1496 = vsel %vm1485, nan, %v1495
        %v1497 = vand.u32 2147483647, %v448
        %vm1498 = vcmp.le.f32.partialorder %v1497, 0.7853982
        %vm1499 = vcmp.lt.s32.totalorder %v448, 0
        %v1500 = vand.u32 %v448, 2139095040
        %v1501 = vshrl.u32 %v1500, 23
        %v1502 = vsub.s32 %v1501, 127
        %v1503 = vand.u32 2147483647, %v448
        %v1504 = vand.u32 %v1503, 8388607
        %v1505 = vor.u32 %v1504, 8388608
        %v1506 = vsub.s32 0, %v1505
        %v1507 = vadd.s32 %v1502, 1
        %vm1508 = vcmp.gt.s32.totalorder %v1507, 0
        %v1509 = vsel %vm1508, %v1507, 0
        %v1510 = vshrl.u32 %v1509, 5
        %v1511 = vand.u32 %v1509, 31
        %v1512 = vsub.s32 32, %v1511
        %v1513 = vshrl.u32 683565275, %v1512
        %v1514 = vshll.u32 683565275, %v1511
        %v1515 = vshrl.u32 2475754826, %v1512
        %v1516 = vor.u32 %v1514, %v1515
        %v1517 = vshll.u32 2475754826, %v1511
        %v1518 = vshrl.u32 2131351028, %v1512
        %v1519 = vor.u32 %v1517, %v1518
        %v1520 = vshll.u32 2131351028, %v1511
        %v1521 = vshrl.u32 2102212464, %v1512
        %v1522 = vor.u32 %v1520, %v1521
        %v1523 = vshll.u32 2102212464, %v1511
        %v1524 = vshrl.u32 920167782, %v1512
        %v1525 = vor.u32 %v1523, %v1524
        %v1526 = vshll.u32 920167782, %v1511
        %v1527 = vshrl.u32 1326507024, %v1512
        %v1528 = vor.u32 %v1526, %v1527
        %vm1529 = vcmp.lt.s32.totalorder %v1510, 1
        %vm1530 = vcmp.lt.s32.totalorder %v1510, 2
        %vm1531 = vcmp.lt.s32.totalorder %v1510, 3
        %vm1532 = vcmp.lt.s32.totalorder %v1510, 4
        %v1533 = vsel %vm1529, %v1513, %v1516
        %v1534 = vsel %vm1532, %v1522, 2102212464
        %v1535 = vsel %vm1531, %v1519, %v1534
        %v1536 = vsel %vm1530, %v1533, %v1535
        %v1537 = vsel %vm1529, %v1516, %v1519
        %v1538 = vsel %vm1532, %v1525, 920167782
        %v1539 = vsel %vm1531, %v1522, %v1538
        %v1540 = vsel %vm1530, %v1537, %v1539
        %v1541 = vsel %vm1529, %v1519, %v1522
        %v1542 = vsel %vm1532, %v1528, 1326507024
        %v1543 = vsel %vm1531, %v1525, %v1542
        %v1544 = vsel %vm1530, %v1541, %v1543
        %v1545 = vshll.u32 %v1505, 8
        %v1546 = vmul.u32.u64.compose %v1545, %v1544
        %v1547 = vextract.low.u32 %v1546
        %v1548 = vextract.high.u32 %v1546
        %v1549 = vmul.u32.u64.compose %v1545, %v1540
        %v1550 = vextract.low.u32 %v1549
        %v1551 = vextract.high.u32 %v1549
        %v1552 = vmul.u32 %v1545, %v1536
        %v1553 = vadd.s32 %v1548, %v1550
        %vm1554 = vc.u32 %v1548, %v1550
        %v1555 = vadd.s32 %v1551, 1
        %v1556 = vsel %vm1554, %v1555, %v1551
        %v1557 = vadd.s32 %v1552, %v1556
        %v1558 = vadd.s32 %v1557, 536870912
        %v1559 = vshrl.u32 %v1558, 30
        %v1560 = vshll.u32 %v1559, 30
        %v1561 = vsub.s32 %v1557, %v1560
        %vm1562 = vcmp.lt.s32.totalorder %v1561, 0
        %v1563 = vsub.s32 0, %v1561
        %v1564 = vsel %vm1562, %v1563, %v1561
        %v1565 = vclz %v1564
        %v1566 = vsub.s32 %v1565, 2
        %vm1567 = vcmp.gt.s32.totalorder 0, %v1566
        %v1568 = vsel %vm1567, 0, %v1566
        %v1569 = vsub.s32 32, %v1568
        %v1570 = vshll.u32 %v1561, %v1568
        %v1571 = vshrl.u32 %v1553, %v1569
        %v1572 = vor.u32 %v1570, %v1571
        %v1573 = vsub.s32 4294967266, %v1568
        %v1574 = vadd.s32 %v1573, 127
        %v1575 = vshll.u32 %v1574, 23
        %v1576 = vor.u32 4788187, %v1575
        %v1577 = vand.u32 2147483647, %v1576
        %v1579 = vcvt.s32.f32 %v1572
        %v1580 = vmul.f32 %v1579, %v1577
        %v1581 = vxor.u32 %v1580, 2147483648
        %v1582 = vsel %vm1499, %v1581, %v1580
        %v1583 = vsub.s32 4, %v1559
        %v1584 = vsel %vm1499, %v1583, %v1559
        %v1585 = vsel %vm1498, %v448, %v1582
        %v1586 = vsel %vm1498, 0, %v1584
        %v1587 = vcosq.f32.pop %v1585
        %v1588 = vsinq.f32.pop %v1585
        %vm1589 = vweird.f32 %v448
        %v1590 = vadd.s32 %v1586, 3
        %v1591 = vand.u32 %v1590, 3
        %vm1592 = vcmp.lt.s32.totalorder %v1591, 2
        %vm1593 = vcmp.eq.s32.totalorder %v1591, 0
        %v1594 = vxor.u32 %v1588, 2147483648
        %v1595 = vsel %vm1593, %v1587, %v1594
        %vm1596 = vcmp.eq.s32.totalorder %v1591, 2
        %v1597 = vxor.u32 %v1587, 2147483648
        %v1598 = vsel %vm1596, %v1597, %v1588
        %v1599 = vsel %vm1592, %v1595, %v1598
        %v1600 = vsel %vm1589, nan, %v1599
        %v1601 = vand.u32 2147483647, %v453
        %vm1602 = vcmp.le.f32.partialorder %v1601, 0.7853982
        %vm1603 = vcmp.lt.s32.totalorder %v453, 0
        %v1604 = vand.u32 %v453, 2139095040
        %v1605 = vshrl.u32 %v1604, 23
        %v1606 = vsub.s32 %v1605, 127
        %v1607 = vand.u32 2147483647, %v453
        %v1608 = vand.u32 %v1607, 8388607
        %v1609 = vor.u32 %v1608, 8388608
        %v1610 = vsub.s32 0, %v1609
        %v1611 = vadd.s32 %v1606, 1
        %vm1612 = vcmp.gt.s32.totalorder %v1611, 0
        %v1613 = vsel %vm1612, %v1611, 0
        %v1614 = vshrl.u32 %v1613, 5
        %v1615 = vand.u32 %v1613, 31
        %v1616 = vsub.s32 32, %v1615
        %v1617 = vshrl.u32 683565275, %v1616
        %v1618 = vshll.u32 683565275, %v1615
        %v1619 = vshrl.u32 2475754826, %v1616
        %v1620 = vor.u32 %v1618, %v1619
        %v1621 = vshll.u32 2475754826, %v1615
        %v1622 = vshrl.u32 2131351028, %v1616
        %v1623 = vor.u32 %v1621, %v1622
        %v1624 = vshll.u32 2131351028, %v1615
        %v1625 = vshrl.u32 2102212464, %v1616
        %v1626 = vor.u32 %v1624, %v1625
        %v1627 = vshll.u32 2102212464, %v1615
        %v1628 = vshrl.u32 920167782, %v1616
        %v1629 = vor.u32 %v1627, %v1628
        %v1630 = vshll.u32 920167782, %v1615
        %v1631 = vshrl.u32 1326507024, %v1616
        %v1632 = vor.u32 %v1630, %v1631
        %vm1633 = vcmp.lt.s32.totalorder %v1614, 1
        %vm1634 = vcmp.lt.s32.totalorder %v1614, 2
        %vm1635 = vcmp.lt.s32.totalorder %v1614, 3
        %vm1636 = vcmp.lt.s32.totalorder %v1614, 4
        %v1637 = vsel %vm1633, %v1617, %v1620
        %v1638 = vsel %vm1636, %v1626, 2102212464
        %v1639 = vsel %vm1635, %v1623, %v1638
        %v1640 = vsel %vm1634, %v1637, %v1639
        %v1641 = vsel %vm1633, %v1620, %v1623
        %v1642 = vsel %vm1636, %v1629, 920167782
        %v1643 = vsel %vm1635, %v1626, %v1642
        %v1644 = vsel %vm1634, %v1641, %v1643
        %v1645 = vsel %vm1633, %v1623, %v1626
        %v1646 = vsel %vm1636, %v1632, 1326507024
        %v1647 = vsel %vm1635, %v1629, %v1646
        %v1648 = vsel %vm1634, %v1645, %v1647
        %v1649 = vshll.u32 %v1609, 8
        %v1650 = vmul.u32.u64.compose %v1649, %v1648
        %v1651 = vextract.low.u32 %v1650
        %v1652 = vextract.high.u32 %v1650
        %v1653 = vmul.u32.u64.compose %v1649, %v1644
        %v1654 = vextract.low.u32 %v1653
        %v1655 = vextract.high.u32 %v1653
        %v1656 = vmul.u32 %v1649, %v1640
        %v1657 = vadd.s32 %v1652, %v1654
        %vm1658 = vc.u32 %v1652, %v1654
        %v1659 = vadd.s32 %v1655, 1
        %v1660 = vsel %vm1658, %v1659, %v1655
        %v1661 = vadd.s32 %v1656, %v1660
        %v1662 = vadd.s32 %v1661, 536870912
        %v1663 = vshrl.u32 %v1662, 30
        %v1664 = vshll.u32 %v1663, 30
        %v1665 = vsub.s32 %v1661, %v1664
        %vm1666 = vcmp.lt.s32.totalorder %v1665, 0
        %v1667 = vsub.s32 0, %v1665
        %v1668 = vsel %vm1666, %v1667, %v1665
        %v1669 = vclz %v1668
        %v1670 = vsub.s32 %v1669, 2
        %vm1671 = vcmp.gt.s32.totalorder 0, %v1670
        %v1672 = vsel %vm1671, 0, %v1670
        %v1673 = vsub.s32 32, %v1672
        %v1674 = vshll.u32 %v1665, %v1672
        %v1675 = vshrl.u32 %v1657, %v1673
        %v1676 = vor.u32 %v1674, %v1675
        %v1677 = vsub.s32 4294967266, %v1672
        %v1678 = vadd.s32 %v1677, 127
        %v1679 = vshll.u32 %v1678, 23
        %v1680 = vor.u32 4788187, %v1679
        %v1681 = vand.u32 2147483647, %v1680
        %v1683 = vcvt.s32.f32 %v1676
        %v1684 = vmul.f32 %v1683, %v1681
        %v1685 = vxor.u32 %v1684, 2147483648
        %v1686 = vsel %vm1603, %v1685, %v1684
        %v1687 = vsub.s32 4, %v1663
        %v1688 = vsel %vm1603, %v1687, %v1663
        %v1689 = vsel %vm1602, %v453, %v1686
        %v1690 = vsel %vm1602, 0, %v1688
        %v1691 = vcosq.f32.pop %v1689
        %v1692 = vsinq.f32.pop %v1689
        %vm1693 = vweird.f32 %v453
        %v1694 = vadd.s32 %v1690, 3
        %v1695 = vand.u32 %v1694, 3
        %vm1696 = vcmp.lt.s32.totalorder %v1695, 2
        %vm1697 = vcmp.eq.s32.totalorder %v1695, 0
        %v1698 = vxor.u32 %v1692, 2147483648
        %v1699 = vsel %vm1697, %v1691, %v1698
        %vm1700 = vcmp.eq.s32.totalorder %v1695, 2
        %v1701 = vxor.u32 %v1691, 2147483648
        %v1702 = vsel %vm1700, %v1701, %v1692
        %v1703 = vsel %vm1696, %v1699, %v1702
        %v1704 = vsel %vm1693, nan, %v1703
        %v1705 = vand.u32 2147483647, %v458
        %vm1706 = vcmp.le.f32.partialorder %v1705, 0.7853982
        %vm1707 = vcmp.lt.s32.totalorder %v458, 0
        %v1708 = vand.u32 %v458, 2139095040
        %v1709 = vshrl.u32 %v1708, 23
        %v1710 = vsub.s32 %v1709, 127
        %v1711 = vand.u32 2147483647, %v458
        %v1712 = vand.u32 %v1711, 8388607
        %v1713 = vor.u32 %v1712, 8388608
        %v1714 = vsub.s32 0, %v1713
        %v1715 = vadd.s32 %v1710, 1
        %vm1716 = vcmp.gt.s32.totalorder %v1715, 0
        %v1717 = vsel %vm1716, %v1715, 0
        %v1718 = vshrl.u32 %v1717, 5
        %v1719 = vand.u32 %v1717, 31
        %v1720 = vsub.s32 32, %v1719
        %v1721 = vshrl.u32 683565275, %v1720
        %v1722 = vshll.u32 683565275, %v1719
        %v1723 = vshrl.u32 2475754826, %v1720
        %v1724 = vor.u32 %v1722, %v1723
        %v1725 = vshll.u32 2475754826, %v1719
        %v1726 = vshrl.u32 2131351028, %v1720
        %v1727 = vor.u32 %v1725, %v1726
        %v1728 = vshll.u32 2131351028, %v1719
        %v1729 = vshrl.u32 2102212464, %v1720
        %v1730 = vor.u32 %v1728, %v1729
        %v1731 = vshll.u32 2102212464, %v1719
        %v1732 = vshrl.u32 920167782, %v1720
        %v1733 = vor.u32 %v1731, %v1732
        %v1734 = vshll.u32 920167782, %v1719
        %v1735 = vshrl.u32 1326507024, %v1720
        %v1736 = vor.u32 %v1734, %v1735
        %vm1737 = vcmp.lt.s32.totalorder %v1718, 1
        %vm1738 = vcmp.lt.s32.totalorder %v1718, 2
        %vm1739 = vcmp.lt.s32.totalorder %v1718, 3
        %vm1740 = vcmp.lt.s32.totalorder %v1718, 4
        %v1741 = vsel %vm1737, %v1721, %v1724
        %v1742 = vsel %vm1740, %v1730, 2102212464
        %v1743 = vsel %vm1739, %v1727, %v1742
        %v1744 = vsel %vm1738, %v1741, %v1743
        %v1745 = vsel %vm1737, %v1724, %v1727
        %v1746 = vsel %vm1740, %v1733, 920167782
        %v1747 = vsel %vm1739, %v1730, %v1746
        %v1748 = vsel %vm1738, %v1745, %v1747
        %v1749 = vsel %vm1737, %v1727, %v1730
        %v1750 = vsel %vm1740, %v1736, 1326507024
        %v1751 = vsel %vm1739, %v1733, %v1750
        %v1752 = vsel %vm1738, %v1749, %v1751
        %v1753 = vshll.u32 %v1713, 8
        %v1754 = vmul.u32.u64.compose %v1753, %v1752
        %v1755 = vextract.low.u32 %v1754
        %v1756 = vextract.high.u32 %v1754
        %v1757 = vmul.u32.u64.compose %v1753, %v1748
        %v1758 = vextract.low.u32 %v1757
        %v1759 = vextract.high.u32 %v1757
        %v1760 = vmul.u32 %v1753, %v1744
        %v1761 = vadd.s32 %v1756, %v1758
        %vm1762 = vc.u32 %v1756, %v1758
        %v1763 = vadd.s32 %v1759, 1
        %v1764 = vsel %vm1762, %v1763, %v1759
        %v1765 = vadd.s32 %v1760, %v1764
        %v1766 = vadd.s32 %v1765, 536870912
        %v1767 = vshrl.u32 %v1766, 30
        %v1768 = vshll.u32 %v1767, 30
        %v1769 = vsub.s32 %v1765, %v1768
        %vm1770 = vcmp.lt.s32.totalorder %v1769, 0
        %v1771 = vsub.s32 0, %v1769
        %v1772 = vsel %vm1770, %v1771, %v1769
        %v1773 = vclz %v1772
        %v1774 = vsub.s32 %v1773, 2
        %vm1775 = vcmp.gt.s32.totalorder 0, %v1774
        %v1776 = vsel %vm1775, 0, %v1774
        %v1777 = vsub.s32 32, %v1776
        %v1778 = vshll.u32 %v1769, %v1776
        %v1779 = vshrl.u32 %v1761, %v1777
        %v1780 = vor.u32 %v1778, %v1779
        %v1781 = vsub.s32 4294967266, %v1776
        %v1782 = vadd.s32 %v1781, 127
        %v1783 = vshll.u32 %v1782, 23
        %v1784 = vor.u32 4788187, %v1783
        %v1785 = vand.u32 2147483647, %v1784
        %v1787 = vcvt.s32.f32 %v1780
        %v1788 = vmul.f32 %v1787, %v1785
        %v1789 = vxor.u32 %v1788, 2147483648
        %v1790 = vsel %vm1707, %v1789, %v1788
        %v1791 = vsub.s32 4, %v1767
        %v1792 = vsel %vm1707, %v1791, %v1767
        %v1793 = vsel %vm1706, %v458, %v1790
        %v1794 = vsel %vm1706, 0, %v1792
        %v1795 = vcosq.f32.pop %v1793
        %v1796 = vsinq.f32.pop %v1793
        %vm1797 = vweird.f32 %v458
        %v1798 = vadd.s32 %v1794, 3
        %v1799 = vand.u32 %v1798, 3
        %vm1800 = vcmp.lt.s32.totalorder %v1799, 2
        %vm1801 = vcmp.eq.s32.totalorder %v1799, 0
        %v1802 = vxor.u32 %v1796, 2147483648
        %v1803 = vsel %vm1801, %v1795, %v1802
        %vm1804 = vcmp.eq.s32.totalorder %v1799, 2
        %v1805 = vxor.u32 %v1795, 2147483648
        %v1806 = vsel %vm1804, %v1805, %v1796
        %v1807 = vsel %vm1800, %v1803, %v1806
        %v1808 = vsel %vm1797, nan, %v1807
        %v1809 = vand.u32 2147483647, %v463
        %vm1810 = vcmp.le.f32.partialorder %v1809, 0.7853982
        %vm1811 = vcmp.lt.s32.totalorder %v463, 0
        %v1812 = vand.u32 %v463, 2139095040
        %v1813 = vshrl.u32 %v1812, 23
        %v1814 = vsub.s32 %v1813, 127
        %v1815 = vand.u32 2147483647, %v463
        %v1816 = vand.u32 %v1815, 8388607
        %v1817 = vor.u32 %v1816, 8388608
        %v1818 = vsub.s32 0, %v1817
        %v1819 = vadd.s32 %v1814, 1
        %vm1820 = vcmp.gt.s32.totalorder %v1819, 0
        %v1821 = vsel %vm1820, %v1819, 0
        %v1822 = vshrl.u32 %v1821, 5
        %v1823 = vand.u32 %v1821, 31
        %v1824 = vsub.s32 32, %v1823
        %v1825 = vshrl.u32 683565275, %v1824
        %v1826 = vshll.u32 683565275, %v1823
        %v1827 = vshrl.u32 2475754826, %v1824
        %v1828 = vor.u32 %v1826, %v1827
        %v1829 = vshll.u32 2475754826, %v1823
        %v1830 = vshrl.u32 2131351028, %v1824
        %v1831 = vor.u32 %v1829, %v1830
        %v1832 = vshll.u32 2131351028, %v1823
        %v1833 = vshrl.u32 2102212464, %v1824
        %v1834 = vor.u32 %v1832, %v1833
        %v1835 = vshll.u32 2102212464, %v1823
        %v1836 = vshrl.u32 920167782, %v1824
        %v1837 = vor.u32 %v1835, %v1836
        %v1838 = vshll.u32 920167782, %v1823
        %v1839 = vshrl.u32 1326507024, %v1824
        %v1840 = vor.u32 %v1838, %v1839
        %vm1841 = vcmp.lt.s32.totalorder %v1822, 1
        %vm1842 = vcmp.lt.s32.totalorder %v1822, 2
        %vm1843 = vcmp.lt.s32.totalorder %v1822, 3
        %vm1844 = vcmp.lt.s32.totalorder %v1822, 4
        %v1845 = vsel %vm1841, %v1825, %v1828
        %v1846 = vsel %vm1844, %v1834, 2102212464
        %v1847 = vsel %vm1843, %v1831, %v1846
        %v1848 = vsel %vm1842, %v1845, %v1847
        %v1849 = vsel %vm1841, %v1828, %v1831
        %v1850 = vsel %vm1844, %v1837, 920167782
        %v1851 = vsel %vm1843, %v1834, %v1850
        %v1852 = vsel %vm1842, %v1849, %v1851
        %v1853 = vsel %vm1841, %v1831, %v1834
        %v1854 = vsel %vm1844, %v1840, 1326507024
        %v1855 = vsel %vm1843, %v1837, %v1854
        %v1856 = vsel %vm1842, %v1853, %v1855
        %v1857 = vshll.u32 %v1817, 8
        %v1858 = vmul.u32.u64.compose %v1857, %v1856
        %v1859 = vextract.low.u32 %v1858
        %v1860 = vextract.high.u32 %v1858
        %v1861 = vmul.u32.u64.compose %v1857, %v1852
        %v1862 = vextract.low.u32 %v1861
        %v1863 = vextract.high.u32 %v1861
        %v1864 = vmul.u32 %v1857, %v1848
        %v1865 = vadd.s32 %v1860, %v1862
        %vm1866 = vc.u32 %v1860, %v1862
        %v1867 = vadd.s32 %v1863, 1
        %v1868 = vsel %vm1866, %v1867, %v1863
        %v1869 = vadd.s32 %v1864, %v1868
        %v1870 = vadd.s32 %v1869, 536870912
        %v1871 = vshrl.u32 %v1870, 30
        %v1872 = vshll.u32 %v1871, 30
        %v1873 = vsub.s32 %v1869, %v1872
        %vm1874 = vcmp.lt.s32.totalorder %v1873, 0
        %v1875 = vsub.s32 0, %v1873
        %v1876 = vsel %vm1874, %v1875, %v1873
        %v1877 = vclz %v1876
        %v1878 = vsub.s32 %v1877, 2
        %vm1879 = vcmp.gt.s32.totalorder 0, %v1878
        %v1880 = vsel %vm1879, 0, %v1878
        %v1881 = vsub.s32 32, %v1880
        %v1882 = vshll.u32 %v1873, %v1880
        %v1883 = vshrl.u32 %v1865, %v1881
        %v1884 = vor.u32 %v1882, %v1883
        %v1885 = vsub.s32 4294967266, %v1880
        %v1886 = vadd.s32 %v1885, 127
        %v1887 = vshll.u32 %v1886, 23
        %v1888 = vor.u32 4788187, %v1887
        %v1889 = vand.u32 2147483647, %v1888
        %v1891 = vcvt.s32.f32 %v1884
        %v1892 = vmul.f32 %v1891, %v1889
        %v1893 = vxor.u32 %v1892, 2147483648
        %v1894 = vsel %vm1811, %v1893, %v1892
        %v1895 = vsub.s32 4, %v1871
        %v1896 = vsel %vm1811, %v1895, %v1871
        %v1897 = vsel %vm1810, %v463, %v1894
        %v1898 = vsel %vm1810, 0, %v1896
        %v1899 = vcosq.f32.pop %v1897
        %v1900 = vsinq.f32.pop %v1897
        %vm1901 = vweird.f32 %v463
        %v1902 = vadd.s32 %v1898, 3
        %v1903 = vand.u32 %v1902, 3
        %vm1904 = vcmp.lt.s32.totalorder %v1903, 2
        %vm1905 = vcmp.eq.s32.totalorder %v1903, 0
        %v1906 = vxor.u32 %v1900, 2147483648
        %v1907 = vsel %vm1905, %v1899, %v1906
        %vm1908 = vcmp.eq.s32.totalorder %v1903, 2
        %v1909 = vxor.u32 %v1899, 2147483648
        %v1910 = vsel %vm1908, %v1909, %v1900
        %v1911 = vsel %vm1904, %v1907, %v1910
        %v1912 = vsel %vm1901, nan, %v1911
        %v1913 = vand.u32 2147483647, %v468
        %vm1914 = vcmp.le.f32.partialorder %v1913, 0.7853982
        %vm1915 = vcmp.lt.s32.totalorder %v468, 0
        %v1916 = vand.u32 %v468, 2139095040
        %v1917 = vshrl.u32 %v1916, 23
        %v1918 = vsub.s32 %v1917, 127
        %v1919 = vand.u32 2147483647, %v468
        %v1920 = vand.u32 %v1919, 8388607
        %v1921 = vor.u32 %v1920, 8388608
        %v1922 = vsub.s32 0, %v1921
        %v1923 = vadd.s32 %v1918, 1
        %vm1924 = vcmp.gt.s32.totalorder %v1923, 0
        %v1925 = vsel %vm1924, %v1923, 0
        %v1926 = vshrl.u32 %v1925, 5
        %v1927 = vand.u32 %v1925, 31
        %v1928 = vsub.s32 32, %v1927
        %v1929 = vshrl.u32 683565275, %v1928
        %v1930 = vshll.u32 683565275, %v1927
        %v1931 = vshrl.u32 2475754826, %v1928
        %v1932 = vor.u32 %v1930, %v1931
        %v1933 = vshll.u32 2475754826, %v1927
        %v1934 = vshrl.u32 2131351028, %v1928
        %v1935 = vor.u32 %v1933, %v1934
        %v1936 = vshll.u32 2131351028, %v1927
        %v1937 = vshrl.u32 2102212464, %v1928
        %v1938 = vor.u32 %v1936, %v1937
        %v1939 = vshll.u32 2102212464, %v1927
        %v1940 = vshrl.u32 920167782, %v1928
        %v1941 = vor.u32 %v1939, %v1940
        %v1942 = vshll.u32 920167782, %v1927
        %v1943 = vshrl.u32 1326507024, %v1928
        %v1944 = vor.u32 %v1942, %v1943
        %vm1945 = vcmp.lt.s32.totalorder %v1926, 1
        %vm1946 = vcmp.lt.s32.totalorder %v1926, 2
        %vm1947 = vcmp.lt.s32.totalorder %v1926, 3
        %vm1948 = vcmp.lt.s32.totalorder %v1926, 4
        %v1949 = vsel %vm1945, %v1929, %v1932
        %v1950 = vsel %vm1948, %v1938, 2102212464
        %v1951 = vsel %vm1947, %v1935, %v1950
        %v1952 = vsel %vm1946, %v1949, %v1951
        %v1953 = vsel %vm1945, %v1932, %v1935
        %v1954 = vsel %vm1948, %v1941, 920167782
        %v1955 = vsel %vm1947, %v1938, %v1954
        %v1956 = vsel %vm1946, %v1953, %v1955
        %v1957 = vsel %vm1945, %v1935, %v1938
        %v1958 = vsel %vm1948, %v1944, 1326507024
        %v1959 = vsel %vm1947, %v1941, %v1958
        %v1960 = vsel %vm1946, %v1957, %v1959
        %v1961 = vshll.u32 %v1921, 8
        %v1962 = vmul.u32.u64.compose %v1961, %v1960
        %v1963 = vextract.low.u32 %v1962
        %v1964 = vextract.high.u32 %v1962
        %v1965 = vmul.u32.u64.compose %v1961, %v1956
        %v1966 = vextract.low.u32 %v1965
        %v1967 = vextract.high.u32 %v1965
        %v1968 = vmul.u32 %v1961, %v1952
        %v1969 = vadd.s32 %v1964, %v1966
        %vm1970 = vc.u32 %v1964, %v1966
        %v1971 = vadd.s32 %v1967, 1
        %v1972 = vsel %vm1970, %v1971, %v1967
        %v1973 = vadd.s32 %v1968, %v1972
        %v1974 = vadd.s32 %v1973, 536870912
        %v1975 = vshrl.u32 %v1974, 30
        %v1976 = vshll.u32 %v1975, 30
        %v1977 = vsub.s32 %v1973, %v1976
        %vm1978 = vcmp.lt.s32.totalorder %v1977, 0
        %v1979 = vsub.s32 0, %v1977
        %v1980 = vsel %vm1978, %v1979, %v1977
        %v1981 = vclz %v1980
        %v1982 = vsub.s32 %v1981, 2
        %vm1983 = vcmp.gt.s32.totalorder 0, %v1982
        %v1984 = vsel %vm1983, 0, %v1982
        %v1985 = vsub.s32 32, %v1984
        %v1986 = vshll.u32 %v1977, %v1984
        %v1987 = vshrl.u32 %v1969, %v1985
        %v1988 = vor.u32 %v1986, %v1987
        %v1989 = vsub.s32 4294967266, %v1984
        %v1990 = vadd.s32 %v1989, 127
        %v1991 = vshll.u32 %v1990, 23
        %v1992 = vor.u32 4788187, %v1991
        %v1993 = vand.u32 2147483647, %v1992
        %v1995 = vcvt.s32.f32 %v1988
        %v1996 = vmul.f32 %v1995, %v1993
        %v1997 = vxor.u32 %v1996, 2147483648
        %v1998 = vsel %vm1915, %v1997, %v1996
        %v1999 = vsub.s32 4, %v1975
        %v2000 = vsel %vm1915, %v1999, %v1975
        %v2001 = vsel %vm1914, %v468, %v1998
        %v2002 = vsel %vm1914, 0, %v2000
        %v2003 = vcosq.f32.pop %v2001
        %v2004 = vsinq.f32.pop %v2001
        %vm2005 = vweird.f32 %v468
        %v2006 = vadd.s32 %v2002, 3
        %v2007 = vand.u32 %v2006, 3
        %vm2008 = vcmp.lt.s32.totalorder %v2007, 2
        %vm2009 = vcmp.eq.s32.totalorder %v2007, 0
        %v2010 = vxor.u32 %v2004, 2147483648
        %v2011 = vsel %vm2009, %v2003, %v2010
        %vm2012 = vcmp.eq.s32.totalorder %v2007, 2
        %v2013 = vxor.u32 %v2003, 2147483648
        %v2014 = vsel %vm2012, %v2013, %v2004
        %v2015 = vsel %vm2008, %v2011, %v2014
        %v2016 = vsel %vm2005, nan, %v2015
        %v2017 = vand.u32 2147483647, %v473
        %vm2018 = vcmp.le.f32.partialorder %v2017, 0.7853982
        %vm2019 = vcmp.lt.s32.totalorder %v473, 0
        %v2020 = vand.u32 %v473, 2139095040
        %v2021 = vshrl.u32 %v2020, 23
        %v2022 = vsub.s32 %v2021, 127
        %v2023 = vand.u32 2147483647, %v473
        %v2024 = vand.u32 %v2023, 8388607
        %v2025 = vor.u32 %v2024, 8388608
        %v2026 = vsub.s32 0, %v2025
        %v2027 = vadd.s32 %v2022, 1
        %vm2028 = vcmp.gt.s32.totalorder %v2027, 0
        %v2029 = vsel %vm2028, %v2027, 0
        %v2030 = vshrl.u32 %v2029, 5
        %v2031 = vand.u32 %v2029, 31
        %v2032 = vsub.s32 32, %v2031
        %v2033 = vshrl.u32 683565275, %v2032
        %v2034 = vshll.u32 683565275, %v2031
        %v2035 = vshrl.u32 2475754826, %v2032
        %v2036 = vor.u32 %v2034, %v2035
        %v2037 = vshll.u32 2475754826, %v2031
        %v2038 = vshrl.u32 2131351028, %v2032
        %v2039 = vor.u32 %v2037, %v2038
        %v2040 = vshll.u32 2131351028, %v2031
        %v2041 = vshrl.u32 2102212464, %v2032
        %v2042 = vor.u32 %v2040, %v2041
        %v2043 = vshll.u32 2102212464, %v2031
        %v2044 = vshrl.u32 920167782, %v2032
        %v2045 = vor.u32 %v2043, %v2044
        %v2046 = vshll.u32 920167782, %v2031
        %v2047 = vshrl.u32 1326507024, %v2032
        %v2048 = vor.u32 %v2046, %v2047
        %vm2049 = vcmp.lt.s32.totalorder %v2030, 1
        %vm2050 = vcmp.lt.s32.totalorder %v2030, 2
        %vm2051 = vcmp.lt.s32.totalorder %v2030, 3
        %vm2052 = vcmp.lt.s32.totalorder %v2030, 4
        %v2053 = vsel %vm2049, %v2033, %v2036
        %v2054 = vsel %vm2052, %v2042, 2102212464
        %v2055 = vsel %vm2051, %v2039, %v2054
        %v2056 = vsel %vm2050, %v2053, %v2055
        %v2057 = vsel %vm2049, %v2036, %v2039
        %v2058 = vsel %vm2052, %v2045, 920167782
        %v2059 = vsel %vm2051, %v2042, %v2058
        %v2060 = vsel %vm2050, %v2057, %v2059
        %v2061 = vsel %vm2049, %v2039, %v2042
        %v2062 = vsel %vm2052, %v2048, 1326507024
        %v2063 = vsel %vm2051, %v2045, %v2062
        %v2064 = vsel %vm2050, %v2061, %v2063
        %v2065 = vshll.u32 %v2025, 8
        %v2066 = vmul.u32.u64.compose %v2065, %v2064
        %v2067 = vextract.low.u32 %v2066
        %v2068 = vextract.high.u32 %v2066
        %v2069 = vmul.u32.u64.compose %v2065, %v2060
        %v2070 = vextract.low.u32 %v2069
        %v2071 = vextract.high.u32 %v2069
        %v2072 = vmul.u32 %v2065, %v2056
        %v2073 = vadd.s32 %v2068, %v2070
        %vm2074 = vc.u32 %v2068, %v2070
        %v2075 = vadd.s32 %v2071, 1
        %v2076 = vsel %vm2074, %v2075, %v2071
        %v2077 = vadd.s32 %v2072, %v2076
        %v2078 = vadd.s32 %v2077, 536870912
        %v2079 = vshrl.u32 %v2078, 30
        %v2080 = vshll.u32 %v2079, 30
        %v2081 = vsub.s32 %v2077, %v2080
        %vm2082 = vcmp.lt.s32.totalorder %v2081, 0
        %v2083 = vsub.s32 0, %v2081
        %v2084 = vsel %vm2082, %v2083, %v2081
        %v2085 = vclz %v2084
        %v2086 = vsub.s32 %v2085, 2
        %vm2087 = vcmp.gt.s32.totalorder 0, %v2086
        %v2088 = vsel %vm2087, 0, %v2086
        %v2089 = vsub.s32 32, %v2088
        %v2090 = vshll.u32 %v2081, %v2088
        %v2091 = vshrl.u32 %v2073, %v2089
        %v2092 = vor.u32 %v2090, %v2091
        %v2093 = vsub.s32 4294967266, %v2088
        %v2094 = vadd.s32 %v2093, 127
        %v2095 = vshll.u32 %v2094, 23
        %v2096 = vor.u32 4788187, %v2095
        %v2097 = vand.u32 2147483647, %v2096
        %v2099 = vcvt.s32.f32 %v2092
        %v2100 = vmul.f32 %v2099, %v2097
        %v2101 = vxor.u32 %v2100, 2147483648
        %v2102 = vsel %vm2019, %v2101, %v2100
        %v2103 = vsub.s32 4, %v2079
        %v2104 = vsel %vm2019, %v2103, %v2079
        %v2105 = vsel %vm2018, %v473, %v2102
        %v2106 = vsel %vm2018, 0, %v2104
        %v2107 = vcosq.f32.pop %v2105
        %v2108 = vsinq.f32.pop %v2105
        %vm2109 = vweird.f32 %v473
        %v2110 = vadd.s32 %v2106, 3
        %v2111 = vand.u32 %v2110, 3
        %vm2112 = vcmp.lt.s32.totalorder %v2111, 2
        %vm2113 = vcmp.eq.s32.totalorder %v2111, 0
        %v2114 = vxor.u32 %v2108, 2147483648
        %v2115 = vsel %vm2113, %v2107, %v2114
        %vm2116 = vcmp.eq.s32.totalorder %v2111, 2
        %v2117 = vxor.u32 %v2107, 2147483648
        %v2118 = vsel %vm2116, %v2117, %v2108
        %v2119 = vsel %vm2112, %v2115, %v2118
        %v2120 = vsel %vm2109, nan, %v2119
        %v2121 = vand.u32 2147483647, %v478
        %vm2122 = vcmp.le.f32.partialorder %v2121, 0.7853982
        %vm2123 = vcmp.lt.s32.totalorder %v478, 0
        %v2124 = vand.u32 %v478, 2139095040
        %v2125 = vshrl.u32 %v2124, 23
        %v2126 = vsub.s32 %v2125, 127
        %v2127 = vand.u32 2147483647, %v478
        %v2128 = vand.u32 %v2127, 8388607
        %v2129 = vor.u32 %v2128, 8388608
        %v2130 = vsub.s32 0, %v2129
        %v2131 = vadd.s32 %v2126, 1
        %vm2132 = vcmp.gt.s32.totalorder %v2131, 0
        %v2133 = vsel %vm2132, %v2131, 0
        %v2134 = vshrl.u32 %v2133, 5
        %v2135 = vand.u32 %v2133, 31
        %v2136 = vsub.s32 32, %v2135
        %v2137 = vshrl.u32 683565275, %v2136
        %v2138 = vshll.u32 683565275, %v2135
        %v2139 = vshrl.u32 2475754826, %v2136
        %v2140 = vor.u32 %v2138, %v2139
        %v2141 = vshll.u32 2475754826, %v2135
        %v2142 = vshrl.u32 2131351028, %v2136
        %v2143 = vor.u32 %v2141, %v2142
        %v2144 = vshll.u32 2131351028, %v2135
        %v2145 = vshrl.u32 2102212464, %v2136
        %v2146 = vor.u32 %v2144, %v2145
        %v2147 = vshll.u32 2102212464, %v2135
        %v2148 = vshrl.u32 920167782, %v2136
        %v2149 = vor.u32 %v2147, %v2148
        %v2150 = vshll.u32 920167782, %v2135
        %v2151 = vshrl.u32 1326507024, %v2136
        %v2152 = vor.u32 %v2150, %v2151
        %vm2153 = vcmp.lt.s32.totalorder %v2134, 1
        %vm2154 = vcmp.lt.s32.totalorder %v2134, 2
        %vm2155 = vcmp.lt.s32.totalorder %v2134, 3
        %vm2156 = vcmp.lt.s32.totalorder %v2134, 4
        %v2157 = vsel %vm2153, %v2137, %v2140
        %v2158 = vsel %vm2156, %v2146, 2102212464
        %v2159 = vsel %vm2155, %v2143, %v2158
        %v2160 = vsel %vm2154, %v2157, %v2159
        %v2161 = vsel %vm2153, %v2140, %v2143
        %v2162 = vsel %vm2156, %v2149, 920167782
        %v2163 = vsel %vm2155, %v2146, %v2162
        %v2164 = vsel %vm2154, %v2161, %v2163
        %v2165 = vsel %vm2153, %v2143, %v2146
        %v2166 = vsel %vm2156, %v2152, 1326507024
        %v2167 = vsel %vm2155, %v2149, %v2166
        %v2168 = vsel %vm2154, %v2165, %v2167
        %v2169 = vshll.u32 %v2129, 8
        %v2170 = vmul.u32.u64.compose %v2169, %v2168
        %v2171 = vextract.low.u32 %v2170
        %v2172 = vextract.high.u32 %v2170
        %v2173 = vmul.u32.u64.compose %v2169, %v2164
        %v2174 = vextract.low.u32 %v2173
        %v2175 = vextract.high.u32 %v2173
        %v2176 = vmul.u32 %v2169, %v2160
        %v2177 = vadd.s32 %v2172, %v2174
        %vm2178 = vc.u32 %v2172, %v2174
        %v2179 = vadd.s32 %v2175, 1
        %v2180 = vsel %vm2178, %v2179, %v2175
        %v2181 = vadd.s32 %v2176, %v2180
        %v2182 = vadd.s32 %v2181, 536870912
        %v2183 = vshrl.u32 %v2182, 30
        %v2184 = vshll.u32 %v2183, 30
        %v2185 = vsub.s32 %v2181, %v2184
        %vm2186 = vcmp.lt.s32.totalorder %v2185, 0
        %v2187 = vsub.s32 0, %v2185
        %v2188 = vsel %vm2186, %v2187, %v2185
        %v2189 = vclz %v2188
        %v2190 = vsub.s32 %v2189, 2
        %vm2191 = vcmp.gt.s32.totalorder 0, %v2190
        %v2192 = vsel %vm2191, 0, %v2190
        %v2193 = vsub.s32 32, %v2192
        %v2194 = vshll.u32 %v2185, %v2192
        %v2195 = vshrl.u32 %v2177, %v2193
        %v2196 = vor.u32 %v2194, %v2195
        %v2197 = vsub.s32 4294967266, %v2192
        %v2198 = vadd.s32 %v2197, 127
        %v2199 = vshll.u32 %v2198, 23
        %v2200 = vor.u32 4788187, %v2199
        %v2201 = vand.u32 2147483647, %v2200
        %v2203 = vcvt.s32.f32 %v2196
        %v2204 = vmul.f32 %v2203, %v2201
        %v2205 = vxor.u32 %v2204, 2147483648
        %v2206 = vsel %vm2123, %v2205, %v2204
        %v2207 = vsub.s32 4, %v2183
        %v2208 = vsel %vm2123, %v2207, %v2183
        %v2209 = vsel %vm2122, %v478, %v2206
        %v2210 = vsel %vm2122, 0, %v2208
        %v2211 = vcosq.f32.pop %v2209
        %v2212 = vsinq.f32.pop %v2209
        %vm2213 = vweird.f32 %v478
        %v2214 = vadd.s32 %v2210, 3
        %v2215 = vand.u32 %v2214, 3
        %vm2216 = vcmp.lt.s32.totalorder %v2215, 2
        %vm2217 = vcmp.eq.s32.totalorder %v2215, 0
        %v2218 = vxor.u32 %v2212, 2147483648
        %v2219 = vsel %vm2217, %v2211, %v2218
        %vm2220 = vcmp.eq.s32.totalorder %v2215, 2
        %v2221 = vxor.u32 %v2211, 2147483648
        %v2222 = vsel %vm2220, %v2221, %v2212
        %v2223 = vsel %vm2216, %v2219, %v2222
        %v2224 = vsel %vm2213, nan, %v2223
        %v2225 = vand.u32 2147483647, %v483
        %vm2226 = vcmp.le.f32.partialorder %v2225, 0.7853982
        %vm2227 = vcmp.lt.s32.totalorder %v483, 0
        %v2228 = vand.u32 %v483, 2139095040
        %v2229 = vshrl.u32 %v2228, 23
        %v2230 = vsub.s32 %v2229, 127
        %v2231 = vand.u32 2147483647, %v483
        %v2232 = vand.u32 %v2231, 8388607
        %v2233 = vor.u32 %v2232, 8388608
        %v2234 = vsub.s32 0, %v2233
        %v2235 = vadd.s32 %v2230, 1
        %vm2236 = vcmp.gt.s32.totalorder %v2235, 0
        %v2237 = vsel %vm2236, %v2235, 0
        %v2238 = vshrl.u32 %v2237, 5
        %v2239 = vand.u32 %v2237, 31
        %v2240 = vsub.s32 32, %v2239
        %v2241 = vshrl.u32 683565275, %v2240
        %v2242 = vshll.u32 683565275, %v2239
        %v2243 = vshrl.u32 2475754826, %v2240
        %v2244 = vor.u32 %v2242, %v2243
        %v2245 = vshll.u32 2475754826, %v2239
        %v2246 = vshrl.u32 2131351028, %v2240
        %v2247 = vor.u32 %v2245, %v2246
        %v2248 = vshll.u32 2131351028, %v2239
        %v2249 = vshrl.u32 2102212464, %v2240
        %v2250 = vor.u32 %v2248, %v2249
        %v2251 = vshll.u32 2102212464, %v2239
        %v2252 = vshrl.u32 920167782, %v2240
        %v2253 = vor.u32 %v2251, %v2252
        %v2254 = vshll.u32 920167782, %v2239
        %v2255 = vshrl.u32 1326507024, %v2240
        %v2256 = vor.u32 %v2254, %v2255
        %vm2257 = vcmp.lt.s32.totalorder %v2238, 1
        %vm2258 = vcmp.lt.s32.totalorder %v2238, 2
        %vm2259 = vcmp.lt.s32.totalorder %v2238, 3
        %vm2260 = vcmp.lt.s32.totalorder %v2238, 4
        %v2261 = vsel %vm2257, %v2241, %v2244
        %v2262 = vsel %vm2260, %v2250, 2102212464
        %v2263 = vsel %vm2259, %v2247, %v2262
        %v2264 = vsel %vm2258, %v2261, %v2263
        %v2265 = vsel %vm2257, %v2244, %v2247
        %v2266 = vsel %vm2260, %v2253, 920167782
        %v2267 = vsel %vm2259, %v2250, %v2266
        %v2268 = vsel %vm2258, %v2265, %v2267
        %v2269 = vsel %vm2257, %v2247, %v2250
        %v2270 = vsel %vm2260, %v2256, 1326507024
        %v2271 = vsel %vm2259, %v2253, %v2270
        %v2272 = vsel %vm2258, %v2269, %v2271
        %v2273 = vshll.u32 %v2233, 8
        %v2274 = vmul.u32.u64.compose %v2273, %v2272
        %v2275 = vextract.low.u32 %v2274
        %v2276 = vextract.high.u32 %v2274
        %v2277 = vmul.u32.u64.compose %v2273, %v2268
        %v2278 = vextract.low.u32 %v2277
        %v2279 = vextract.high.u32 %v2277
        %v2280 = vmul.u32 %v2273, %v2264
        %v2281 = vadd.s32 %v2276, %v2278
        %vm2282 = vc.u32 %v2276, %v2278
        %v2283 = vadd.s32 %v2279, 1
        %v2284 = vsel %vm2282, %v2283, %v2279
        %v2285 = vadd.s32 %v2280, %v2284
        %v2286 = vadd.s32 %v2285, 536870912
        %v2287 = vshrl.u32 %v2286, 30
        %v2288 = vshll.u32 %v2287, 30
        %v2289 = vsub.s32 %v2285, %v2288
        %vm2290 = vcmp.lt.s32.totalorder %v2289, 0
        %v2291 = vsub.s32 0, %v2289
        %v2292 = vsel %vm2290, %v2291, %v2289
        %v2293 = vclz %v2292
        %v2294 = vsub.s32 %v2293, 2
        %vm2295 = vcmp.gt.s32.totalorder 0, %v2294
        %v2296 = vsel %vm2295, 0, %v2294
        %v2297 = vsub.s32 32, %v2296
        %v2298 = vshll.u32 %v2289, %v2296
        %v2299 = vshrl.u32 %v2281, %v2297
        %v2300 = vor.u32 %v2298, %v2299
        %v2301 = vsub.s32 4294967266, %v2296
        %v2302 = vadd.s32 %v2301, 127
        %v2303 = vshll.u32 %v2302, 23
        %v2304 = vor.u32 4788187, %v2303
        %v2305 = vand.u32 2147483647, %v2304
        %v2307 = vcvt.s32.f32 %v2300
        %v2308 = vmul.f32 %v2307, %v2305
        %v2309 = vxor.u32 %v2308, 2147483648
        %v2310 = vsel %vm2227, %v2309, %v2308
        %v2311 = vsub.s32 4, %v2287
        %v2312 = vsel %vm2227, %v2311, %v2287
        %v2313 = vsel %vm2226, %v483, %v2310
        %v2314 = vsel %vm2226, 0, %v2312
        %v2315 = vcosq.f32.pop %v2313
        %v2316 = vsinq.f32.pop %v2313
        %vm2317 = vweird.f32 %v483
        %v2318 = vadd.s32 %v2314, 3
        %v2319 = vand.u32 %v2318, 3
        %vm2320 = vcmp.lt.s32.totalorder %v2319, 2
        %vm2321 = vcmp.eq.s32.totalorder %v2319, 0
        %v2322 = vxor.u32 %v2316, 2147483648
        %v2323 = vsel %vm2321, %v2315, %v2322
        %vm2324 = vcmp.eq.s32.totalorder %v2319, 2
        %v2325 = vxor.u32 %v2315, 2147483648
        %v2326 = vsel %vm2324, %v2325, %v2316
        %v2327 = vsel %vm2320, %v2323, %v2326
        %v2328 = vsel %vm2317, nan, %v2327
        %v2329 = vand.u32 2147483647, %v488
        %vm2330 = vcmp.le.f32.partialorder %v2329, 0.7853982
        %vm2331 = vcmp.lt.s32.totalorder %v488, 0
        %v2332 = vand.u32 %v488, 2139095040
        %v2333 = vshrl.u32 %v2332, 23
        %v2334 = vsub.s32 %v2333, 127
        %v2335 = vand.u32 2147483647, %v488
        %v2336 = vand.u32 %v2335, 8388607
        %v2337 = vor.u32 %v2336, 8388608
        %v2338 = vsub.s32 0, %v2337
        %v2339 = vadd.s32 %v2334, 1
        %vm2340 = vcmp.gt.s32.totalorder %v2339, 0
        %v2341 = vsel %vm2340, %v2339, 0
        %v2342 = vshrl.u32 %v2341, 5
        %v2343 = vand.u32 %v2341, 31
        %v2344 = vsub.s32 32, %v2343
        %v2345 = vshrl.u32 683565275, %v2344
        %v2346 = vshll.u32 683565275, %v2343
        %v2347 = vshrl.u32 2475754826, %v2344
        %v2348 = vor.u32 %v2346, %v2347
        %v2349 = vshll.u32 2475754826, %v2343
        %v2350 = vshrl.u32 2131351028, %v2344
        %v2351 = vor.u32 %v2349, %v2350
        %v2352 = vshll.u32 2131351028, %v2343
        %v2353 = vshrl.u32 2102212464, %v2344
        %v2354 = vor.u32 %v2352, %v2353
        %v2355 = vshll.u32 2102212464, %v2343
        %v2356 = vshrl.u32 920167782, %v2344
        %v2357 = vor.u32 %v2355, %v2356
        %v2358 = vshll.u32 920167782, %v2343
        %v2359 = vshrl.u32 1326507024, %v2344
        %v2360 = vor.u32 %v2358, %v2359
        %vm2361 = vcmp.lt.s32.totalorder %v2342, 1
        %vm2362 = vcmp.lt.s32.totalorder %v2342, 2
        %vm2363 = vcmp.lt.s32.totalorder %v2342, 3
        %vm2364 = vcmp.lt.s32.totalorder %v2342, 4
        %v2365 = vsel %vm2361, %v2345, %v2348
        %v2366 = vsel %vm2364, %v2354, 2102212464
        %v2367 = vsel %vm2363, %v2351, %v2366
        %v2368 = vsel %vm2362, %v2365, %v2367
        %v2369 = vsel %vm2361, %v2348, %v2351
        %v2370 = vsel %vm2364, %v2357, 920167782
        %v2371 = vsel %vm2363, %v2354, %v2370
        %v2372 = vsel %vm2362, %v2369, %v2371
        %v2373 = vsel %vm2361, %v2351, %v2354
        %v2374 = vsel %vm2364, %v2360, 1326507024
        %v2375 = vsel %vm2363, %v2357, %v2374
        %v2376 = vsel %vm2362, %v2373, %v2375
        %v2377 = vshll.u32 %v2337, 8
        %v2378 = vmul.u32.u64.compose %v2377, %v2376
        %v2379 = vextract.low.u32 %v2378
        %v2380 = vextract.high.u32 %v2378
        %v2381 = vmul.u32.u64.compose %v2377, %v2372
        %v2382 = vextract.low.u32 %v2381
        %v2383 = vextract.high.u32 %v2381
        %v2384 = vmul.u32 %v2377, %v2368
        %v2385 = vadd.s32 %v2380, %v2382
        %vm2386 = vc.u32 %v2380, %v2382
        %v2387 = vadd.s32 %v2383, 1
        %v2388 = vsel %vm2386, %v2387, %v2383
        %v2389 = vadd.s32 %v2384, %v2388
        %v2390 = vadd.s32 %v2389, 536870912
        %v2391 = vshrl.u32 %v2390, 30
        %v2392 = vshll.u32 %v2391, 30
        %v2393 = vsub.s32 %v2389, %v2392
        %vm2394 = vcmp.lt.s32.totalorder %v2393, 0
        %v2395 = vsub.s32 0, %v2393
        %v2396 = vsel %vm2394, %v2395, %v2393
        %v2397 = vclz %v2396
        %v2398 = vsub.s32 %v2397, 2
        %vm2399 = vcmp.gt.s32.totalorder 0, %v2398
        %v2400 = vsel %vm2399, 0, %v2398
        %v2401 = vsub.s32 32, %v2400
        %v2402 = vshll.u32 %v2393, %v2400
        %v2403 = vshrl.u32 %v2385, %v2401
        %v2404 = vor.u32 %v2402, %v2403
        %v2405 = vsub.s32 4294967266, %v2400
        %v2406 = vadd.s32 %v2405, 127
        %v2407 = vshll.u32 %v2406, 23
        %v2408 = vor.u32 4788187, %v2407
        %v2409 = vand.u32 2147483647, %v2408
        %v2411 = vcvt.s32.f32 %v2404
        %v2412 = vmul.f32 %v2411, %v2409
        %v2413 = vxor.u32 %v2412, 2147483648
        %v2414 = vsel %vm2331, %v2413, %v2412
        %v2415 = vsub.s32 4, %v2391
        %v2416 = vsel %vm2331, %v2415, %v2391
        %v2417 = vsel %vm2330, %v488, %v2414
        %v2418 = vsel %vm2330, 0, %v2416
        %v2419 = vcosq.f32.pop %v2417
        %v2420 = vsinq.f32.pop %v2417
        %vm2421 = vweird.f32 %v488
        %v2422 = vadd.s32 %v2418, 3
        %v2423 = vand.u32 %v2422, 3
        %vm2424 = vcmp.lt.s32.totalorder %v2423, 2
        %vm2425 = vcmp.eq.s32.totalorder %v2423, 0
        %v2426 = vxor.u32 %v2420, 2147483648
        %v2427 = vsel %vm2425, %v2419, %v2426
        %vm2428 = vcmp.eq.s32.totalorder %v2423, 2
        %v2429 = vxor.u32 %v2419, 2147483648
        %v2430 = vsel %vm2428, %v2429, %v2420
        %v2431 = vsel %vm2424, %v2427, %v2430
        %v2432 = vsel %vm2421, nan, %v2431
        %v2433 = vand.u32 2147483647, %v493
        %vm2434 = vcmp.le.f32.partialorder %v2433, 0.7853982
        %vm2435 = vcmp.lt.s32.totalorder %v493, 0
        %v2436 = vand.u32 %v493, 2139095040
        %v2437 = vshrl.u32 %v2436, 23
        %v2438 = vsub.s32 %v2437, 127
        %v2439 = vand.u32 2147483647, %v493
        %v2440 = vand.u32 %v2439, 8388607
        %v2441 = vor.u32 %v2440, 8388608
        %v2442 = vsub.s32 0, %v2441
        %v2443 = vadd.s32 %v2438, 1
        %vm2444 = vcmp.gt.s32.totalorder %v2443, 0
        %v2445 = vsel %vm2444, %v2443, 0
        %v2446 = vshrl.u32 %v2445, 5
        %v2447 = vand.u32 %v2445, 31
        %v2448 = vsub.s32 32, %v2447
        %v2449 = vshrl.u32 683565275, %v2448
        %v2450 = vshll.u32 683565275, %v2447
        %v2451 = vshrl.u32 2475754826, %v2448
        %v2452 = vor.u32 %v2450, %v2451
        %v2453 = vshll.u32 2475754826, %v2447
        %v2454 = vshrl.u32 2131351028, %v2448
        %v2455 = vor.u32 %v2453, %v2454
        %v2456 = vshll.u32 2131351028, %v2447
        %v2457 = vshrl.u32 2102212464, %v2448
        %v2458 = vor.u32 %v2456, %v2457
        %v2459 = vshll.u32 2102212464, %v2447
        %v2460 = vshrl.u32 920167782, %v2448
        %v2461 = vor.u32 %v2459, %v2460
        %v2462 = vshll.u32 920167782, %v2447
        %v2463 = vshrl.u32 1326507024, %v2448
        %v2464 = vor.u32 %v2462, %v2463
        %vm2465 = vcmp.lt.s32.totalorder %v2446, 1
        %vm2466 = vcmp.lt.s32.totalorder %v2446, 2
        %vm2467 = vcmp.lt.s32.totalorder %v2446, 3
        %vm2468 = vcmp.lt.s32.totalorder %v2446, 4
        %v2469 = vsel %vm2465, %v2449, %v2452
        %v2470 = vsel %vm2468, %v2458, 2102212464
        %v2471 = vsel %vm2467, %v2455, %v2470
        %v2472 = vsel %vm2466, %v2469, %v2471
        %v2473 = vsel %vm2465, %v2452, %v2455
        %v2474 = vsel %vm2468, %v2461, 920167782
        %v2475 = vsel %vm2467, %v2458, %v2474
        %v2476 = vsel %vm2466, %v2473, %v2475
        %v2477 = vsel %vm2465, %v2455, %v2458
        %v2478 = vsel %vm2468, %v2464, 1326507024
        %v2479 = vsel %vm2467, %v2461, %v2478
        %v2480 = vsel %vm2466, %v2477, %v2479
        %v2481 = vshll.u32 %v2441, 8
        %v2482 = vmul.u32.u64.compose %v2481, %v2480
        %v2483 = vextract.low.u32 %v2482
        %v2484 = vextract.high.u32 %v2482
        %v2485 = vmul.u32.u64.compose %v2481, %v2476
        %v2486 = vextract.low.u32 %v2485
        %v2487 = vextract.high.u32 %v2485
        %v2488 = vmul.u32 %v2481, %v2472
        %v2489 = vadd.s32 %v2484, %v2486
        %vm2490 = vc.u32 %v2484, %v2486
        %v2491 = vadd.s32 %v2487, 1
        %v2492 = vsel %vm2490, %v2491, %v2487
        %v2493 = vadd.s32 %v2488, %v2492
        %v2494 = vadd.s32 %v2493, 536870912
        %v2495 = vshrl.u32 %v2494, 30
        %v2496 = vshll.u32 %v2495, 30
        %v2497 = vsub.s32 %v2493, %v2496
        %vm2498 = vcmp.lt.s32.totalorder %v2497, 0
        %v2499 = vsub.s32 0, %v2497
        %v2500 = vsel %vm2498, %v2499, %v2497
        %v2501 = vclz %v2500
        %v2502 = vsub.s32 %v2501, 2
        %vm2503 = vcmp.gt.s32.totalorder 0, %v2502
        %v2504 = vsel %vm2503, 0, %v2502
        %v2505 = vsub.s32 32, %v2504
        %v2506 = vshll.u32 %v2497, %v2504
        %v2507 = vshrl.u32 %v2489, %v2505
        %v2508 = vor.u32 %v2506, %v2507
        %v2509 = vsub.s32 4294967266, %v2504
        %v2510 = vadd.s32 %v2509, 127
        %v2511 = vshll.u32 %v2510, 23
        %v2512 = vor.u32 4788187, %v2511
        %v2513 = vand.u32 2147483647, %v2512
        %v2515 = vcvt.s32.f32 %v2508
        %v2516 = vmul.f32 %v2515, %v2513
        %v2517 = vxor.u32 %v2516, 2147483648
        %v2518 = vsel %vm2435, %v2517, %v2516
        %v2519 = vsub.s32 4, %v2495
        %v2520 = vsel %vm2435, %v2519, %v2495
        %v2521 = vsel %vm2434, %v493, %v2518
        %v2522 = vsel %vm2434, 0, %v2520
        %v2523 = vcosq.f32.pop %v2521
        %v2524 = vsinq.f32.pop %v2521
        %vm2525 = vweird.f32 %v493
        %v2526 = vadd.s32 %v2522, 3
        %v2527 = vand.u32 %v2526, 3
        %vm2528 = vcmp.lt.s32.totalorder %v2527, 2
        %vm2529 = vcmp.eq.s32.totalorder %v2527, 0
        %v2530 = vxor.u32 %v2524, 2147483648
        %v2531 = vsel %vm2529, %v2523, %v2530
        %vm2532 = vcmp.eq.s32.totalorder %v2527, 2
        %v2533 = vxor.u32 %v2523, 2147483648
        %v2534 = vsel %vm2532, %v2533, %v2524
        %v2535 = vsel %vm2528, %v2531, %v2534
        %v2536 = vsel %vm2525, nan, %v2535
        %v2537 = vand.u32 2147483647, %v498
        %vm2538 = vcmp.le.f32.partialorder %v2537, 0.7853982
        %vm2539 = vcmp.lt.s32.totalorder %v498, 0
        %v2540 = vand.u32 %v498, 2139095040
        %v2541 = vshrl.u32 %v2540, 23
        %v2542 = vsub.s32 %v2541, 127
        %v2543 = vand.u32 2147483647, %v498
        %v2544 = vand.u32 %v2543, 8388607
        %v2545 = vor.u32 %v2544, 8388608
        %v2546 = vsub.s32 0, %v2545
        %v2547 = vadd.s32 %v2542, 1
        %vm2548 = vcmp.gt.s32.totalorder %v2547, 0
        %v2549 = vsel %vm2548, %v2547, 0
        %v2550 = vshrl.u32 %v2549, 5
        %v2551 = vand.u32 %v2549, 31
        %v2552 = vsub.s32 32, %v2551
        %v2553 = vshrl.u32 683565275, %v2552
        %v2554 = vshll.u32 683565275, %v2551
        %v2555 = vshrl.u32 2475754826, %v2552
        %v2556 = vor.u32 %v2554, %v2555
        %v2557 = vshll.u32 2475754826, %v2551
        %v2558 = vshrl.u32 2131351028, %v2552
        %v2559 = vor.u32 %v2557, %v2558
        %v2560 = vshll.u32 2131351028, %v2551
        %v2561 = vshrl.u32 2102212464, %v2552
        %v2562 = vor.u32 %v2560, %v2561
        %v2563 = vshll.u32 2102212464, %v2551
        %v2564 = vshrl.u32 920167782, %v2552
        %v2565 = vor.u32 %v2563, %v2564
        %v2566 = vshll.u32 920167782, %v2551
        %v2567 = vshrl.u32 1326507024, %v2552
        %v2568 = vor.u32 %v2566, %v2567
        %vm2569 = vcmp.lt.s32.totalorder %v2550, 1
        %vm2570 = vcmp.lt.s32.totalorder %v2550, 2
        %vm2571 = vcmp.lt.s32.totalorder %v2550, 3
        %vm2572 = vcmp.lt.s32.totalorder %v2550, 4
        %v2573 = vsel %vm2569, %v2553, %v2556
        %v2574 = vsel %vm2572, %v2562, 2102212464
        %v2575 = vsel %vm2571, %v2559, %v2574
        %v2576 = vsel %vm2570, %v2573, %v2575
        %v2577 = vsel %vm2569, %v2556, %v2559
        %v2578 = vsel %vm2572, %v2565, 920167782
        %v2579 = vsel %vm2571, %v2562, %v2578
        %v2580 = vsel %vm2570, %v2577, %v2579
        %v2581 = vsel %vm2569, %v2559, %v2562
        %v2582 = vsel %vm2572, %v2568, 1326507024
        %v2583 = vsel %vm2571, %v2565, %v2582
        %v2584 = vsel %vm2570, %v2581, %v2583
        %v2585 = vshll.u32 %v2545, 8
        %v2586 = vmul.u32.u64.compose %v2585, %v2584
        %v2587 = vextract.low.u32 %v2586
        %v2588 = vextract.high.u32 %v2586
        %v2589 = vmul.u32.u64.compose %v2585, %v2580
        %v2590 = vextract.low.u32 %v2589
        %v2591 = vextract.high.u32 %v2589
        %v2592 = vmul.u32 %v2585, %v2576
        %v2593 = vadd.s32 %v2588, %v2590
        %vm2594 = vc.u32 %v2588, %v2590
        %v2595 = vadd.s32 %v2591, 1
        %v2596 = vsel %vm2594, %v2595, %v2591
        %v2597 = vadd.s32 %v2592, %v2596
        %v2598 = vadd.s32 %v2597, 536870912
        %v2599 = vshrl.u32 %v2598, 30
        %v2600 = vshll.u32 %v2599, 30
        %v2601 = vsub.s32 %v2597, %v2600
        %vm2602 = vcmp.lt.s32.totalorder %v2601, 0
        %v2603 = vsub.s32 0, %v2601
        %v2604 = vsel %vm2602, %v2603, %v2601
        %v2605 = vclz %v2604
        %v2606 = vsub.s32 %v2605, 2
        %vm2607 = vcmp.gt.s32.totalorder 0, %v2606
        %v2608 = vsel %vm2607, 0, %v2606
        %v2609 = vsub.s32 32, %v2608
        %v2610 = vshll.u32 %v2601, %v2608
        %v2611 = vshrl.u32 %v2593, %v2609
        %v2612 = vor.u32 %v2610, %v2611
        %v2613 = vsub.s32 4294967266, %v2608
        %v2614 = vadd.s32 %v2613, 127
        %v2615 = vshll.u32 %v2614, 23
        %v2616 = vor.u32 4788187, %v2615
        %v2617 = vand.u32 2147483647, %v2616
        %v2619 = vcvt.s32.f32 %v2612
        %v2620 = vmul.f32 %v2619, %v2617
        %v2621 = vxor.u32 %v2620, 2147483648
        %v2622 = vsel %vm2539, %v2621, %v2620
        %v2623 = vsub.s32 4, %v2599
        %v2624 = vsel %vm2539, %v2623, %v2599
        %v2625 = vsel %vm2538, %v498, %v2622
        %v2626 = vsel %vm2538, 0, %v2624
        %v2627 = vcosq.f32.pop %v2625
        %v2628 = vsinq.f32.pop %v2625
        %vm2629 = vweird.f32 %v498
        %v2630 = vadd.s32 %v2626, 3
        %v2631 = vand.u32 %v2630, 3
        %vm2632 = vcmp.lt.s32.totalorder %v2631, 2
        %vm2633 = vcmp.eq.s32.totalorder %v2631, 0
        %v2634 = vxor.u32 %v2628, 2147483648
        %v2635 = vsel %vm2633, %v2627, %v2634
        %vm2636 = vcmp.eq.s32.totalorder %v2631, 2
        %v2637 = vxor.u32 %v2627, 2147483648
        %v2638 = vsel %vm2636, %v2637, %v2628
        %v2639 = vsel %vm2632, %v2635, %v2638
        %v2640 = vsel %vm2629, nan, %v2639
        %v2641 = vand.u32 2147483647, %v503
        %vm2642 = vcmp.le.f32.partialorder %v2641, 0.7853982
        %vm2643 = vcmp.lt.s32.totalorder %v503, 0
        %v2644 = vand.u32 %v503, 2139095040
        %v2645 = vshrl.u32 %v2644, 23
        %v2646 = vsub.s32 %v2645, 127
        %v2647 = vand.u32 2147483647, %v503
        %v2648 = vand.u32 %v2647, 8388607
        %v2649 = vor.u32 %v2648, 8388608
        %v2650 = vsub.s32 0, %v2649
        %v2651 = vadd.s32 %v2646, 1
        %vm2652 = vcmp.gt.s32.totalorder %v2651, 0
        %v2653 = vsel %vm2652, %v2651, 0
        %v2654 = vshrl.u32 %v2653, 5
        %v2655 = vand.u32 %v2653, 31
        %v2656 = vsub.s32 32, %v2655
        %v2657 = vshrl.u32 683565275, %v2656
        %v2658 = vshll.u32 683565275, %v2655
        %v2659 = vshrl.u32 2475754826, %v2656
        %v2660 = vor.u32 %v2658, %v2659
        %v2661 = vshll.u32 2475754826, %v2655
        %v2662 = vshrl.u32 2131351028, %v2656
        %v2663 = vor.u32 %v2661, %v2662
        %v2664 = vshll.u32 2131351028, %v2655
        %v2665 = vshrl.u32 2102212464, %v2656
        %v2666 = vor.u32 %v2664, %v2665
        %v2667 = vshll.u32 2102212464, %v2655
        %v2668 = vshrl.u32 920167782, %v2656
        %v2669 = vor.u32 %v2667, %v2668
        %v2670 = vshll.u32 920167782, %v2655
        %v2671 = vshrl.u32 1326507024, %v2656
        %v2672 = vor.u32 %v2670, %v2671
        %vm2673 = vcmp.lt.s32.totalorder %v2654, 1
        %vm2674 = vcmp.lt.s32.totalorder %v2654, 2
        %vm2675 = vcmp.lt.s32.totalorder %v2654, 3
        %vm2676 = vcmp.lt.s32.totalorder %v2654, 4
        %v2677 = vsel %vm2673, %v2657, %v2660
        %v2678 = vsel %vm2676, %v2666, 2102212464
        %v2679 = vsel %vm2675, %v2663, %v2678
        %v2680 = vsel %vm2674, %v2677, %v2679
        %v2681 = vsel %vm2673, %v2660, %v2663
        %v2682 = vsel %vm2676, %v2669, 920167782
        %v2683 = vsel %vm2675, %v2666, %v2682
        %v2684 = vsel %vm2674, %v2681, %v2683
        %v2685 = vsel %vm2673, %v2663, %v2666
        %v2686 = vsel %vm2676, %v2672, 1326507024
        %v2687 = vsel %vm2675, %v2669, %v2686
        %v2688 = vsel %vm2674, %v2685, %v2687
        %v2689 = vshll.u32 %v2649, 8
        %v2690 = vmul.u32.u64.compose %v2689, %v2688
        %v2691 = vextract.low.u32 %v2690
        %v2692 = vextract.high.u32 %v2690
        %v2693 = vmul.u32.u64.compose %v2689, %v2684
        %v2694 = vextract.low.u32 %v2693
        %v2695 = vextract.high.u32 %v2693
        %v2696 = vmul.u32 %v2689, %v2680
        %v2697 = vadd.s32 %v2692, %v2694
        %vm2698 = vc.u32 %v2692, %v2694
        %v2699 = vadd.s32 %v2695, 1
        %v2700 = vsel %vm2698, %v2699, %v2695
        %v2701 = vadd.s32 %v2696, %v2700
        %v2702 = vadd.s32 %v2701, 536870912
        %v2703 = vshrl.u32 %v2702, 30
        %v2704 = vshll.u32 %v2703, 30
        %v2705 = vsub.s32 %v2701, %v2704
        %vm2706 = vcmp.lt.s32.totalorder %v2705, 0
        %v2707 = vsub.s32 0, %v2705
        %v2708 = vsel %vm2706, %v2707, %v2705
        %v2709 = vclz %v2708
        %v2710 = vsub.s32 %v2709, 2
        %vm2711 = vcmp.gt.s32.totalorder 0, %v2710
        %v2712 = vsel %vm2711, 0, %v2710
        %v2713 = vsub.s32 32, %v2712
        %v2714 = vshll.u32 %v2705, %v2712
        %v2715 = vshrl.u32 %v2697, %v2713
        %v2716 = vor.u32 %v2714, %v2715
        %v2717 = vsub.s32 4294967266, %v2712
        %v2718 = vadd.s32 %v2717, 127
        %v2719 = vshll.u32 %v2718, 23
        %v2720 = vor.u32 4788187, %v2719
        %v2721 = vand.u32 2147483647, %v2720
        %v2723 = vcvt.s32.f32 %v2716
        %v2724 = vmul.f32 %v2723, %v2721
        %v2725 = vxor.u32 %v2724, 2147483648
        %v2726 = vsel %vm2643, %v2725, %v2724
        %v2727 = vsub.s32 4, %v2703
        %v2728 = vsel %vm2643, %v2727, %v2703
        %v2729 = vsel %vm2642, %v503, %v2726
        %v2730 = vsel %vm2642, 0, %v2728
        %v2731 = vcosq.f32.pop %v2729
        %v2732 = vsinq.f32.pop %v2729
        %vm2733 = vweird.f32 %v503
        %v2734 = vadd.s32 %v2730, 3
        %v2735 = vand.u32 %v2734, 3
        %vm2736 = vcmp.lt.s32.totalorder %v2735, 2
        %vm2737 = vcmp.eq.s32.totalorder %v2735, 0
        %v2738 = vxor.u32 %v2732, 2147483648
        %v2739 = vsel %vm2737, %v2731, %v2738
        %vm2740 = vcmp.eq.s32.totalorder %v2735, 2
        %v2741 = vxor.u32 %v2731, 2147483648
        %v2742 = vsel %vm2740, %v2741, %v2732
        %v2743 = vsel %vm2736, %v2739, %v2742
        %v2744 = vsel %vm2733, nan, %v2743
        %v2745 = vand.u32 2147483647, %v508
        %vm2746 = vcmp.le.f32.partialorder %v2745, 0.7853982
        %vm2747 = vcmp.lt.s32.totalorder %v508, 0
        %v2748 = vand.u32 %v508, 2139095040
        %v2749 = vshrl.u32 %v2748, 23
        %v2750 = vsub.s32 %v2749, 127
        %v2751 = vand.u32 2147483647, %v508
        %v2752 = vand.u32 %v2751, 8388607
        %v2753 = vor.u32 %v2752, 8388608
        %v2754 = vsub.s32 0, %v2753
        %v2755 = vadd.s32 %v2750, 1
        %vm2756 = vcmp.gt.s32.totalorder %v2755, 0
        %v2757 = vsel %vm2756, %v2755, 0
        %v2758 = vshrl.u32 %v2757, 5
        %v2759 = vand.u32 %v2757, 31
        %v2760 = vsub.s32 32, %v2759
        %v2761 = vshrl.u32 683565275, %v2760
        %v2762 = vshll.u32 683565275, %v2759
        %v2763 = vshrl.u32 2475754826, %v2760
        %v2764 = vor.u32 %v2762, %v2763
        %v2765 = vshll.u32 2475754826, %v2759
        %v2766 = vshrl.u32 2131351028, %v2760
        %v2767 = vor.u32 %v2765, %v2766
        %v2768 = vshll.u32 2131351028, %v2759
        %v2769 = vshrl.u32 2102212464, %v2760
        %v2770 = vor.u32 %v2768, %v2769
        %v2771 = vshll.u32 2102212464, %v2759
        %v2772 = vshrl.u32 920167782, %v2760
        %v2773 = vor.u32 %v2771, %v2772
        %v2774 = vshll.u32 920167782, %v2759
        %v2775 = vshrl.u32 1326507024, %v2760
        %v2776 = vor.u32 %v2774, %v2775
        %vm2777 = vcmp.lt.s32.totalorder %v2758, 1
        %vm2778 = vcmp.lt.s32.totalorder %v2758, 2
        %vm2779 = vcmp.lt.s32.totalorder %v2758, 3
        %vm2780 = vcmp.lt.s32.totalorder %v2758, 4
        %v2781 = vsel %vm2777, %v2761, %v2764
        %v2782 = vsel %vm2780, %v2770, 2102212464
        %v2783 = vsel %vm2779, %v2767, %v2782
        %v2784 = vsel %vm2778, %v2781, %v2783
        %v2785 = vsel %vm2777, %v2764, %v2767
        %v2786 = vsel %vm2780, %v2773, 920167782
        %v2787 = vsel %vm2779, %v2770, %v2786
        %v2788 = vsel %vm2778, %v2785, %v2787
        %v2789 = vsel %vm2777, %v2767, %v2770
        %v2790 = vsel %vm2780, %v2776, 1326507024
        %v2791 = vsel %vm2779, %v2773, %v2790
        %v2792 = vsel %vm2778, %v2789, %v2791
        %v2793 = vshll.u32 %v2753, 8
        %v2794 = vmul.u32.u64.compose %v2793, %v2792
        %v2795 = vextract.low.u32 %v2794
        %v2796 = vextract.high.u32 %v2794
        %v2797 = vmul.u32.u64.compose %v2793, %v2788
        %v2798 = vextract.low.u32 %v2797
        %v2799 = vextract.high.u32 %v2797
        %v2800 = vmul.u32 %v2793, %v2784
        %v2801 = vadd.s32 %v2796, %v2798
        %vm2802 = vc.u32 %v2796, %v2798
        %v2803 = vadd.s32 %v2799, 1
        %v2804 = vsel %vm2802, %v2803, %v2799
        %v2805 = vadd.s32 %v2800, %v2804
        %v2806 = vadd.s32 %v2805, 536870912
        %v2807 = vshrl.u32 %v2806, 30
        %v2808 = vshll.u32 %v2807, 30
        %v2809 = vsub.s32 %v2805, %v2808
        %vm2810 = vcmp.lt.s32.totalorder %v2809, 0
        %v2811 = vsub.s32 0, %v2809
        %v2812 = vsel %vm2810, %v2811, %v2809
        %v2813 = vclz %v2812
        %v2814 = vsub.s32 %v2813, 2
        %vm2815 = vcmp.gt.s32.totalorder 0, %v2814
        %v2816 = vsel %vm2815, 0, %v2814
        %v2817 = vsub.s32 32, %v2816
        %v2818 = vshll.u32 %v2809, %v2816
        %v2819 = vshrl.u32 %v2801, %v2817
        %v2820 = vor.u32 %v2818, %v2819
        %v2821 = vsub.s32 4294967266, %v2816
        %v2822 = vadd.s32 %v2821, 127
        %v2823 = vshll.u32 %v2822, 23
        %v2824 = vor.u32 4788187, %v2823
        %v2825 = vand.u32 2147483647, %v2824
        %v2827 = vcvt.s32.f32 %v2820
        %v2828 = vmul.f32 %v2827, %v2825
        %v2829 = vxor.u32 %v2828, 2147483648
        %v2830 = vsel %vm2747, %v2829, %v2828
        %v2831 = vsub.s32 4, %v2807
        %v2832 = vsel %vm2747, %v2831, %v2807
        %v2833 = vsel %vm2746, %v508, %v2830
        %v2834 = vsel %vm2746, 0, %v2832
        %v2835 = vcosq.f32.pop %v2833
        %v2836 = vsinq.f32.pop %v2833
        %vm2837 = vweird.f32 %v508
        %v2838 = vadd.s32 %v2834, 3
        %v2839 = vand.u32 %v2838, 3
        %vm2840 = vcmp.lt.s32.totalorder %v2839, 2
        %vm2841 = vcmp.eq.s32.totalorder %v2839, 0
        %v2842 = vxor.u32 %v2836, 2147483648
        %v2843 = vsel %vm2841, %v2835, %v2842
        %vm2844 = vcmp.eq.s32.totalorder %v2839, 2
        %v2845 = vxor.u32 %v2835, 2147483648
        %v2846 = vsel %vm2844, %v2845, %v2836
        %v2847 = vsel %vm2840, %v2843, %v2846
        %v2848 = vsel %vm2837, nan, %v2847
        %v2849 = vand.u32 2147483647, %v513
        %vm2850 = vcmp.le.f32.partialorder %v2849, 0.7853982
        %vm2851 = vcmp.lt.s32.totalorder %v513, 0
        %v2852 = vand.u32 %v513, 2139095040
        %v2853 = vshrl.u32 %v2852, 23
        %v2854 = vsub.s32 %v2853, 127
        %v2855 = vand.u32 2147483647, %v513
        %v2856 = vand.u32 %v2855, 8388607
        %v2857 = vor.u32 %v2856, 8388608
        %v2858 = vsub.s32 0, %v2857
        %v2859 = vadd.s32 %v2854, 1
        %vm2860 = vcmp.gt.s32.totalorder %v2859, 0
        %v2861 = vsel %vm2860, %v2859, 0
        %v2862 = vshrl.u32 %v2861, 5
        %v2863 = vand.u32 %v2861, 31
        %v2864 = vsub.s32 32, %v2863
        %v2865 = vshrl.u32 683565275, %v2864
        %v2866 = vshll.u32 683565275, %v2863
        %v2867 = vshrl.u32 2475754826, %v2864
        %v2868 = vor.u32 %v2866, %v2867
        %v2869 = vshll.u32 2475754826, %v2863
        %v2870 = vshrl.u32 2131351028, %v2864
        %v2871 = vor.u32 %v2869, %v2870
        %v2872 = vshll.u32 2131351028, %v2863
        %v2873 = vshrl.u32 2102212464, %v2864
        %v2874 = vor.u32 %v2872, %v2873
        %v2875 = vshll.u32 2102212464, %v2863
        %v2876 = vshrl.u32 920167782, %v2864
        %v2877 = vor.u32 %v2875, %v2876
        %v2878 = vshll.u32 920167782, %v2863
        %v2879 = vshrl.u32 1326507024, %v2864
        %v2880 = vor.u32 %v2878, %v2879
        %vm2881 = vcmp.lt.s32.totalorder %v2862, 1
        %vm2882 = vcmp.lt.s32.totalorder %v2862, 2
        %vm2883 = vcmp.lt.s32.totalorder %v2862, 3
        %vm2884 = vcmp.lt.s32.totalorder %v2862, 4
        %v2885 = vsel %vm2881, %v2865, %v2868
        %v2886 = vsel %vm2884, %v2874, 2102212464
        %v2887 = vsel %vm2883, %v2871, %v2886
        %v2888 = vsel %vm2882, %v2885, %v2887
        %v2889 = vsel %vm2881, %v2868, %v2871
        %v2890 = vsel %vm2884, %v2877, 920167782
        %v2891 = vsel %vm2883, %v2874, %v2890
        %v2892 = vsel %vm2882, %v2889, %v2891
        %v2893 = vsel %vm2881, %v2871, %v2874
        %v2894 = vsel %vm2884, %v2880, 1326507024
        %v2895 = vsel %vm2883, %v2877, %v2894
        %v2896 = vsel %vm2882, %v2893, %v2895
        %v2897 = vshll.u32 %v2857, 8
        %v2898 = vmul.u32.u64.compose %v2897, %v2896
        %v2899 = vextract.low.u32 %v2898
        %v2900 = vextract.high.u32 %v2898
        %v2901 = vmul.u32.u64.compose %v2897, %v2892
        %v2902 = vextract.low.u32 %v2901
        %v2903 = vextract.high.u32 %v2901
        %v2904 = vmul.u32 %v2897, %v2888
        %v2905 = vadd.s32 %v2900, %v2902
        %vm2906 = vc.u32 %v2900, %v2902
        %v2907 = vadd.s32 %v2903, 1
        %v2908 = vsel %vm2906, %v2907, %v2903
        %v2909 = vadd.s32 %v2904, %v2908
        %v2910 = vadd.s32 %v2909, 536870912
        %v2911 = vshrl.u32 %v2910, 30
        %v2912 = vshll.u32 %v2911, 30
        %v2913 = vsub.s32 %v2909, %v2912
        %vm2914 = vcmp.lt.s32.totalorder %v2913, 0
        %v2915 = vsub.s32 0, %v2913
        %v2916 = vsel %vm2914, %v2915, %v2913
        %v2917 = vclz %v2916
        %v2918 = vsub.s32 %v2917, 2
        %vm2919 = vcmp.gt.s32.totalorder 0, %v2918
        %v2920 = vsel %vm2919, 0, %v2918
        %v2921 = vsub.s32 32, %v2920
        %v2922 = vshll.u32 %v2913, %v2920
        %v2923 = vshrl.u32 %v2905, %v2921
        %v2924 = vor.u32 %v2922, %v2923
        %v2925 = vsub.s32 4294967266, %v2920
        %v2926 = vadd.s32 %v2925, 127
        %v2927 = vshll.u32 %v2926, 23
        %v2928 = vor.u32 4788187, %v2927
        %v2929 = vand.u32 2147483647, %v2928
        %v2931 = vcvt.s32.f32 %v2924
        %v2932 = vmul.f32 %v2931, %v2929
        %v2933 = vxor.u32 %v2932, 2147483648
        %v2934 = vsel %vm2851, %v2933, %v2932
        %v2935 = vsub.s32 4, %v2911
        %v2936 = vsel %vm2851, %v2935, %v2911
        %v2937 = vsel %vm2850, %v513, %v2934
        %v2938 = vsel %vm2850, 0, %v2936
        %v2939 = vcosq.f32.pop %v2937
        %v2940 = vsinq.f32.pop %v2937
        %vm2941 = vweird.f32 %v513
        %v2942 = vadd.s32 %v2938, 3
        %v2943 = vand.u32 %v2942, 3
        %vm2944 = vcmp.lt.s32.totalorder %v2943, 2
        %vm2945 = vcmp.eq.s32.totalorder %v2943, 0
        %v2946 = vxor.u32 %v2940, 2147483648
        %v2947 = vsel %vm2945, %v2939, %v2946
        %vm2948 = vcmp.eq.s32.totalorder %v2943, 2
        %v2949 = vxor.u32 %v2939, 2147483648
        %v2950 = vsel %vm2948, %v2949, %v2940
        %v2951 = vsel %vm2944, %v2947, %v2950
        %v2952 = vsel %vm2941, nan, %v2951
        %v2953 = vand.u32 2147483647, %v518
        %vm2954 = vcmp.le.f32.partialorder %v2953, 0.7853982
        %vm2955 = vcmp.lt.s32.totalorder %v518, 0
        %v2956 = vand.u32 %v518, 2139095040
        %v2957 = vshrl.u32 %v2956, 23
        %v2958 = vsub.s32 %v2957, 127
        %v2959 = vand.u32 2147483647, %v518
        %v2960 = vand.u32 %v2959, 8388607
        %v2961 = vor.u32 %v2960, 8388608
        %v2962 = vsub.s32 0, %v2961
        %v2963 = vadd.s32 %v2958, 1
        %vm2964 = vcmp.gt.s32.totalorder %v2963, 0
        %v2965 = vsel %vm2964, %v2963, 0
        %v2966 = vshrl.u32 %v2965, 5
        %v2967 = vand.u32 %v2965, 31
        %v2968 = vsub.s32 32, %v2967
        %v2969 = vshrl.u32 683565275, %v2968
        %v2970 = vshll.u32 683565275, %v2967
        %v2971 = vshrl.u32 2475754826, %v2968
        %v2972 = vor.u32 %v2970, %v2971
        %v2973 = vshll.u32 2475754826, %v2967
        %v2974 = vshrl.u32 2131351028, %v2968
        %v2975 = vor.u32 %v2973, %v2974
        %v2976 = vshll.u32 2131351028, %v2967
        %v2977 = vshrl.u32 2102212464, %v2968
        %v2978 = vor.u32 %v2976, %v2977
        %v2979 = vshll.u32 2102212464, %v2967
        %v2980 = vshrl.u32 920167782, %v2968
        %v2981 = vor.u32 %v2979, %v2980
        %v2982 = vshll.u32 920167782, %v2967
        %v2983 = vshrl.u32 1326507024, %v2968
        %v2984 = vor.u32 %v2982, %v2983
        %vm2985 = vcmp.lt.s32.totalorder %v2966, 1
        %vm2986 = vcmp.lt.s32.totalorder %v2966, 2
        %vm2987 = vcmp.lt.s32.totalorder %v2966, 3
        %vm2988 = vcmp.lt.s32.totalorder %v2966, 4
        %v2989 = vsel %vm2985, %v2969, %v2972
        %v2990 = vsel %vm2988, %v2978, 2102212464
        %v2991 = vsel %vm2987, %v2975, %v2990
        %v2992 = vsel %vm2986, %v2989, %v2991
        %v2993 = vsel %vm2985, %v2972, %v2975
        %v2994 = vsel %vm2988, %v2981, 920167782
        %v2995 = vsel %vm2987, %v2978, %v2994
        %v2996 = vsel %vm2986, %v2993, %v2995
        %v2997 = vsel %vm2985, %v2975, %v2978
        %v2998 = vsel %vm2988, %v2984, 1326507024
        %v2999 = vsel %vm2987, %v2981, %v2998
        %v3000 = vsel %vm2986, %v2997, %v2999
        %v3001 = vshll.u32 %v2961, 8
        %v3002 = vmul.u32.u64.compose %v3001, %v3000
        %v3003 = vextract.low.u32 %v3002
        %v3004 = vextract.high.u32 %v3002
        %v3005 = vmul.u32.u64.compose %v3001, %v2996
        %v3006 = vextract.low.u32 %v3005
        %v3007 = vextract.high.u32 %v3005
        %v3008 = vmul.u32 %v3001, %v2992
        %v3009 = vadd.s32 %v3004, %v3006
        %vm3010 = vc.u32 %v3004, %v3006
        %v3011 = vadd.s32 %v3007, 1
        %v3012 = vsel %vm3010, %v3011, %v3007
        %v3013 = vadd.s32 %v3008, %v3012
        %v3014 = vadd.s32 %v3013, 536870912
        %v3015 = vshrl.u32 %v3014, 30
        %v3016 = vshll.u32 %v3015, 30
        %v3017 = vsub.s32 %v3013, %v3016
        %vm3018 = vcmp.lt.s32.totalorder %v3017, 0
        %v3019 = vsub.s32 0, %v3017
        %v3020 = vsel %vm3018, %v3019, %v3017
        %v3021 = vclz %v3020
        %v3022 = vsub.s32 %v3021, 2
        %vm3023 = vcmp.gt.s32.totalorder 0, %v3022
        %v3024 = vsel %vm3023, 0, %v3022
        %v3025 = vsub.s32 32, %v3024
        %v3026 = vshll.u32 %v3017, %v3024
        %v3027 = vshrl.u32 %v3009, %v3025
        %v3028 = vor.u32 %v3026, %v3027
        %v3029 = vsub.s32 4294967266, %v3024
        %v3030 = vadd.s32 %v3029, 127
        %v3031 = vshll.u32 %v3030, 23
        %v3032 = vor.u32 4788187, %v3031
        %v3033 = vand.u32 2147483647, %v3032
        %v3035 = vcvt.s32.f32 %v3028
        %v3036 = vmul.f32 %v3035, %v3033
        %v3037 = vxor.u32 %v3036, 2147483648
        %v3038 = vsel %vm2955, %v3037, %v3036
        %v3039 = vsub.s32 4, %v3015
        %v3040 = vsel %vm2955, %v3039, %v3015
        %v3041 = vsel %vm2954, %v518, %v3038
        %v3042 = vsel %vm2954, 0, %v3040
        %v3043 = vcosq.f32.pop %v3041
        %v3044 = vsinq.f32.pop %v3041
        %vm3045 = vweird.f32 %v518
        %v3046 = vadd.s32 %v3042, 3
        %v3047 = vand.u32 %v3046, 3
        %vm3048 = vcmp.lt.s32.totalorder %v3047, 2
        %vm3049 = vcmp.eq.s32.totalorder %v3047, 0
        %v3050 = vxor.u32 %v3044, 2147483648
        %v3051 = vsel %vm3049, %v3043, %v3050
        %vm3052 = vcmp.eq.s32.totalorder %v3047, 2
        %v3053 = vxor.u32 %v3043, 2147483648
        %v3054 = vsel %vm3052, %v3053, %v3044
        %v3055 = vsel %vm3048, %v3051, %v3054
        %v3056 = vsel %vm3045, nan, %v3055
        %v3057 = vand.u32 2147483647, %v523
        %vm3058 = vcmp.le.f32.partialorder %v3057, 0.7853982
        %vm3059 = vcmp.lt.s32.totalorder %v523, 0
        %v3060 = vand.u32 %v523, 2139095040
        %v3061 = vshrl.u32 %v3060, 23
        %v3062 = vsub.s32 %v3061, 127
        %v3063 = vand.u32 2147483647, %v523
        %v3064 = vand.u32 %v3063, 8388607
        %v3065 = vor.u32 %v3064, 8388608
        %v3066 = vsub.s32 0, %v3065
        %v3067 = vadd.s32 %v3062, 1
        %vm3068 = vcmp.gt.s32.totalorder %v3067, 0
        %v3069 = vsel %vm3068, %v3067, 0
        %v3070 = vshrl.u32 %v3069, 5
        %v3071 = vand.u32 %v3069, 31
        %v3072 = vsub.s32 32, %v3071
        %v3073 = vshrl.u32 683565275, %v3072
        %v3074 = vshll.u32 683565275, %v3071
        %v3075 = vshrl.u32 2475754826, %v3072
        %v3076 = vor.u32 %v3074, %v3075
        %v3077 = vshll.u32 2475754826, %v3071
        %v3078 = vshrl.u32 2131351028, %v3072
        %v3079 = vor.u32 %v3077, %v3078
        %v3080 = vshll.u32 2131351028, %v3071
        %v3081 = vshrl.u32 2102212464, %v3072
        %v3082 = vor.u32 %v3080, %v3081
        %v3083 = vshll.u32 2102212464, %v3071
        %v3084 = vshrl.u32 920167782, %v3072
        %v3085 = vor.u32 %v3083, %v3084
        %v3086 = vshll.u32 920167782, %v3071
        %v3087 = vshrl.u32 1326507024, %v3072
        %v3088 = vor.u32 %v3086, %v3087
        %vm3089 = vcmp.lt.s32.totalorder %v3070, 1
        %vm3090 = vcmp.lt.s32.totalorder %v3070, 2
        %vm3091 = vcmp.lt.s32.totalorder %v3070, 3
        %vm3092 = vcmp.lt.s32.totalorder %v3070, 4
        %v3093 = vsel %vm3089, %v3073, %v3076
        %v3094 = vsel %vm3092, %v3082, 2102212464
        %v3095 = vsel %vm3091, %v3079, %v3094
        %v3096 = vsel %vm3090, %v3093, %v3095
        %v3097 = vsel %vm3089, %v3076, %v3079
        %v3098 = vsel %vm3092, %v3085, 920167782
        %v3099 = vsel %vm3091, %v3082, %v3098
        %v3100 = vsel %vm3090, %v3097, %v3099
        %v3101 = vsel %vm3089, %v3079, %v3082
        %v3102 = vsel %vm3092, %v3088, 1326507024
        %v3103 = vsel %vm3091, %v3085, %v3102
        %v3104 = vsel %vm3090, %v3101, %v3103
        %v3105 = vshll.u32 %v3065, 8
        %v3106 = vmul.u32.u64.compose %v3105, %v3104
        %v3107 = vextract.low.u32 %v3106
        %v3108 = vextract.high.u32 %v3106
        %v3109 = vmul.u32.u64.compose %v3105, %v3100
        %v3110 = vextract.low.u32 %v3109
        %v3111 = vextract.high.u32 %v3109
        %v3112 = vmul.u32 %v3105, %v3096
        %v3113 = vadd.s32 %v3108, %v3110
        %vm3114 = vc.u32 %v3108, %v3110
        %v3115 = vadd.s32 %v3111, 1
        %v3116 = vsel %vm3114, %v3115, %v3111
        %v3117 = vadd.s32 %v3112, %v3116
        %v3118 = vadd.s32 %v3117, 536870912
        %v3119 = vshrl.u32 %v3118, 30
        %v3120 = vshll.u32 %v3119, 30
        %v3121 = vsub.s32 %v3117, %v3120
        %vm3122 = vcmp.lt.s32.totalorder %v3121, 0
        %v3123 = vsub.s32 0, %v3121
        %v3124 = vsel %vm3122, %v3123, %v3121
        %v3125 = vclz %v3124
        %v3126 = vsub.s32 %v3125, 2
        %vm3127 = vcmp.gt.s32.totalorder 0, %v3126
        %v3128 = vsel %vm3127, 0, %v3126
        %v3129 = vsub.s32 32, %v3128
        %v3130 = vshll.u32 %v3121, %v3128
        %v3131 = vshrl.u32 %v3113, %v3129
        %v3132 = vor.u32 %v3130, %v3131
        %v3133 = vsub.s32 4294967266, %v3128
        %v3134 = vadd.s32 %v3133, 127
        %v3135 = vshll.u32 %v3134, 23
        %v3136 = vor.u32 4788187, %v3135
        %v3137 = vand.u32 2147483647, %v3136
        %v3139 = vcvt.s32.f32 %v3132
        %v3140 = vmul.f32 %v3139, %v3137
        %v3141 = vxor.u32 %v3140, 2147483648
        %v3142 = vsel %vm3059, %v3141, %v3140
        %v3143 = vsub.s32 4, %v3119
        %v3144 = vsel %vm3059, %v3143, %v3119
        %v3145 = vsel %vm3058, %v523, %v3142
        %v3146 = vsel %vm3058, 0, %v3144
        %v3147 = vcosq.f32.pop %v3145
        %v3148 = vsinq.f32.pop %v3145
        %vm3149 = vweird.f32 %v523
        %v3150 = vadd.s32 %v3146, 3
        %v3151 = vand.u32 %v3150, 3
        %vm3152 = vcmp.lt.s32.totalorder %v3151, 2
        %vm3153 = vcmp.eq.s32.totalorder %v3151, 0
        %v3154 = vxor.u32 %v3148, 2147483648
        %v3155 = vsel %vm3153, %v3147, %v3154
        %vm3156 = vcmp.eq.s32.totalorder %v3151, 2
        %v3157 = vxor.u32 %v3147, 2147483648
        %v3158 = vsel %vm3156, %v3157, %v3148
        %v3159 = vsel %vm3152, %v3155, %v3158
        %v3160 = vsel %vm3149, nan, %v3159
        %v3161 = vand.u32 2147483647, %v528
        %vm3162 = vcmp.le.f32.partialorder %v3161, 0.7853982
        %vm3163 = vcmp.lt.s32.totalorder %v528, 0
        %v3164 = vand.u32 %v528, 2139095040
        %v3165 = vshrl.u32 %v3164, 23
        %v3166 = vsub.s32 %v3165, 127
        %v3167 = vand.u32 2147483647, %v528
        %v3168 = vand.u32 %v3167, 8388607
        %v3169 = vor.u32 %v3168, 8388608
        %v3170 = vsub.s32 0, %v3169
        %v3171 = vadd.s32 %v3166, 1
        %vm3172 = vcmp.gt.s32.totalorder %v3171, 0
        %v3173 = vsel %vm3172, %v3171, 0
        %v3174 = vshrl.u32 %v3173, 5
        %v3175 = vand.u32 %v3173, 31
        %v3176 = vsub.s32 32, %v3175
        %v3177 = vshrl.u32 683565275, %v3176
        %v3178 = vshll.u32 683565275, %v3175
        %v3179 = vshrl.u32 2475754826, %v3176
        %v3180 = vor.u32 %v3178, %v3179
        %v3181 = vshll.u32 2475754826, %v3175
        %v3182 = vshrl.u32 2131351028, %v3176
        %v3183 = vor.u32 %v3181, %v3182
        %v3184 = vshll.u32 2131351028, %v3175
        %v3185 = vshrl.u32 2102212464, %v3176
        %v3186 = vor.u32 %v3184, %v3185
        %v3187 = vshll.u32 2102212464, %v3175
        %v3188 = vshrl.u32 920167782, %v3176
        %v3189 = vor.u32 %v3187, %v3188
        %v3190 = vshll.u32 920167782, %v3175
        %v3191 = vshrl.u32 1326507024, %v3176
        %v3192 = vor.u32 %v3190, %v3191
        %vm3193 = vcmp.lt.s32.totalorder %v3174, 1
        %vm3194 = vcmp.lt.s32.totalorder %v3174, 2
        %vm3195 = vcmp.lt.s32.totalorder %v3174, 3
        %vm3196 = vcmp.lt.s32.totalorder %v3174, 4
        %v3197 = vsel %vm3193, %v3177, %v3180
        %v3198 = vsel %vm3196, %v3186, 2102212464
        %v3199 = vsel %vm3195, %v3183, %v3198
        %v3200 = vsel %vm3194, %v3197, %v3199
        %v3201 = vsel %vm3193, %v3180, %v3183
        %v3202 = vsel %vm3196, %v3189, 920167782
        %v3203 = vsel %vm3195, %v3186, %v3202
        %v3204 = vsel %vm3194, %v3201, %v3203
        %v3205 = vsel %vm3193, %v3183, %v3186
        %v3206 = vsel %vm3196, %v3192, 1326507024
        %v3207 = vsel %vm3195, %v3189, %v3206
        %v3208 = vsel %vm3194, %v3205, %v3207
        %v3209 = vshll.u32 %v3169, 8
        %v3210 = vmul.u32.u64.compose %v3209, %v3208
        %v3211 = vextract.low.u32 %v3210
        %v3212 = vextract.high.u32 %v3210
        %v3213 = vmul.u32.u64.compose %v3209, %v3204
        %v3214 = vextract.low.u32 %v3213
        %v3215 = vextract.high.u32 %v3213
        %v3216 = vmul.u32 %v3209, %v3200
        %v3217 = vadd.s32 %v3212, %v3214
        %vm3218 = vc.u32 %v3212, %v3214
        %v3219 = vadd.s32 %v3215, 1
        %v3220 = vsel %vm3218, %v3219, %v3215
        %v3221 = vadd.s32 %v3216, %v3220
        %v3222 = vadd.s32 %v3221, 536870912
        %v3223 = vshrl.u32 %v3222, 30
        %v3224 = vshll.u32 %v3223, 30
        %v3225 = vsub.s32 %v3221, %v3224
        %vm3226 = vcmp.lt.s32.totalorder %v3225, 0
        %v3227 = vsub.s32 0, %v3225
        %v3228 = vsel %vm3226, %v3227, %v3225
        %v3229 = vclz %v3228
        %v3230 = vsub.s32 %v3229, 2
        %vm3231 = vcmp.gt.s32.totalorder 0, %v3230
        %v3232 = vsel %vm3231, 0, %v3230
        %v3233 = vsub.s32 32, %v3232
        %v3234 = vshll.u32 %v3225, %v3232
        %v3235 = vshrl.u32 %v3217, %v3233
        %v3236 = vor.u32 %v3234, %v3235
        %v3237 = vsub.s32 4294967266, %v3232
        %v3238 = vadd.s32 %v3237, 127
        %v3239 = vshll.u32 %v3238, 23
        %v3240 = vor.u32 4788187, %v3239
        %v3241 = vand.u32 2147483647, %v3240
        %v3243 = vcvt.s32.f32 %v3236
        %v3244 = vmul.f32 %v3243, %v3241
        %v3245 = vxor.u32 %v3244, 2147483648
        %v3246 = vsel %vm3163, %v3245, %v3244
        %v3247 = vsub.s32 4, %v3223
        %v3248 = vsel %vm3163, %v3247, %v3223
        %v3249 = vsel %vm3162, %v528, %v3246
        %v3250 = vsel %vm3162, 0, %v3248
        %v3251 = vcosq.f32.pop %v3249
        %v3252 = vsinq.f32.pop %v3249
        %vm3253 = vweird.f32 %v528
        %v3254 = vadd.s32 %v3250, 3
        %v3255 = vand.u32 %v3254, 3
        %vm3256 = vcmp.lt.s32.totalorder %v3255, 2
        %vm3257 = vcmp.eq.s32.totalorder %v3255, 0
        %v3258 = vxor.u32 %v3252, 2147483648
        %v3259 = vsel %vm3257, %v3251, %v3258
        %vm3260 = vcmp.eq.s32.totalorder %v3255, 2
        %v3261 = vxor.u32 %v3251, 2147483648
        %v3262 = vsel %vm3260, %v3261, %v3252
        %v3263 = vsel %vm3256, %v3259, %v3262
        %v3264 = vsel %vm3253, nan, %v3263
        %v3265 = vand.u32 2147483647, %v533
        %vm3266 = vcmp.le.f32.partialorder %v3265, 0.7853982
        %vm3267 = vcmp.lt.s32.totalorder %v533, 0
        %v3268 = vand.u32 %v533, 2139095040
        %v3269 = vshrl.u32 %v3268, 23
        %v3270 = vsub.s32 %v3269, 127
        %v3271 = vand.u32 2147483647, %v533
        %v3272 = vand.u32 %v3271, 8388607
        %v3273 = vor.u32 %v3272, 8388608
        %v3274 = vsub.s32 0, %v3273
        %v3275 = vadd.s32 %v3270, 1
        %vm3276 = vcmp.gt.s32.totalorder %v3275, 0
        %v3277 = vsel %vm3276, %v3275, 0
        %v3278 = vshrl.u32 %v3277, 5
        %v3279 = vand.u32 %v3277, 31
        %v3280 = vsub.s32 32, %v3279
        %v3281 = vshrl.u32 683565275, %v3280
        %v3282 = vshll.u32 683565275, %v3279
        %v3283 = vshrl.u32 2475754826, %v3280
        %v3284 = vor.u32 %v3282, %v3283
        %v3285 = vshll.u32 2475754826, %v3279
        %v3286 = vshrl.u32 2131351028, %v3280
        %v3287 = vor.u32 %v3285, %v3286
        %v3288 = vshll.u32 2131351028, %v3279
        %v3289 = vshrl.u32 2102212464, %v3280
        %v3290 = vor.u32 %v3288, %v3289
        %v3291 = vshll.u32 2102212464, %v3279
        %v3292 = vshrl.u32 920167782, %v3280
        %v3293 = vor.u32 %v3291, %v3292
        %v3294 = vshll.u32 920167782, %v3279
        %v3295 = vshrl.u32 1326507024, %v3280
        %v3296 = vor.u32 %v3294, %v3295
        %vm3297 = vcmp.lt.s32.totalorder %v3278, 1
        %vm3298 = vcmp.lt.s32.totalorder %v3278, 2
        %vm3299 = vcmp.lt.s32.totalorder %v3278, 3
        %vm3300 = vcmp.lt.s32.totalorder %v3278, 4
        %v3301 = vsel %vm3297, %v3281, %v3284
        %v3302 = vsel %vm3300, %v3290, 2102212464
        %v3303 = vsel %vm3299, %v3287, %v3302
        %v3304 = vsel %vm3298, %v3301, %v3303
        %v3305 = vsel %vm3297, %v3284, %v3287
        %v3306 = vsel %vm3300, %v3293, 920167782
        %v3307 = vsel %vm3299, %v3290, %v3306
        %v3308 = vsel %vm3298, %v3305, %v3307
        %v3309 = vsel %vm3297, %v3287, %v3290
        %v3310 = vsel %vm3300, %v3296, 1326507024
        %v3311 = vsel %vm3299, %v3293, %v3310
        %v3312 = vsel %vm3298, %v3309, %v3311
        %v3313 = vshll.u32 %v3273, 8
        %v3314 = vmul.u32.u64.compose %v3313, %v3312
        %v3315 = vextract.low.u32 %v3314
        %v3316 = vextract.high.u32 %v3314
        %v3317 = vmul.u32.u64.compose %v3313, %v3308
        %v3318 = vextract.low.u32 %v3317
        %v3319 = vextract.high.u32 %v3317
        %v3320 = vmul.u32 %v3313, %v3304
        %v3321 = vadd.s32 %v3316, %v3318
        %vm3322 = vc.u32 %v3316, %v3318
        %v3323 = vadd.s32 %v3319, 1
        %v3324 = vsel %vm3322, %v3323, %v3319
        %v3325 = vadd.s32 %v3320, %v3324
        %v3326 = vadd.s32 %v3325, 536870912
        %v3327 = vshrl.u32 %v3326, 30
        %v3328 = vshll.u32 %v3327, 30
        %v3329 = vsub.s32 %v3325, %v3328
        %vm3330 = vcmp.lt.s32.totalorder %v3329, 0
        %v3331 = vsub.s32 0, %v3329
        %v3332 = vsel %vm3330, %v3331, %v3329
        %v3333 = vclz %v3332
        %v3334 = vsub.s32 %v3333, 2
        %vm3335 = vcmp.gt.s32.totalorder 0, %v3334
        %v3336 = vsel %vm3335, 0, %v3334
        %v3337 = vsub.s32 32, %v3336
        %v3338 = vshll.u32 %v3329, %v3336
        %v3339 = vshrl.u32 %v3321, %v3337
        %v3340 = vor.u32 %v3338, %v3339
        %v3341 = vsub.s32 4294967266, %v3336
        %v3342 = vadd.s32 %v3341, 127
        %v3343 = vshll.u32 %v3342, 23
        %v3344 = vor.u32 4788187, %v3343
        %v3345 = vand.u32 2147483647, %v3344
        %v3347 = vcvt.s32.f32 %v3340
        %v3348 = vmul.f32 %v3347, %v3345
        %v3349 = vxor.u32 %v3348, 2147483648
        %v3350 = vsel %vm3267, %v3349, %v3348
        %v3351 = vsub.s32 4, %v3327
        %v3352 = vsel %vm3267, %v3351, %v3327
        %v3353 = vsel %vm3266, %v533, %v3350
        %v3354 = vsel %vm3266, 0, %v3352
        %v3355 = vcosq.f32.pop %v3353
        %v3356 = vsinq.f32.pop %v3353
        %vm3357 = vweird.f32 %v533
        %v3358 = vadd.s32 %v3354, 3
        %v3359 = vand.u32 %v3358, 3
        %vm3360 = vcmp.lt.s32.totalorder %v3359, 2
        %vm3361 = vcmp.eq.s32.totalorder %v3359, 0
        %v3362 = vxor.u32 %v3356, 2147483648
        %v3363 = vsel %vm3361, %v3355, %v3362
        %vm3364 = vcmp.eq.s32.totalorder %v3359, 2
        %v3365 = vxor.u32 %v3355, 2147483648
        %v3366 = vsel %vm3364, %v3365, %v3356
        %v3367 = vsel %vm3360, %v3363, %v3366
        %v3368 = vsel %vm3357, nan, %v3367
        %v3369 = vand.u32 2147483647, %v538
        %vm3370 = vcmp.le.f32.partialorder %v3369, 0.7853982
        %vm3371 = vcmp.lt.s32.totalorder %v538, 0
        %v3372 = vand.u32 %v538, 2139095040
        %v3373 = vshrl.u32 %v3372, 23
        %v3374 = vsub.s32 %v3373, 127
        %v3375 = vand.u32 2147483647, %v538
        %v3376 = vand.u32 %v3375, 8388607
        %v3377 = vor.u32 %v3376, 8388608
        %v3378 = vsub.s32 0, %v3377
        %v3379 = vadd.s32 %v3374, 1
        %vm3380 = vcmp.gt.s32.totalorder %v3379, 0
        %v3381 = vsel %vm3380, %v3379, 0
        %v3382 = vshrl.u32 %v3381, 5
        %v3383 = vand.u32 %v3381, 31
        %v3384 = vsub.s32 32, %v3383
        %v3385 = vshrl.u32 683565275, %v3384
        %v3386 = vshll.u32 683565275, %v3383
        %v3387 = vshrl.u32 2475754826, %v3384
        %v3388 = vor.u32 %v3386, %v3387
        %v3389 = vshll.u32 2475754826, %v3383
        %v3390 = vshrl.u32 2131351028, %v3384
        %v3391 = vor.u32 %v3389, %v3390
        %v3392 = vshll.u32 2131351028, %v3383
        %v3393 = vshrl.u32 2102212464, %v3384
        %v3394 = vor.u32 %v3392, %v3393
        %v3395 = vshll.u32 2102212464, %v3383
        %v3396 = vshrl.u32 920167782, %v3384
        %v3397 = vor.u32 %v3395, %v3396
        %v3398 = vshll.u32 920167782, %v3383
        %v3399 = vshrl.u32 1326507024, %v3384
        %v3400 = vor.u32 %v3398, %v3399
        %vm3401 = vcmp.lt.s32.totalorder %v3382, 1
        %vm3402 = vcmp.lt.s32.totalorder %v3382, 2
        %vm3403 = vcmp.lt.s32.totalorder %v3382, 3
        %vm3404 = vcmp.lt.s32.totalorder %v3382, 4
        %v3405 = vsel %vm3401, %v3385, %v3388
        %v3406 = vsel %vm3404, %v3394, 2102212464
        %v3407 = vsel %vm3403, %v3391, %v3406
        %v3408 = vsel %vm3402, %v3405, %v3407
        %v3409 = vsel %vm3401, %v3388, %v3391
        %v3410 = vsel %vm3404, %v3397, 920167782
        %v3411 = vsel %vm3403, %v3394, %v3410
        %v3412 = vsel %vm3402, %v3409, %v3411
        %v3413 = vsel %vm3401, %v3391, %v3394
        %v3414 = vsel %vm3404, %v3400, 1326507024
        %v3415 = vsel %vm3403, %v3397, %v3414
        %v3416 = vsel %vm3402, %v3413, %v3415
        %v3417 = vshll.u32 %v3377, 8
        %v3418 = vmul.u32.u64.compose %v3417, %v3416
        %v3419 = vextract.low.u32 %v3418
        %v3420 = vextract.high.u32 %v3418
        %v3421 = vmul.u32.u64.compose %v3417, %v3412
        %v3422 = vextract.low.u32 %v3421
        %v3423 = vextract.high.u32 %v3421
        %v3424 = vmul.u32 %v3417, %v3408
        %v3425 = vadd.s32 %v3420, %v3422
        %vm3426 = vc.u32 %v3420, %v3422
        %v3427 = vadd.s32 %v3423, 1
        %v3428 = vsel %vm3426, %v3427, %v3423
        %v3429 = vadd.s32 %v3424, %v3428
        %v3430 = vadd.s32 %v3429, 536870912
        %v3431 = vshrl.u32 %v3430, 30
        %v3432 = vshll.u32 %v3431, 30
        %v3433 = vsub.s32 %v3429, %v3432
        %vm3434 = vcmp.lt.s32.totalorder %v3433, 0
        %v3435 = vsub.s32 0, %v3433
        %v3436 = vsel %vm3434, %v3435, %v3433
        %v3437 = vclz %v3436
        %v3438 = vsub.s32 %v3437, 2
        %vm3439 = vcmp.gt.s32.totalorder 0, %v3438
        %v3440 = vsel %vm3439, 0, %v3438
        %v3441 = vsub.s32 32, %v3440
        %v3442 = vshll.u32 %v3433, %v3440
        %v3443 = vshrl.u32 %v3425, %v3441
        %v3444 = vor.u32 %v3442, %v3443
        %v3445 = vsub.s32 4294967266, %v3440
        %v3446 = vadd.s32 %v3445, 127
        %v3447 = vshll.u32 %v3446, 23
        %v3448 = vor.u32 4788187, %v3447
        %v3449 = vand.u32 2147483647, %v3448
        %v3451 = vcvt.s32.f32 %v3444
        %v3452 = vmul.f32 %v3451, %v3449
        %v3453 = vxor.u32 %v3452, 2147483648
        %v3454 = vsel %vm3371, %v3453, %v3452
        %v3455 = vsub.s32 4, %v3431
        %v3456 = vsel %vm3371, %v3455, %v3431
        %v3457 = vsel %vm3370, %v538, %v3454
        %v3458 = vsel %vm3370, 0, %v3456
        %v3459 = vcosq.f32.pop %v3457
        %v3460 = vsinq.f32.pop %v3457
        %vm3461 = vweird.f32 %v538
        %v3462 = vadd.s32 %v3458, 3
        %v3463 = vand.u32 %v3462, 3
        %vm3464 = vcmp.lt.s32.totalorder %v3463, 2
        %vm3465 = vcmp.eq.s32.totalorder %v3463, 0
        %v3466 = vxor.u32 %v3460, 2147483648
        %v3467 = vsel %vm3465, %v3459, %v3466
        %vm3468 = vcmp.eq.s32.totalorder %v3463, 2
        %v3469 = vxor.u32 %v3459, 2147483648
        %v3470 = vsel %vm3468, %v3469, %v3460
        %v3471 = vsel %vm3464, %v3467, %v3470
        %v3472 = vsel %vm3461, nan, %v3471
        %v3473 = vand.u32 2147483647, %v543
        %vm3474 = vcmp.le.f32.partialorder %v3473, 0.7853982
        %vm3475 = vcmp.lt.s32.totalorder %v543, 0
        %v3476 = vand.u32 %v543, 2139095040
        %v3477 = vshrl.u32 %v3476, 23
        %v3478 = vsub.s32 %v3477, 127
        %v3479 = vand.u32 2147483647, %v543
        %v3480 = vand.u32 %v3479, 8388607
        %v3481 = vor.u32 %v3480, 8388608
        %v3482 = vsub.s32 0, %v3481
        %v3483 = vadd.s32 %v3478, 1
        %vm3484 = vcmp.gt.s32.totalorder %v3483, 0
        %v3485 = vsel %vm3484, %v3483, 0
        %v3486 = vshrl.u32 %v3485, 5
        %v3487 = vand.u32 %v3485, 31
        %v3488 = vsub.s32 32, %v3487
        %v3489 = vshrl.u32 683565275, %v3488
        %v3490 = vshll.u32 683565275, %v3487
        %v3491 = vshrl.u32 2475754826, %v3488
        %v3492 = vor.u32 %v3490, %v3491
        %v3493 = vshll.u32 2475754826, %v3487
        %v3494 = vshrl.u32 2131351028, %v3488
        %v3495 = vor.u32 %v3493, %v3494
        %v3496 = vshll.u32 2131351028, %v3487
        %v3497 = vshrl.u32 2102212464, %v3488
        %v3498 = vor.u32 %v3496, %v3497
        %v3499 = vshll.u32 2102212464, %v3487
        %v3500 = vshrl.u32 920167782, %v3488
        %v3501 = vor.u32 %v3499, %v3500
        %v3502 = vshll.u32 920167782, %v3487
        %v3503 = vshrl.u32 1326507024, %v3488
        %v3504 = vor.u32 %v3502, %v3503
        %vm3505 = vcmp.lt.s32.totalorder %v3486, 1
        %vm3506 = vcmp.lt.s32.totalorder %v3486, 2
        %vm3507 = vcmp.lt.s32.totalorder %v3486, 3
        %vm3508 = vcmp.lt.s32.totalorder %v3486, 4
        %v3509 = vsel %vm3505, %v3489, %v3492
        %v3510 = vsel %vm3508, %v3498, 2102212464
        %v3511 = vsel %vm3507, %v3495, %v3510
        %v3512 = vsel %vm3506, %v3509, %v3511
        %v3513 = vsel %vm3505, %v3492, %v3495
        %v3514 = vsel %vm3508, %v3501, 920167782
        %v3515 = vsel %vm3507, %v3498, %v3514
        %v3516 = vsel %vm3506, %v3513, %v3515
        %v3517 = vsel %vm3505, %v3495, %v3498
        %v3518 = vsel %vm3508, %v3504, 1326507024
        %v3519 = vsel %vm3507, %v3501, %v3518
        %v3520 = vsel %vm3506, %v3517, %v3519
        %v3521 = vshll.u32 %v3481, 8
        %v3522 = vmul.u32.u64.compose %v3521, %v3520
        %v3523 = vextract.low.u32 %v3522
        %v3524 = vextract.high.u32 %v3522
        %v3525 = vmul.u32.u64.compose %v3521, %v3516
        %v3526 = vextract.low.u32 %v3525
        %v3527 = vextract.high.u32 %v3525
        %v3528 = vmul.u32 %v3521, %v3512
        %v3529 = vadd.s32 %v3524, %v3526
        %vm3530 = vc.u32 %v3524, %v3526
        %v3531 = vadd.s32 %v3527, 1
        %v3532 = vsel %vm3530, %v3531, %v3527
        %v3533 = vadd.s32 %v3528, %v3532
        %v3534 = vadd.s32 %v3533, 536870912
        %v3535 = vshrl.u32 %v3534, 30
        %v3536 = vshll.u32 %v3535, 30
        %v3537 = vsub.s32 %v3533, %v3536
        %vm3538 = vcmp.lt.s32.totalorder %v3537, 0
        %v3539 = vsub.s32 0, %v3537
        %v3540 = vsel %vm3538, %v3539, %v3537
        %v3541 = vclz %v3540
        %v3542 = vsub.s32 %v3541, 2
        %vm3543 = vcmp.gt.s32.totalorder 0, %v3542
        %v3544 = vsel %vm3543, 0, %v3542
        %v3545 = vsub.s32 32, %v3544
        %v3546 = vshll.u32 %v3537, %v3544
        %v3547 = vshrl.u32 %v3529, %v3545
        %v3548 = vor.u32 %v3546, %v3547
        %v3549 = vsub.s32 4294967266, %v3544
        %v3550 = vadd.s32 %v3549, 127
        %v3551 = vshll.u32 %v3550, 23
        %v3552 = vor.u32 4788187, %v3551
        %v3553 = vand.u32 2147483647, %v3552
        %v3555 = vcvt.s32.f32 %v3548
        %v3556 = vmul.f32 %v3555, %v3553
        %v3557 = vxor.u32 %v3556, 2147483648
        %v3558 = vsel %vm3475, %v3557, %v3556
        %v3559 = vsub.s32 4, %v3535
        %v3560 = vsel %vm3475, %v3559, %v3535
        %v3561 = vsel %vm3474, %v543, %v3558
        %v3562 = vsel %vm3474, 0, %v3560
        %v3563 = vcosq.f32.pop %v3561
        %v3564 = vsinq.f32.pop %v3561
        %vm3565 = vweird.f32 %v543
        %v3566 = vadd.s32 %v3562, 3
        %v3567 = vand.u32 %v3566, 3
        %vm3568 = vcmp.lt.s32.totalorder %v3567, 2
        %vm3569 = vcmp.eq.s32.totalorder %v3567, 0
        %v3570 = vxor.u32 %v3564, 2147483648
        %v3571 = vsel %vm3569, %v3563, %v3570
        %vm3572 = vcmp.eq.s32.totalorder %v3567, 2
        %v3573 = vxor.u32 %v3563, 2147483648
        %v3574 = vsel %vm3572, %v3573, %v3564
        %v3575 = vsel %vm3568, %v3571, %v3574
        %v3576 = vsel %vm3565, nan, %v3575
        %v3577 = vand.u32 2147483647, %v548
        %vm3578 = vcmp.le.f32.partialorder %v3577, 0.7853982
        %vm3579 = vcmp.lt.s32.totalorder %v548, 0
        %v3580 = vand.u32 %v548, 2139095040
        %v3581 = vshrl.u32 %v3580, 23
        %v3582 = vsub.s32 %v3581, 127
        %v3583 = vand.u32 2147483647, %v548
        %v3584 = vand.u32 %v3583, 8388607
        %v3585 = vor.u32 %v3584, 8388608
        %v3586 = vsub.s32 0, %v3585
        %v3587 = vadd.s32 %v3582, 1
        %vm3588 = vcmp.gt.s32.totalorder %v3587, 0
        %v3589 = vsel %vm3588, %v3587, 0
        %v3590 = vshrl.u32 %v3589, 5
        %v3591 = vand.u32 %v3589, 31
        %v3592 = vsub.s32 32, %v3591
        %v3593 = vshrl.u32 683565275, %v3592
        %v3594 = vshll.u32 683565275, %v3591
        %v3595 = vshrl.u32 2475754826, %v3592
        %v3596 = vor.u32 %v3594, %v3595
        %v3597 = vshll.u32 2475754826, %v3591
        %v3598 = vshrl.u32 2131351028, %v3592
        %v3599 = vor.u32 %v3597, %v3598
        %v3600 = vshll.u32 2131351028, %v3591
        %v3601 = vshrl.u32 2102212464, %v3592
        %v3602 = vor.u32 %v3600, %v3601
        %v3603 = vshll.u32 2102212464, %v3591
        %v3604 = vshrl.u32 920167782, %v3592
        %v3605 = vor.u32 %v3603, %v3604
        %v3606 = vshll.u32 920167782, %v3591
        %v3607 = vshrl.u32 1326507024, %v3592
        %v3608 = vor.u32 %v3606, %v3607
        %vm3609 = vcmp.lt.s32.totalorder %v3590, 1
        %vm3610 = vcmp.lt.s32.totalorder %v3590, 2
        %vm3611 = vcmp.lt.s32.totalorder %v3590, 3
        %vm3612 = vcmp.lt.s32.totalorder %v3590, 4
        %v3613 = vsel %vm3609, %v3593, %v3596
        %v3614 = vsel %vm3612, %v3602, 2102212464
        %v3615 = vsel %vm3611, %v3599, %v3614
        %v3616 = vsel %vm3610, %v3613, %v3615
        %v3617 = vsel %vm3609, %v3596, %v3599
        %v3618 = vsel %vm3612, %v3605, 920167782
        %v3619 = vsel %vm3611, %v3602, %v3618
        %v3620 = vsel %vm3610, %v3617, %v3619
        %v3621 = vsel %vm3609, %v3599, %v3602
        %v3622 = vsel %vm3612, %v3608, 1326507024
        %v3623 = vsel %vm3611, %v3605, %v3622
        %v3624 = vsel %vm3610, %v3621, %v3623
        %v3625 = vshll.u32 %v3585, 8
        %v3626 = vmul.u32.u64.compose %v3625, %v3624
        %v3627 = vextract.low.u32 %v3626
        %v3628 = vextract.high.u32 %v3626
        %v3629 = vmul.u32.u64.compose %v3625, %v3620
        %v3630 = vextract.low.u32 %v3629
        %v3631 = vextract.high.u32 %v3629
        %v3632 = vmul.u32 %v3625, %v3616
        %v3633 = vadd.s32 %v3628, %v3630
        %vm3634 = vc.u32 %v3628, %v3630
        %v3635 = vadd.s32 %v3631, 1
        %v3636 = vsel %vm3634, %v3635, %v3631
        %v3637 = vadd.s32 %v3632, %v3636
        %v3638 = vadd.s32 %v3637, 536870912
        %v3639 = vshrl.u32 %v3638, 30
        %v3640 = vshll.u32 %v3639, 30
        %v3641 = vsub.s32 %v3637, %v3640
        %vm3642 = vcmp.lt.s32.totalorder %v3641, 0
        %v3643 = vsub.s32 0, %v3641
        %v3644 = vsel %vm3642, %v3643, %v3641
        %v3645 = vclz %v3644
        %v3646 = vsub.s32 %v3645, 2
        %vm3647 = vcmp.gt.s32.totalorder 0, %v3646
        %v3648 = vsel %vm3647, 0, %v3646
        %v3649 = vsub.s32 32, %v3648
        %v3650 = vshll.u32 %v3641, %v3648
        %v3651 = vshrl.u32 %v3633, %v3649
        %v3652 = vor.u32 %v3650, %v3651
        %v3653 = vsub.s32 4294967266, %v3648
        %v3654 = vadd.s32 %v3653, 127
        %v3655 = vshll.u32 %v3654, 23
        %v3656 = vor.u32 4788187, %v3655
        %v3657 = vand.u32 2147483647, %v3656
        %v3659 = vcvt.s32.f32 %v3652
        %v3660 = vmul.f32 %v3659, %v3657
        %v3661 = vxor.u32 %v3660, 2147483648
        %v3662 = vsel %vm3579, %v3661, %v3660
        %v3663 = vsub.s32 4, %v3639
        %v3664 = vsel %vm3579, %v3663, %v3639
        %v3665 = vsel %vm3578, %v548, %v3662
        %v3666 = vsel %vm3578, 0, %v3664
        %v3667 = vcosq.f32.pop %v3665
        %v3668 = vsinq.f32.pop %v3665
        %vm3669 = vweird.f32 %v548
        %v3670 = vadd.s32 %v3666, 3
        %v3671 = vand.u32 %v3670, 3
        %vm3672 = vcmp.lt.s32.totalorder %v3671, 2
        %vm3673 = vcmp.eq.s32.totalorder %v3671, 0
        %v3674 = vxor.u32 %v3668, 2147483648
        %v3675 = vsel %vm3673, %v3667, %v3674
        %vm3676 = vcmp.eq.s32.totalorder %v3671, 2
        %v3677 = vxor.u32 %v3667, 2147483648
        %v3678 = vsel %vm3676, %v3677, %v3668
        %v3679 = vsel %vm3672, %v3675, %v3678
        %v3680 = vsel %vm3669, nan, %v3679
        %v3681 = vand.u32 2147483647, %v553
        %vm3682 = vcmp.le.f32.partialorder %v3681, 0.7853982
        %vm3683 = vcmp.lt.s32.totalorder %v553, 0
        %v3684 = vand.u32 %v553, 2139095040
        %v3685 = vshrl.u32 %v3684, 23
        %v3686 = vsub.s32 %v3685, 127
        %v3687 = vand.u32 2147483647, %v553
        %v3688 = vand.u32 %v3687, 8388607
        %v3689 = vor.u32 %v3688, 8388608
        %v3690 = vsub.s32 0, %v3689
        %v3691 = vadd.s32 %v3686, 1
        %vm3692 = vcmp.gt.s32.totalorder %v3691, 0
        %v3693 = vsel %vm3692, %v3691, 0
        %v3694 = vshrl.u32 %v3693, 5
        %v3695 = vand.u32 %v3693, 31
        %v3696 = vsub.s32 32, %v3695
        %v3697 = vshrl.u32 683565275, %v3696
        %v3698 = vshll.u32 683565275, %v3695
        %v3699 = vshrl.u32 2475754826, %v3696
        %v3700 = vor.u32 %v3698, %v3699
        %v3701 = vshll.u32 2475754826, %v3695
        %v3702 = vshrl.u32 2131351028, %v3696
        %v3703 = vor.u32 %v3701, %v3702
        %v3704 = vshll.u32 2131351028, %v3695
        %v3705 = vshrl.u32 2102212464, %v3696
        %v3706 = vor.u32 %v3704, %v3705
        %v3707 = vshll.u32 2102212464, %v3695
        %v3708 = vshrl.u32 920167782, %v3696
        %v3709 = vor.u32 %v3707, %v3708
        %v3710 = vshll.u32 920167782, %v3695
        %v3711 = vshrl.u32 1326507024, %v3696
        %v3712 = vor.u32 %v3710, %v3711
        %vm3713 = vcmp.lt.s32.totalorder %v3694, 1
        %vm3714 = vcmp.lt.s32.totalorder %v3694, 2
        %vm3715 = vcmp.lt.s32.totalorder %v3694, 3
        %vm3716 = vcmp.lt.s32.totalorder %v3694, 4
        %v3717 = vsel %vm3713, %v3697, %v3700
        %v3718 = vsel %vm3716, %v3706, 2102212464
        %v3719 = vsel %vm3715, %v3703, %v3718
        %v3720 = vsel %vm3714, %v3717, %v3719
        %v3721 = vsel %vm3713, %v3700, %v3703
        %v3722 = vsel %vm3716, %v3709, 920167782
        %v3723 = vsel %vm3715, %v3706, %v3722
        %v3724 = vsel %vm3714, %v3721, %v3723
        %v3725 = vsel %vm3713, %v3703, %v3706
        %v3726 = vsel %vm3716, %v3712, 1326507024
        %v3727 = vsel %vm3715, %v3709, %v3726
        %v3728 = vsel %vm3714, %v3725, %v3727
        %v3729 = vshll.u32 %v3689, 8
        %v3730 = vmul.u32.u64.compose %v3729, %v3728
        %v3731 = vextract.low.u32 %v3730
        %v3732 = vextract.high.u32 %v3730
        %v3733 = vmul.u32.u64.compose %v3729, %v3724
        %v3734 = vextract.low.u32 %v3733
        %v3735 = vextract.high.u32 %v3733
        %v3736 = vmul.u32 %v3729, %v3720
        %v3737 = vadd.s32 %v3732, %v3734
        %vm3738 = vc.u32 %v3732, %v3734
        %v3739 = vadd.s32 %v3735, 1
        %v3740 = vsel %vm3738, %v3739, %v3735
        %v3741 = vadd.s32 %v3736, %v3740
        %v3742 = vadd.s32 %v3741, 536870912
        %v3743 = vshrl.u32 %v3742, 30
        %v3744 = vshll.u32 %v3743, 30
        %v3745 = vsub.s32 %v3741, %v3744
        %vm3746 = vcmp.lt.s32.totalorder %v3745, 0
        %v3747 = vsub.s32 0, %v3745
        %v3748 = vsel %vm3746, %v3747, %v3745
        %v3749 = vclz %v3748
        %v3750 = vsub.s32 %v3749, 2
        %vm3751 = vcmp.gt.s32.totalorder 0, %v3750
        %v3752 = vsel %vm3751, 0, %v3750
        %v3753 = vsub.s32 32, %v3752
        %v3754 = vshll.u32 %v3745, %v3752
        %v3755 = vshrl.u32 %v3737, %v3753
        %v3756 = vor.u32 %v3754, %v3755
        %v3757 = vsub.s32 4294967266, %v3752
        %v3758 = vadd.s32 %v3757, 127
        %v3759 = vshll.u32 %v3758, 23
        %v3760 = vor.u32 4788187, %v3759
        %v3761 = vand.u32 2147483647, %v3760
        %v3763 = vcvt.s32.f32 %v3756
        %v3764 = vmul.f32 %v3763, %v3761
        %v3765 = vxor.u32 %v3764, 2147483648
        %v3766 = vsel %vm3683, %v3765, %v3764
        %v3767 = vsub.s32 4, %v3743
        %v3768 = vsel %vm3683, %v3767, %v3743
        %v3769 = vsel %vm3682, %v553, %v3766
        %v3770 = vsel %vm3682, 0, %v3768
        %v3771 = vcosq.f32.pop %v3769
        %v3772 = vsinq.f32.pop %v3769
        %vm3773 = vweird.f32 %v553
        %v3774 = vadd.s32 %v3770, 3
        %v3775 = vand.u32 %v3774, 3
        %vm3776 = vcmp.lt.s32.totalorder %v3775, 2
        %vm3777 = vcmp.eq.s32.totalorder %v3775, 0
        %v3778 = vxor.u32 %v3772, 2147483648
        %v3779 = vsel %vm3777, %v3771, %v3778
        %vm3780 = vcmp.eq.s32.totalorder %v3775, 2
        %v3781 = vxor.u32 %v3771, 2147483648
        %v3782 = vsel %vm3780, %v3781, %v3772
        %v3783 = vsel %vm3776, %v3779, %v3782
        %v3784 = vsel %vm3773, nan, %v3783
        %v3785 = vand.u32 2147483647, %v558
        %vm3786 = vcmp.le.f32.partialorder %v3785, 0.7853982
        %vm3787 = vcmp.lt.s32.totalorder %v558, 0
        %v3788 = vand.u32 %v558, 2139095040
        %v3789 = vshrl.u32 %v3788, 23
        %v3790 = vsub.s32 %v3789, 127
        %v3791 = vand.u32 2147483647, %v558
        %v3792 = vand.u32 %v3791, 8388607
        %v3793 = vor.u32 %v3792, 8388608
        %v3794 = vsub.s32 0, %v3793
        %v3795 = vadd.s32 %v3790, 1
        %vm3796 = vcmp.gt.s32.totalorder %v3795, 0
        %v3797 = vsel %vm3796, %v3795, 0
        %v3798 = vshrl.u32 %v3797, 5
        %v3799 = vand.u32 %v3797, 31
        %v3800 = vsub.s32 32, %v3799
        %v3801 = vshrl.u32 683565275, %v3800
        %v3802 = vshll.u32 683565275, %v3799
        %v3803 = vshrl.u32 2475754826, %v3800
        %v3804 = vor.u32 %v3802, %v3803
        %v3805 = vshll.u32 2475754826, %v3799
        %v3806 = vshrl.u32 2131351028, %v3800
        %v3807 = vor.u32 %v3805, %v3806
        %v3808 = vshll.u32 2131351028, %v3799
        %v3809 = vshrl.u32 2102212464, %v3800
        %v3810 = vor.u32 %v3808, %v3809
        %v3811 = vshll.u32 2102212464, %v3799
        %v3812 = vshrl.u32 920167782, %v3800
        %v3813 = vor.u32 %v3811, %v3812
        %v3814 = vshll.u32 920167782, %v3799
        %v3815 = vshrl.u32 1326507024, %v3800
        %v3816 = vor.u32 %v3814, %v3815
        %vm3817 = vcmp.lt.s32.totalorder %v3798, 1
        %vm3818 = vcmp.lt.s32.totalorder %v3798, 2
        %vm3819 = vcmp.lt.s32.totalorder %v3798, 3
        %vm3820 = vcmp.lt.s32.totalorder %v3798, 4
        %v3821 = vsel %vm3817, %v3801, %v3804
        %v3822 = vsel %vm3820, %v3810, 2102212464
        %v3823 = vsel %vm3819, %v3807, %v3822
        %v3824 = vsel %vm3818, %v3821, %v3823
        %v3825 = vsel %vm3817, %v3804, %v3807
        %v3826 = vsel %vm3820, %v3813, 920167782
        %v3827 = vsel %vm3819, %v3810, %v3826
        %v3828 = vsel %vm3818, %v3825, %v3827
        %v3829 = vsel %vm3817, %v3807, %v3810
        %v3830 = vsel %vm3820, %v3816, 1326507024
        %v3831 = vsel %vm3819, %v3813, %v3830
        %v3832 = vsel %vm3818, %v3829, %v3831
        %v3833 = vshll.u32 %v3793, 8
        %v3834 = vmul.u32.u64.compose %v3833, %v3832
        %v3835 = vextract.low.u32 %v3834
        %v3836 = vextract.high.u32 %v3834
        %v3837 = vmul.u32.u64.compose %v3833, %v3828
        %v3838 = vextract.low.u32 %v3837
        %v3839 = vextract.high.u32 %v3837
        %v3840 = vmul.u32 %v3833, %v3824
        %v3841 = vadd.s32 %v3836, %v3838
        %vm3842 = vc.u32 %v3836, %v3838
        %v3843 = vadd.s32 %v3839, 1
        %v3844 = vsel %vm3842, %v3843, %v3839
        %v3845 = vadd.s32 %v3840, %v3844
        %v3846 = vadd.s32 %v3845, 536870912
        %v3847 = vshrl.u32 %v3846, 30
        %v3848 = vshll.u32 %v3847, 30
        %v3849 = vsub.s32 %v3845, %v3848
        %vm3850 = vcmp.lt.s32.totalorder %v3849, 0
        %v3851 = vsub.s32 0, %v3849
        %v3852 = vsel %vm3850, %v3851, %v3849
        %v3853 = vclz %v3852
        %v3854 = vsub.s32 %v3853, 2
        %vm3855 = vcmp.gt.s32.totalorder 0, %v3854
        %v3856 = vsel %vm3855, 0, %v3854
        %v3857 = vsub.s32 32, %v3856
        %v3858 = vshll.u32 %v3849, %v3856
        %v3859 = vshrl.u32 %v3841, %v3857
        %v3860 = vor.u32 %v3858, %v3859
        %v3861 = vsub.s32 4294967266, %v3856
        %v3862 = vadd.s32 %v3861, 127
        %v3863 = vshll.u32 %v3862, 23
        %v3864 = vor.u32 4788187, %v3863
        %v3865 = vand.u32 2147483647, %v3864
        %v3867 = vcvt.s32.f32 %v3860
        %v3868 = vmul.f32 %v3867, %v3865
        %v3869 = vxor.u32 %v3868, 2147483648
        %v3870 = vsel %vm3787, %v3869, %v3868
        %v3871 = vsub.s32 4, %v3847
        %v3872 = vsel %vm3787, %v3871, %v3847
        %v3873 = vsel %vm3786, %v558, %v3870
        %v3874 = vsel %vm3786, 0, %v3872
        %v3875 = vcosq.f32.pop %v3873
        %v3876 = vsinq.f32.pop %v3873
        %vm3877 = vweird.f32 %v558
        %v3878 = vadd.s32 %v3874, 3
        %v3879 = vand.u32 %v3878, 3
        %vm3880 = vcmp.lt.s32.totalorder %v3879, 2
        %vm3881 = vcmp.eq.s32.totalorder %v3879, 0
        %v3882 = vxor.u32 %v3876, 2147483648
        %v3883 = vsel %vm3881, %v3875, %v3882
        %vm3884 = vcmp.eq.s32.totalorder %v3879, 2
        %v3885 = vxor.u32 %v3875, 2147483648
        %v3886 = vsel %vm3884, %v3885, %v3876
        %v3887 = vsel %vm3880, %v3883, %v3886
        %v3888 = vsel %vm3877, nan, %v3887
        %3889 = vst [vmem:[%s176] sm:$0xff] %v664
        %3890 = vst [vmem:[%s176 + $0x8] sm:$0xff] %v768
        %3891 = vst [vmem:[%s176 + $0x10] sm:$0xff] %v872
        %3892 = vst [vmem:[%s176 + $0x18] sm:$0xff] %v976
        %3893 = vst [vmem:[%s176 + $0x20] sm:$0xff] %v1080
        %3894 = vst [vmem:[%s176 + $0x28] sm:$0xff] %v1184
        %3895 = vst [vmem:[%s176 + $0x30] sm:$0xff] %v1288
        %3896 = vst [vmem:[%s176 + $0x38] sm:$0xff] %v1392
        %3897 = vst [vmem:[%s176 + $0x40] sm:$0xff] %v1496
        %3898 = vst [vmem:[%s176 + $0x48] sm:$0xff] %v1600
        %3899 = vst [vmem:[%s176 + $0x50] sm:$0xff] %v1704
        %3900 = vst [vmem:[%s176 + $0x58] sm:$0xff] %v1808
        %3901 = vst [vmem:[%s176 + $0x60] sm:$0xff] %v1912
        %3902 = vst [vmem:[%s176 + $0x68] sm:$0xff] %v2016
        %3903 = vst [vmem:[%s176 + $0x70] sm:$0xff] %v2120
        %3904 = vst [vmem:[%s176 + $0x78] sm:$0xff] %v2224
        %3905 = vst [vmem:[%s176 + $0x80] sm:$0xff] %v2328
        %3906 = vst [vmem:[%s176 + $0x88] sm:$0xff] %v2432
        %3907 = vst [vmem:[%s176 + $0x90] sm:$0xff] %v2536
        %3908 = vst [vmem:[%s176 + $0x98] sm:$0xff] %v2640
        %3909 = vst [vmem:[%s176 + $0xa0] sm:$0xff] %v2744
        %3910 = vst [vmem:[%s176 + $0xa8] sm:$0xff] %v2848
        %3911 = vst [vmem:[%s176 + $0xb0] sm:$0xff] %v2952
        %3912 = vst [vmem:[%s176 + $0xb8] sm:$0xff] %v3056
        %3913 = vst [vmem:[%s176 + $0xc0] sm:$0xff] %v3160
        %3914 = vst [vmem:[%s176 + $0xc8] sm:$0xff] %v3264
        %3915 = vst [vmem:[%s176 + $0xd0] sm:$0xff] %v3368
        %3916 = vst [vmem:[%s176 + $0xd8] sm:$0xff] %v3472
        %3917 = vst [vmem:[%s176 + $0xe0] sm:$0xff] %v3576
        %3918 = vst [vmem:[%s176 + $0xe8] sm:$0xff] %v3680
        %3919 = vst [vmem:[%s176 + $0xf0] sm:$0xff] %v3784
        %3920 = vst [vmem:[%s176 + $0xf8] sm:$0xff] %v3888
        %s3921 = sand.u32 %s93, 1
        %s3922 = scalar_lea.sflag [#allocation3], %s3921
        %s3923 = sand.u32 %s93, 1
        %s3924 = smul.addr %s3923, 256
        %s3925 = scalar_lea.vmem [#allocation2], %s3924
        // Predicated region
        $region33: #{tpu_custom_call.1} parent=31 // pred_check
          %p3926 = pneg %p103
        $region34: #{tpu_custom_call.1} parent=31 // pred_check_branch
          %3928 = sbr.rel (%p3926) target = $region36
        $region35: #{tpu_custom_call.1} parent=31 // pred_region
          %s3929 = smul.u32 32, %s17
          %s3930 = ssub.s32 125, %s3929
          %p3931 = scmp.lt.s32.totalorder %s3930, 32
          %s3932 = scalar_select %p3931, %s3930, 32
          %s3933 = smul.u32 128, %s3932
          %s3935 = ssub.s32 4096, %s3933
          %3936 = vsyncadd %s3922, %s3935
          %p3937 = scmp.ne.s32.totalorder 0, %s3933
          %s3938 = smul.addr %s3929, 128
          %s3939 = scalar_lea.hbm %s3, %s3938
          %s3940 = smul.u32 8, %s3932
          %s3941 = sshll.u32 %s3925, 4
          %s3942 = int_to_ptr.vmem [resolvable:$true] %s3941
          %s3943 = sshll.u32 %s3940, 4
          %3947 = dma.vmem_to_hbm [thread:$0]  (%p3937), %s3942, %s3943, %s3939, %s3922, 128, 128, 8
        $region36: #{tpu_custom_call.1} parent=31 // pred_fallthru
          _
      $region32: #{tpu_custom_call.1} parent=5 // pred_fallthru
        _
      %p3948 = scmp.le.s32.totalorder 2, %s12
      // Predicated region
      $region37: #{tpu_custom_call.1} parent=5 // pred_check
        %p3949 = pneg %p3948
      $region38: #{tpu_custom_call.1} parent=5 // pred_check_branch
        %3951 = sbr.rel (%p3949) target = $region40
      $region39: #{tpu_custom_call.1} parent=5 // pred_region
        %s3952 = ssub.s32 %s12, 2
        // Predicated region
        $region41: #{tpu_custom_call.1} parent=39 // pred_check
          %p3953 = pneg %p109
        $region42: #{tpu_custom_call.1} parent=39 // pred_check_branch
          %3955 = sbr.rel (%p3953) target = $region44
        $region43: #{tpu_custom_call.1} parent=39 // pred_region
          %s3956 = sand.u32 %s94, 1
          %s3957 = scalar_lea.sflag [#allocation3], %s3956
          %s3958 = sand.u32 %s94, 1
          %s3959 = smul.addr %s3958, 256
          %s3960 = scalar_lea.vmem [#allocation2], %s3959
          %3961 = dma.done %s3957, 4096
        $region44: #{tpu_custom_call.1} parent=39 // pred_fallthru
          _
      $region40: #{tpu_custom_call.1} parent=5 // pred_fallthru
        _
    $region6: #{tpu_custom_call.1} parent=1 // loop_footer
      %s16 = sadd.s32 1, %s12
    $region7: #{tpu_custom_call.1} parent=1 // loop_footer_branch
      %11 = sbr.rel target = $region3
    $region8: #{tpu_custom_call.1} parent=1 // loop_exit
      _
    %3962 = vsyncpa [#allocation3], 1
    %s3963 = scalar_lea.sflag [#allocation3], 1
    %3964 = vsyncpa %s3963, 1

</llo_original>
